<compile_context>
chip_gen: v5e
topology: v5e:2x2
jax: 0.10.0
libtpu: 0.0.40
codegen_flags: <defaults>
</compile_context>

<pallas_src>
import numpy as np
import jax
import jax.numpy as jnp
from jax import lax
from jax.experimental import pallas as pl
from jax.experimental.pallas import tpu as pltpu

CIN, COUT, K = 32, 64, 3


def sparse_conv3d_kernel(x_ref, mask_ref, wt_ref, b_ref, o_ref):
    # x_ref:    (D, H, W*Cin)          bf16 full volume of one batch element
    #                                  (same block across the spatial axis ->
    #                                  DMA'd once, stays resident in VMEM)
    # mask_ref: (TDo, Ho, Wo)          bf16, 1.0 at active output sites (tile)
    # wt_ref:   (K*K, W*Cin, Wo*Cout)  bf16 block-Toeplitz weights per (kd,kh)
    # b_ref:    (1, Cout)              f32 bias
    # o_ref:    (TDo, Ho, Wo*Cout)     lane-dense output tile (384 = 3x128)
    s = pl.program_id(1)                       # output-depth tile index
    _, _, WC = x_ref.shape
    TDo, Ho, WoCout = o_ref.shape
    Cout = b_ref.shape[1]
    Wo = WoCout // Cout
    M = TDo * Ho
    d0 = s * TDo                               # first output-depth row of tile

    # 9 accumulated MXU matmuls (bf16 in, f32 accumulate).  Each lhs slice is
    # a contiguous (TDo, Ho, W*Cin) slab (sublane-only movement, lanes stay
    # 128-aligned); the Toeplitz rhs folds the kw taps and the wo output
    # columns, so the product is already in the lane-dense output layout.
    acc = jnp.zeros((M, WoCout), jnp.float32)
    for t in range(K * K):
        kd, kh = t // K, t % K
        lhs = x_ref[pl.ds(d0 + kd, TDo), pl.ds(kh, Ho), :].reshape(M, WC)
        acc = acc + jnp.dot(lhs, wt_ref[t], preferred_element_type=jnp.float32)

    # spconv adds bias only at active output sites; inactive sites stay
    # exactly zero because the densified input is zero there.
    m = mask_ref[...].astype(jnp.float32).reshape(M, Wo)
    bias_term = (m[:, :, None] * b_ref[...][None]).reshape(M, WoCout)
    o_ref[...] = (acc + bias_term).reshape(TDo, Ho, WoCout).astype(o_ref.dtype)


def _toeplitz_weights(w, W, Wo, dtype):
    """(K,K,K,Cin,Cout) -> (K*K, W*Cin, Wo*Cout) block-Toeplitz per (kd,kh).

    wt[kd*K+kh, w_in*Cin + ci, wo*Cout + co] = w[kd, kh, w_in - wo, ci, co]
    for 0 <= w_in - wo < K, else exactly 0 (the zero band contributes nothing
    numerically, only ~W/K extra — negligible — MXU FLOPs).
    """
    Kk, _, _, Cin, Cout = w.shape
    wt = jnp.zeros((Kk, Kk, W, Cin, Wo, Cout), w.dtype)
    for kw in range(Kk):
        for wo in range(Wo):
            wt = wt.at[:, :, wo + kw, :, wo, :].set(w[:, :, kw])
    return wt.reshape(Kk * Kk, W * Cin, Wo * Cout).astype(dtype)


def sparse_conv3d(x_dense, occ, w, b, *, d_tile=3,
                  compute_dtype=jnp.bfloat16, out_dtype=jnp.float32):
    """Dense-view forward of spconv.SparseConv3d(Cin, Cout, 3), valid padding.

    x_dense: (B, D, H, W, Cin) zero-filled dense features
    occ:     (B, D, H, W)      1.0 at active input voxels
    w:       (K, K, K, Cin, Cout);  b: (1, Cout)
    returns: (B, Do, Ho, Wo, Cout) dense view of the output SparseConvTensor
    (out_dtype can be bf16 to halve HBM writeback if downstream allows; f32
    default matches spconv semantics.)
    """
    B, D, H, W, Cin = x_dense.shape
    Do, Ho, Wo = D - K + 1, H - K + 1, W - K + 1
    Cout = w.shape[-1]
    if Do % d_tile != 0:
        raise ValueError(f"d_tile={d_tile} must divide Do={Do}")
    nd = Do // d_tile

    # Active output sites = 3x3x3 receptive field touches >=1 active voxel.
    active = lax.reduce_window(occ, -jnp.inf, lax.max,
                               (1, K, K, K), (1, 1, 1, 1), "VALID") > 0.0
    mask = active.astype(jnp.bfloat16)                  # (B, Do, Ho, Wo) narrow

    x_flat = x_dense.reshape(B, D, H, W * Cin).astype(compute_dtype)
    wt = _toeplitz_weights(w, W, Wo, compute_dtype)     # (K*K, W*Cin, Wo*Cout)
    bias = b.reshape(1, Cout).astype(jnp.float32)

    # TODO(synk): at real spconv volumes the whole (D, H, W*Cin) slab no longer
    # fits VMEM: tile D/H with a K-1=2 halo (manual make_async_copy from a
    # memory_space=pl.ANY input), tile W so the Toeplitz band overhead stays
    # small, size tiles for v7x's 64 MiB VMEM (~48 MiB incl. double buffers;
    # v5e/v6e can take ~2x larger tiles) and raise vmem_limit_bytes to match.
    out = pl.pallas_call(
        sparse_conv3d_kernel,
        out_shape=jax.ShapeDtypeStruct((B, Do, Ho, Wo * Cout), out_dtype),
        grid=(B, nd),
        in_specs=[
            pl.BlockSpec((None, D, H, W * Cin), lambda bb, s: (bb, 0, 0, 0)),
            pl.BlockSpec((None, d_tile, Ho, Wo), lambda bb, s: (bb, s, 0, 0)),
            pl.BlockSpec((K * K, W * Cin, Wo * Cout), lambda bb, s: (0, 0, 0)),
            pl.BlockSpec((1, Cout), lambda bb, s: (0, 0)),
        ],
        out_specs=pl.BlockSpec((None, d_tile, Ho, Wo * Cout),
                               lambda bb, s: (bb, s, 0, 0)),
        compiler_params=pltpu.CompilerParams(
            dimension_semantics=("parallel", "parallel"),
            vmem_limit_bytes=32 * 1024 * 1024,
        ),
    )(x_flat, mask, wt, bias)

    return out.reshape(B, Do, Ho, Wo, Cout)


if __name__ == "__main__":
    key = jax.random.PRNGKey(0)
    B = 2
    shape = (8, 8, 8)  # spatial shape of the SparseConvTensor (D, H, W)
    D, H, W = shape
    n_active = 64

    k1, k2, k3, k4 = jax.random.split(key, 4)

    # unique active voxel coordinates, spconv "coors" format: [batch, z, y, x]
    flat = jax.random.permutation(k1, B * D * H * W)[:n_active]
    b_idx, z, y, x = jnp.unravel_index(flat, (B, D, H, W))
    coors = jnp.stack([b_idx, z, y, x], axis=1).astype(jnp.int32)
    features = jax.random.normal(k2, (n_active, CIN), jnp.float32)

    # deterministic parameters of spconv.SparseConv3d(32, 64, 3)
    w = jax.random.normal(k3, (K, K, K, CIN, COUT), jnp.float32) * 0.05
    bias = jax.random.normal(k4, (1, COUT), jnp.float32) * 0.1

    # forward: SparseConvTensor(features, coors, shape, batch_size) -> densify
    x_dense = jnp.zeros((B, D, H, W, CIN), jnp.float32).at[
        coors[:, 0], coors[:, 1], coors[:, 2], coors[:, 3]
    ].set(features)
    occ = jnp.zeros((B, D, H, W), jnp.float32).at[
        coors[:, 0], coors[:, 1], coors[:, 2], coors[:, 3]
    ].set(1.0)

    out = sparse_conv3d(x_dense, occ, w, bias)
    out = jax.block_until_ready(out)

    # plain-JAX reference: same bf16 input quantization, f32 accumulation
    ref = lax.conv_general_dilated(
        x_dense.astype(jnp.bfloat16), w.astype(jnp.bfloat16),
        window_strides=(1, 1, 1), padding="VALID",
        dimension_numbers=("NDHWC", "DHWIO", "NDHWC"),
        preferred_element_type=jnp.float32,
    )
    act = lax.reduce_window(
        occ, -jnp.inf, lax.max, (1, K, K, K), (1, 1, 1, 1), "VALID"
    ) > 0.0
    ref = ref + bias.reshape(1, 1, 1, 1, COUT) * act[..., None].astype(jnp.float32)
    np.testing.assert_allclose(np.asarray(out), np.asarray(ref),
                               rtol=2e-3, atol=2e-3)

    print("KERNEL_OK")
</pallas_src>

<mosaic_0001>
module attributes {stable_mosaic.version = 11 : i64} {
  func.func @sparse_conv3d_kernel(%arg0: i32, %arg1: i32, %arg2: memref<1x8x8x256xbf16, #tpu.memory_space<vmem>>, %arg3: memref<1x3x6x6xbf16, #tpu.memory_space<vmem>>, %arg4: memref<9x256x384xbf16, #tpu.memory_space<vmem>>, %arg5: memref<1x64xf32, #tpu.memory_space<vmem>>, %arg6: memref<1x3x6x384xf32, #tpu.memory_space<vmem>>) attributes {dimension_semantics = [#tpu.dimension_semantics<parallel>, #tpu.dimension_semantics<parallel>], iteration_bounds = array<i64: 2, 2>, scalar_prefetch = 0 : i64, scratch_operands = 0 : i64, tpu.core_type = #tpu.core_type<tc>, window_params = [{transform_indices = @transform_0, window_bounds = array<i64: 1, 8, 8, 256>}, {transform_indices = @transform_1, window_bounds = array<i64: 1, 3, 6, 6>}, {pipeline_mode = #tpu.pipeline_mode<synchronous>, transform_indices = @transform_2, window_bounds = array<i64: 9, 256, 384>}, {pipeline_mode = #tpu.pipeline_mode<synchronous>, transform_indices = @transform_3, window_bounds = array<i64: 1, 64>}, {transform_indices = @transform_4, window_bounds = array<i64: 1, 3, 6, 384>}]} {
    %c3_i32 = arith.constant 3 : i32
    %0 = arith.muli %arg1, %c3_i32 : i32
    %cst = arith.constant 0.000000e+00 : f32
    %1 = vector.broadcast %cst : f32 to vector<18x384xf32>
    %c0_i32 = arith.constant 0 : i32
    %2 = arith.addi %0, %c0_i32 : i32
    %c0 = arith.constant 0 : index
    %3 = arith.index_cast %2 : i32 to index
    %c0_0 = arith.constant 0 : index
    %c0_1 = arith.constant 0 : index
    %4 = vector.load %arg2[%c0, %3, %c0_0, %c0_1] : memref<1x8x8x256xbf16, #tpu.memory_space<vmem>>, vector<1x3x6x256xbf16>
    %5 = vector.shape_cast %4 : vector<1x3x6x256xbf16> to vector<3x6x256xbf16>
    %6 = vector.shape_cast %5 : vector<3x6x256xbf16> to vector<18x256xbf16>
    %c0_2 = arith.constant 0 : index
    %c0_3 = arith.constant 0 : index
    %c0_4 = arith.constant 0 : index
    %7 = vector.load %arg4[%c0_2, %c0_3, %c0_4] : memref<9x256x384xbf16, #tpu.memory_space<vmem>>, vector<1x256x384xbf16>
    %8 = vector.shape_cast %7 : vector<1x256x384xbf16> to vector<256x384xbf16>
    %cst_5 = arith.constant dense<0.000000e+00> : vector<18x384xf32>
    %9 = tpu.matmul %6, %8, %cst_5 {dimension_numbers = #tpu.dot_dimension_numbers<[1], [0], [0], [1], [0, 0, 1, 1], [], []>} : vector<18x256xbf16>, vector<256x384xbf16>, vector<18x384xf32> -> vector<18x384xf32>
    %10 = arith.addf %1, %9 : vector<18x384xf32>
    %c0_i32_6 = arith.constant 0 : i32
    %11 = arith.addi %0, %c0_i32_6 : i32
    %c0_7 = arith.constant 0 : index
    %12 = arith.index_cast %11 : i32 to index
    %c1 = arith.constant 1 : index
    %c0_8 = arith.constant 0 : index
    %13 = vector.load %arg2[%c0_7, %12, %c1, %c0_8] : memref<1x8x8x256xbf16, #tpu.memory_space<vmem>>, vector<1x3x6x256xbf16>
    %14 = vector.shape_cast %13 : vector<1x3x6x256xbf16> to vector<3x6x256xbf16>
    %15 = vector.shape_cast %14 : vector<3x6x256xbf16> to vector<18x256xbf16>
    %c1_9 = arith.constant 1 : index
    %c0_10 = arith.constant 0 : index
    %c0_11 = arith.constant 0 : index
    %16 = vector.load %arg4[%c1_9, %c0_10, %c0_11] : memref<9x256x384xbf16, #tpu.memory_space<vmem>>, vector<1x256x384xbf16>
    %17 = vector.shape_cast %16 : vector<1x256x384xbf16> to vector<256x384xbf16>
    %cst_12 = arith.constant dense<0.000000e+00> : vector<18x384xf32>
    %18 = tpu.matmul %15, %17, %cst_12 {dimension_numbers = #tpu.dot_dimension_numbers<[1], [0], [0], [1], [0, 0, 1, 1], [], []>} : vector<18x256xbf16>, vector<256x384xbf16>, vector<18x384xf32> -> vector<18x384xf32>
    %19 = arith.addf %10, %18 : vector<18x384xf32>
    %c0_i32_13 = arith.constant 0 : i32
    %20 = arith.addi %0, %c0_i32_13 : i32
    %c0_14 = arith.constant 0 : index
    %21 = arith.index_cast %20 : i32 to index
    %c2 = arith.constant 2 : index
    %c0_15 = arith.constant 0 : index
    %22 = vector.load %arg2[%c0_14, %21, %c2, %c0_15] : memref<1x8x8x256xbf16, #tpu.memory_space<vmem>>, vector<1x3x6x256xbf16>
    %23 = vector.shape_cast %22 : vector<1x3x6x256xbf16> to vector<3x6x256xbf16>
    %24 = vector.shape_cast %23 : vector<3x6x256xbf16> to vector<18x256xbf16>
    %c2_16 = arith.constant 2 : index
    %c0_17 = arith.constant 0 : index
    %c0_18 = arith.constant 0 : index
    %25 = vector.load %arg4[%c2_16, %c0_17, %c0_18] : memref<9x256x384xbf16, #tpu.memory_space<vmem>>, vector<1x256x384xbf16>
    %26 = vector.shape_cast %25 : vector<1x256x384xbf16> to vector<256x384xbf16>
    %cst_19 = arith.constant dense<0.000000e+00> : vector<18x384xf32>
    %27 = tpu.matmul %24, %26, %cst_19 {dimension_numbers = #tpu.dot_dimension_numbers<[1], [0], [0], [1], [0, 0, 1, 1], [], []>} : vector<18x256xbf16>, vector<256x384xbf16>, vector<18x384xf32> -> vector<18x384xf32>
    %28 = arith.addf %19, %27 : vector<18x384xf32>
    %c1_i32 = arith.constant 1 : i32
    %29 = arith.addi %0, %c1_i32 : i32
    %c0_20 = arith.constant 0 : index
    %30 = arith.index_cast %29 : i32 to index
    %c0_21 = arith.constant 0 : index
    %c0_22 = arith.constant 0 : index
    %31 = vector.load %arg2[%c0_20, %30, %c0_21, %c0_22] : memref<1x8x8x256xbf16, #tpu.memory_space<vmem>>, vector<1x3x6x256xbf16>
    %32 = vector.shape_cast %31 : vector<1x3x6x256xbf16> to vector<3x6x256xbf16>
    %33 = vector.shape_cast %32 : vector<3x6x256xbf16> to vector<18x256xbf16>
    %c3 = arith.constant 3 : index
    %c0_23 = arith.constant 0 : index
    %c0_24 = arith.constant 0 : index
    %34 = vector.load %arg4[%c3, %c0_23, %c0_24] : memref<9x256x384xbf16, #tpu.memory_space<vmem>>, vector<1x256x384xbf16>
    %35 = vector.shape_cast %34 : vector<1x256x384xbf16> to vector<256x384xbf16>
    %cst_25 = arith.constant dense<0.000000e+00> : vector<18x384xf32>
    %36 = tpu.matmul %33, %35, %cst_25 {dimension_numbers = #tpu.dot_dimension_numbers<[1], [0], [0], [1], [0, 0, 1, 1], [], []>} : vector<18x256xbf16>, vector<256x384xbf16>, vector<18x384xf32> -> vector<18x384xf32>
    %37 = arith.addf %28, %36 : vector<18x384xf32>
    %c1_i32_26 = arith.constant 1 : i32
    %38 = arith.addi %0, %c1_i32_26 : i32
    %c0_27 = arith.constant 0 : index
    %39 = arith.index_cast %38 : i32 to index
    %c1_28 = arith.constant 1 : index
    %c0_29 = arith.constant 0 : index
    %40 = vector.load %arg2[%c0_27, %39, %c1_28, %c0_29] : memref<1x8x8x256xbf16, #tpu.memory_space<vmem>>, vector<1x3x6x256xbf16>
    %41 = vector.shape_cast %40 : vector<1x3x6x256xbf16> to vector<3x6x256xbf16>
    %42 = vector.shape_cast %41 : vector<3x6x256xbf16> to vector<18x256xbf16>
    %c4 = arith.constant 4 : index
    %c0_30 = arith.constant 0 : index
    %c0_31 = arith.constant 0 : index
    %43 = vector.load %arg4[%c4, %c0_30, %c0_31] : memref<9x256x384xbf16, #tpu.memory_space<vmem>>, vector<1x256x384xbf16>
    %44 = vector.shape_cast %43 : vector<1x256x384xbf16> to vector<256x384xbf16>
    %cst_32 = arith.constant dense<0.000000e+00> : vector<18x384xf32>
    %45 = tpu.matmul %42, %44, %cst_32 {dimension_numbers = #tpu.dot_dimension_numbers<[1], [0], [0], [1], [0, 0, 1, 1], [], []>} : vector<18x256xbf16>, vector<256x384xbf16>, vector<18x384xf32> -> vector<18x384xf32>
    %46 = arith.addf %37, %45 : vector<18x384xf32>
    %c1_i32_33 = arith.constant 1 : i32
    %47 = arith.addi %0, %c1_i32_33 : i32
    %c0_34 = arith.constant 0 : index
    %48 = arith.index_cast %47 : i32 to index
    %c2_35 = arith.constant 2 : index
    %c0_36 = arith.constant 0 : index
    %49 = vector.load %arg2[%c0_34, %48, %c2_35, %c0_36] : memref<1x8x8x256xbf16, #tpu.memory_space<vmem>>, vector<1x3x6x256xbf16>
    %50 = vector.shape_cast %49 : vector<1x3x6x256xbf16> to vector<3x6x256xbf16>
    %51 = vector.shape_cast %50 : vector<3x6x256xbf16> to vector<18x256xbf16>
    %c5 = arith.constant 5 : index
    %c0_37 = arith.constant 0 : index
    %c0_38 = arith.constant 0 : index
    %52 = vector.load %arg4[%c5, %c0_37, %c0_38] : memref<9x256x384xbf16, #tpu.memory_space<vmem>>, vector<1x256x384xbf16>
    %53 = vector.shape_cast %52 : vector<1x256x384xbf16> to vector<256x384xbf16>
    %cst_39 = arith.constant dense<0.000000e+00> : vector<18x384xf32>
    %54 = tpu.matmul %51, %53, %cst_39 {dimension_numbers = #tpu.dot_dimension_numbers<[1], [0], [0], [1], [0, 0, 1, 1], [], []>} : vector<18x256xbf16>, vector<256x384xbf16>, vector<18x384xf32> -> vector<18x384xf32>
    %55 = arith.addf %46, %54 : vector<18x384xf32>
    %c2_i32 = arith.constant 2 : i32
    %56 = arith.addi %0, %c2_i32 : i32
    %c0_40 = arith.constant 0 : index
    %57 = arith.index_cast %56 : i32 to index
    %c0_41 = arith.constant 0 : index
    %c0_42 = arith.constant 0 : index
    %58 = vector.load %arg2[%c0_40, %57, %c0_41, %c0_42] : memref<1x8x8x256xbf16, #tpu.memory_space<vmem>>, vector<1x3x6x256xbf16>
    %59 = vector.shape_cast %58 : vector<1x3x6x256xbf16> to vector<3x6x256xbf16>
    %60 = vector.shape_cast %59 : vector<3x6x256xbf16> to vector<18x256xbf16>
    %c6 = arith.constant 6 : index
    %c0_43 = arith.constant 0 : index
    %c0_44 = arith.constant 0 : index
    %61 = vector.load %arg4[%c6, %c0_43, %c0_44] : memref<9x256x384xbf16, #tpu.memory_space<vmem>>, vector<1x256x384xbf16>
    %62 = vector.shape_cast %61 : vector<1x256x384xbf16> to vector<256x384xbf16>
    %cst_45 = arith.constant dense<0.000000e+00> : vector<18x384xf32>
    %63 = tpu.matmul %60, %62, %cst_45 {dimension_numbers = #tpu.dot_dimension_numbers<[1], [0], [0], [1], [0, 0, 1, 1], [], []>} : vector<18x256xbf16>, vector<256x384xbf16>, vector<18x384xf32> -> vector<18x384xf32>
    %64 = arith.addf %55, %63 : vector<18x384xf32>
    %c2_i32_46 = arith.constant 2 : i32
    %65 = arith.addi %0, %c2_i32_46 : i32
    %c0_47 = arith.constant 0 : index
    %66 = arith.index_cast %65 : i32 to index
    %c1_48 = arith.constant 1 : index
    %c0_49 = arith.constant 0 : index
    %67 = vector.load %arg2[%c0_47, %66, %c1_48, %c0_49] : memref<1x8x8x256xbf16, #tpu.memory_space<vmem>>, vector<1x3x6x256xbf16>
    %68 = vector.shape_cast %67 : vector<1x3x6x256xbf16> to vector<3x6x256xbf16>
    %69 = vector.shape_cast %68 : vector<3x6x256xbf16> to vector<18x256xbf16>
    %c7 = arith.constant 7 : index
    %c0_50 = arith.constant 0 : index
    %c0_51 = arith.constant 0 : index
    %70 = vector.load %arg4[%c7, %c0_50, %c0_51] : memref<9x256x384xbf16, #tpu.memory_space<vmem>>, vector<1x256x384xbf16>
    %71 = vector.shape_cast %70 : vector<1x256x384xbf16> to vector<256x384xbf16>
    %cst_52 = arith.constant dense<0.000000e+00> : vector<18x384xf32>
    %72 = tpu.matmul %69, %71, %cst_52 {dimension_numbers = #tpu.dot_dimension_numbers<[1], [0], [0], [1], [0, 0, 1, 1], [], []>} : vector<18x256xbf16>, vector<256x384xbf16>, vector<18x384xf32> -> vector<18x384xf32>
    %73 = arith.addf %64, %72 : vector<18x384xf32>
    %c2_i32_53 = arith.constant 2 : i32
    %74 = arith.addi %0, %c2_i32_53 : i32
    %c0_54 = arith.constant 0 : index
    %75 = arith.index_cast %74 : i32 to index
    %c2_55 = arith.constant 2 : index
    %c0_56 = arith.constant 0 : index
    %76 = vector.load %arg2[%c0_54, %75, %c2_55, %c0_56] : memref<1x8x8x256xbf16, #tpu.memory_space<vmem>>, vector<1x3x6x256xbf16>
    %77 = vector.shape_cast %76 : vector<1x3x6x256xbf16> to vector<3x6x256xbf16>
    %78 = vector.shape_cast %77 : vector<3x6x256xbf16> to vector<18x256xbf16>
    %c8 = arith.constant 8 : index
    %c0_57 = arith.constant 0 : index
    %c0_58 = arith.constant 0 : index
    %79 = vector.load %arg4[%c8, %c0_57, %c0_58] : memref<9x256x384xbf16, #tpu.memory_space<vmem>>, vector<1x256x384xbf16>
    %80 = vector.shape_cast %79 : vector<1x256x384xbf16> to vector<256x384xbf16>
    %cst_59 = arith.constant dense<0.000000e+00> : vector<18x384xf32>
    %81 = tpu.matmul %78, %80, %cst_59 {dimension_numbers = #tpu.dot_dimension_numbers<[1], [0], [0], [1], [0, 0, 1, 1], [], []>} : vector<18x256xbf16>, vector<256x384xbf16>, vector<18x384xf32> -> vector<18x384xf32>
    %82 = arith.addf %73, %81 : vector<18x384xf32>
    %c0_60 = arith.constant 0 : index
    %c0_61 = arith.constant 0 : index
    %c0_62 = arith.constant 0 : index
    %c0_63 = arith.constant 0 : index
    %83 = vector.load %arg3[%c0_60, %c0_61, %c0_62, %c0_63] : memref<1x3x6x6xbf16, #tpu.memory_space<vmem>>, vector<1x3x6x6xbf16>
    %84 = vector.shape_cast %83 : vector<1x3x6x6xbf16> to vector<3x6x6xbf16>
    %85 = arith.extf %84 : vector<3x6x6xbf16> to vector<3x6x6xf32>
    %86 = vector.shape_cast %85 : vector<3x6x6xf32> to vector<18x6xf32>
    %87 = vector.shape_cast %86 : vector<18x6xf32> to vector<18x6x1xf32>
    %c0_64 = arith.constant 0 : index
    %c0_65 = arith.constant 0 : index
    %88 = vector.load %arg5[%c0_64, %c0_65] : memref<1x64xf32, #tpu.memory_space<vmem>>, vector<1x64xf32>
    %89 = vector.shape_cast %88 : vector<1x64xf32> to vector<1x1x64xf32>
    %90 = vector.broadcast %87 : vector<18x6x1xf32> to vector<18x6x64xf32>
    %91 = vector.broadcast %89 : vector<1x1x64xf32> to vector<18x6x64xf32>
    %92 = arith.mulf %90, %91 : vector<18x6x64xf32>
    %93 = vector.shape_cast %92 : vector<18x6x64xf32> to vector<18x384xf32>
    %94 = arith.addf %82, %93 : vector<18x384xf32>
    %95 = vector.shape_cast %94 : vector<18x384xf32> to vector<3x6x384xf32>
    %c0_66 = arith.constant 0 : index
    %c0_67 = arith.constant 0 : index
    %c0_68 = arith.constant 0 : index
    %c0_69 = arith.constant 0 : index
    %96 = vector.load %arg6[%c0_66, %c0_67, %c0_68, %c0_69] : memref<1x3x6x384xf32, #tpu.memory_space<vmem>>, vector<1x3x6x384xf32>
    %97 = vector.shape_cast %96 : vector<1x3x6x384xf32> to vector<3x6x384xf32>
    %98 = vector.shape_cast %95 : vector<3x6x384xf32> to vector<1x3x6x384xf32>
    tpu.vector_store %arg6[%c0_66, %c0_67, %c0_68, %c0_69], %98 {strides = array<i32>} : memref<1x3x6x384xf32, #tpu.memory_space<vmem>>, vector<1x3x6x384xf32>,
    return
  }
  func.func @transform_0(%arg0: i32, %arg1: i32) -> (i32, i32, i32, i32) {
    %c0_i32 = arith.constant 0 : i32
    %c0_i32_0 = arith.constant 0 : i32
    %c0_i32_1 = arith.constant 0 : i32
    %c0_i32_2 = arith.constant 0 : i32
    return %arg0, %c0_i32, %c0_i32_0, %c0_i32_1 : i32, i32, i32, i32
  }
  func.func @transform_1(%arg0: i32, %arg1: i32) -> (i32, i32, i32, i32) {
    %c0_i32 = arith.constant 0 : i32
    %c0_i32_0 = arith.constant 0 : i32
    %c0_i32_1 = arith.constant 0 : i32
    return %arg0, %arg1, %c0_i32, %c0_i32_0 : i32, i32, i32, i32
  }
  func.func @transform_2(%arg0: i32, %arg1: i32) -> (i32, i32, i32) {
    %c0_i32 = arith.constant 0 : i32
    %c0_i32_0 = arith.constant 0 : i32
    %c0_i32_1 = arith.constant 0 : i32
    %c0_i32_2 = arith.constant 0 : i32
    return %c0_i32, %c0_i32_0, %c0_i32_1 : i32, i32, i32
  }
  func.func @transform_3(%arg0: i32, %arg1: i32) -> (i32, i32) {
    %c0_i32 = arith.constant 0 : i32
    %c0_i32_0 = arith.constant 0 : i32
    %c0_i32_1 = arith.constant 0 : i32
    return %c0_i32, %c0_i32_0 : i32, i32
  }
  func.func @transform_4(%arg0: i32, %arg1: i32) -> (i32, i32, i32, i32) {
    %c0_i32 = arith.constant 0 : i32
    %c0_i32_0 = arith.constant 0 : i32
    %c0_i32_1 = arith.constant 0 : i32
    return %arg0, %arg1, %c0_i32, %c0_i32_0 : i32, i32, i32, i32
  }
}

</mosaic_0001>

<llo_original>
// kernel: tpu_custom_call.1
$region0: #{tpu_custom_call.1}
  #allocation0 [shape = 'u32[]', space=smem, size = 0x4, offset = 0x4, fixed_abs, tag = 'smem constant byte address 0x4 - core index']
  #allocation1 [shape = 'u32[72,128]{1,0:T(1,128)}', space=vmem, size = 0x9000, scoped, tag = 'internal scratch']
  %s0 = inlined_call_operand.hbm [shape: bf16[2,8,8,256], index: 0, kind: input, shape index: {}]
  %s1 = inlined_call_operand.vmem [shape: bf16[2,6,6,6], index: 1, kind: input, shape index: {}]
  %s2 = inlined_call_operand.hbm [shape: bf16[9,256,384], index: 2, kind: input, shape index: {}]
  %s3 = inlined_call_operand.hbm [shape: f32[1,64], index: 3, kind: input, shape index: {}]
  %s4 = inlined_call_operand.vmem [shape: f32[2,6,6,384], index: 4, kind: output, shape index: {}]
  %s5 = sld [smem:[#allocation0]]
  $region61: #{tpu_custom_call.1} parent=0
    _
  %s7 = ssub.s32 1, %s5
  %s8 = scalar_select 0, %s7, %s5
  $region1: #{tpu_custom_call.1} parent=0
    #allocation2 [shape = 'u8[65536]{0}', space=vmem, size = 0x10000, scoped, tag = 'input window, operand 0']
    #allocation3 [shape = 's32[2]{0}', space=sflag, size = 0x8, scoped, tag = 'scoped memory for tpu_custom_call.1']
    #allocation4 [shape = 'u8[1769472]{0}', space=vmem, size = 0x1b0000, scoped, tag = 'input window, operand 2, single buffered']
    #allocation5 [shape = 's32[1]{0}', space=sflag, size = 0x4, scoped, tag = 'scoped memory for tpu_custom_call.1']
    #allocation6 [shape = 'u8[512]{0}', space=vmem, size = 0x400, scoped, tag = 'input window, operand 3, single buffered']
    %9 = vsyncpa [#allocation3], 0
    %s10 = scalar_lea.sflag [#allocation3], 1
    %11 = vsyncpa %s10, 0
    %12 = vsyncpa [#allocation5], 0
    loop: start=0, step=1, limit=6
    $region2: #{tpu_custom_call.1} parent=1 // loop_pre_header
      _
    $region3: #{tpu_custom_call.1} parent=1 // loop_header
      %s14 = sphi 0, %s18
      %p15 = scmp.ge.s32.totalorder %s14, 6
      %s21 = sphi 0, %s33
      %s22 = sphi 0, %s29
      %s23 = sphi 0, %s21
      %s24 = sphi 0, %s22
      %s25 = sphi 0, %s23
      %s26 = sphi 0, %s24
      %s36 = sphi 0, %s38
      %s39 = sphi 0, %s36
      %s40 = sphi 0, %s39
      %s56 = sphi 0, %s40
      %s64 = sphi 0, %s66
      %s67 = sphi 0, %s64
      %s68 = sphi 0, %s67
      %s84 = sphi 0, %s68
      %s88 = sphi 0, %s88
      %s90 = sphi 0, %s88
      %s91 = sphi 0, %s90
      %s105 = sphi 0, %s91
      %s109 = sphi 0, %s109
      %s111 = sphi 0, %s109
      %s112 = sphi 0, %s111
      %s126 = sphi 0, %s112
      %s134 = sphi 0, %s136
      %s137 = sphi 0, %s134
      %s138 = sphi 0, %s137
      %s154 = sphi 0, %s138
    $region4: #{tpu_custom_call.1} parent=1 // loop_header_branch
      %17 = sbr.rel (%p15) target = $region8
    $region5: #{tpu_custom_call.1} parent=1 // loop_body
      %s19 = ssub.s32 %s14, 1
      %s20 = ssub.s32 %s14, 2
      %s27 = sadd.s32 1, %s22
      %p28 = scmp.ge.s32.totalorder %s27, 2
      %s29 = scalar_select %p28, 0, %s27
      %s30 = sadd.s32 1, %s21
      %s31 = scalar_select %p28, %s30, %s21
      %p32 = scmp.ge.s32.totalorder %s31, 2
      %s33 = scalar_select %p32, 0, %s31
      %s34 = ssub.s32 %s21, %s33
      %p35 = scmp.eq.s32.totalorder %s34, 0
      %s37 = sadd.s32 %s36, 1
      %s38 = scalar_select %p35, %s36, %s37
      %p41 = pneg %p35
      %p42 = scmp.eq.s32.totalorder %s14, 3
      %p43 = por %p41, %p42
      %p44 = scmp.ne.s32.totalorder %s36, %s39
      %p45 = scmp.eq.s32.totalorder %s14, 0
      %p46 = por %p44, %p45
      %p47 = scmp.ne.s32.totalorder %s36, %s39
      %p48 = scmp.eq.s32.totalorder %s19, 3
      %p49 = por %p47, %p48
      %p50 = scmp.ne.s32.totalorder %s39, %s40
      %p51 = scmp.eq.s32.totalorder %s19, 0
      %p52 = por %p50, %p51
      %p53 = scmp.ne.s32.totalorder %s39, %s40
      %p54 = scmp.eq.s32.totalorder %s20, 3
      %p55 = por %p53, %p54
      %p57 = scmp.ne.s32.totalorder %s40, %s56
      %p58 = scmp.eq.s32.totalorder %s20, 0
      %p59 = por %p57, %p58
      %s60 = ssub.s32 %s21, %s33
      %s61 = ssub.s32 %s22, %s29
      %s62 = sor.u32 %s60, %s61
      %p63 = scmp.eq.s32.totalorder %s62, 0
      %s65 = sadd.s32 %s64, 1
      %s66 = scalar_select %p63, %s64, %s65
      %p69 = pneg %p63
      %p70 = scmp.eq.s32.totalorder %s14, 3
      %p71 = por %p69, %p70
      %p72 = scmp.ne.s32.totalorder %s64, %s67
      %p73 = scmp.eq.s32.totalorder %s14, 0
      %p74 = por %p72, %p73
      %p75 = scmp.ne.s32.totalorder %s64, %s67
      %p76 = scmp.eq.s32.totalorder %s19, 3
      %p77 = por %p75, %p76
      %p78 = scmp.ne.s32.totalorder %s67, %s68
      %p79 = scmp.eq.s32.totalorder %s19, 0
      %p80 = por %p78, %p79
      %p81 = scmp.ne.s32.totalorder %s67, %s68
      %p82 = scmp.eq.s32.totalorder %s20, 3
      %p83 = por %p81, %p82
      %p85 = scmp.ne.s32.totalorder %s68, %s84
      %p86 = scmp.eq.s32.totalorder %s20, 0
      %p87 = por %p85, %p86
      %s89 = sadd.s32 %s88, 1
      %p92 = scmp.eq.s32.totalorder %s14, 3
      %p93 = scmp.ne.s32.totalorder %s88, %s90
      %p94 = scmp.eq.s32.totalorder %s14, 0
      %p95 = por %p93, %p94
      %p96 = scmp.ne.s32.totalorder %s88, %s90
      %p97 = scmp.eq.s32.totalorder %s19, 3
      %p98 = por %p96, %p97
      %p99 = scmp.ne.s32.totalorder %s90, %s91
      %p100 = scmp.eq.s32.totalorder %s19, 0
      %p101 = por %p99, %p100
      %p102 = scmp.ne.s32.totalorder %s90, %s91
      %p103 = scmp.eq.s32.totalorder %s20, 3
      %p104 = por %p102, %p103
      %p106 = scmp.ne.s32.totalorder %s91, %s105
      %p107 = scmp.eq.s32.totalorder %s20, 0
      %p108 = por %p106, %p107
      %s110 = sadd.s32 %s109, 1
      %p113 = scmp.eq.s32.totalorder %s14, 3
      %p114 = scmp.ne.s32.totalorder %s109, %s111
      %p115 = scmp.eq.s32.totalorder %s14, 0
      %p116 = por %p114, %p115
      %p117 = scmp.ne.s32.totalorder %s109, %s111
      %p118 = scmp.eq.s32.totalorder %s19, 3
      %p119 = por %p117, %p118
      %p120 = scmp.ne.s32.totalorder %s111, %s112
      %p121 = scmp.eq.s32.totalorder %s19, 0
      %p122 = por %p120, %p121
      %p123 = scmp.ne.s32.totalorder %s111, %s112
      %p124 = scmp.eq.s32.totalorder %s20, 3
      %p125 = por %p123, %p124
      %p127 = scmp.ne.s32.totalorder %s112, %s126
      %p128 = scmp.eq.s32.totalorder %s20, 0
      %p129 = por %p127, %p128
      %s130 = ssub.s32 %s21, %s33
      %s131 = ssub.s32 %s22, %s29
      %s132 = sor.u32 %s130, %s131
      %p133 = scmp.eq.s32.totalorder %s132, 0
      %s135 = sadd.s32 %s134, 1
      %s136 = scalar_select %p133, %s134, %s135
      %p139 = pneg %p133
      %p140 = scmp.eq.s32.totalorder %s14, 3
      %p141 = por %p139, %p140
      %p142 = scmp.ne.s32.totalorder %s134, %s137
      %p143 = scmp.eq.s32.totalorder %s14, 0
      %p144 = por %p142, %p143
      %p145 = scmp.ne.s32.totalorder %s134, %s137
      %p146 = scmp.eq.s32.totalorder %s19, 3
      %p147 = por %p145, %p146
      %p148 = scmp.ne.s32.totalorder %s137, %s138
      %p149 = scmp.eq.s32.totalorder %s19, 0
      %p150 = por %p148, %p149
      %p151 = scmp.ne.s32.totalorder %s137, %s138
      %p152 = scmp.eq.s32.totalorder %s20, 3
      %p153 = por %p151, %p152
      %p155 = scmp.ne.s32.totalorder %s138, %s154
      %p156 = scmp.eq.s32.totalorder %s20, 0
      %p157 = por %p155, %p156
      %p158 = scmp.le.s32.totalorder 1, %s14
      %p159 = scmp.lt.s32.totalorder %s14, 5
      %p160 = pnand %p158, %p159
      %p161 = pneg %p160
      // Predicated region
      $region9: #{tpu_custom_call.1} parent=5 // pred_check
        _
      $region10: #{tpu_custom_call.1} parent=5 // pred_check_branch
        %163 = sbr.rel (%p160) target = $region12
      $region11: #{tpu_custom_call.1} parent=5 // pred_region
        %s164 = ssub.s32 %s14, 1
        // Predicated region
        $region13: #{tpu_custom_call.1} parent=11 // pred_check
          %p165 = pneg %p101
        $region14: #{tpu_custom_call.1} parent=11 // pred_check_branch
          %167 = sbr.rel (%p165) target = $region16
        $region15: #{tpu_custom_call.1} parent=11 // pred_region
          %169 = vsyncadd [#allocation5], 0
          %s170 = sshll.u32 %s2, 4
          %s171 = int_to_ptr.hbm [resolvable:$true] %s170
          %s172 = sshll.u32 [#allocation4], 4
          %s173 = int_to_ptr.vmem [resolvable:$true] %s172
          %178 = dma.hbm_to_vmem [thread:$0]  %s171, 55296, %s173, [#allocation5], 192, 192, 12
        $region16: #{tpu_custom_call.1} parent=11 // pred_fallthru
          _
        // Predicated region
        $region17: #{tpu_custom_call.1} parent=11 // pred_check
          %p179 = pneg %p122
        $region18: #{tpu_custom_call.1} parent=11 // pred_check_branch
          %181 = sbr.rel (%p179) target = $region20
        $region19: #{tpu_custom_call.1} parent=11 // pred_region
          %183 = vsyncadd [#allocation5], 0
          %s185 = sshll.u32 %s3, 4
          %s186 = int_to_ptr.hbm [resolvable:$true] %s185
          %s187 = sshll.u32 [#allocation6], 4
          %s188 = int_to_ptr.vmem [resolvable:$true] %s187
          %190 = dma.hbm_to_vmem [thread:$0]  %s186, 16, %s188, [#allocation5]
        $region20: #{tpu_custom_call.1} parent=11 // pred_fallthru
          _
      $region12: #{tpu_custom_call.1} parent=5 // pred_fallthru
        _
      %p191 = scmp.lt.s32.totalorder %s14, 4
      // Predicated region
      $region21: #{tpu_custom_call.1} parent=5 // pred_check
        %p192 = pneg %p191
      $region22: #{tpu_custom_call.1} parent=5 // pred_check_branch
        %194 = sbr.rel (%p192) target = $region24
      $region23: #{tpu_custom_call.1} parent=5 // pred_region
        // Predicated region
        $region25: #{tpu_custom_call.1} parent=23 // pred_check
          %p195 = pneg %p46
        $region26: #{tpu_custom_call.1} parent=23 // pred_check_branch
          %197 = sbr.rel (%p195) target = $region28
        $region27: #{tpu_custom_call.1} parent=23 // pred_region
          %s198 = sand.u32 %s36, 1
          %s199 = scalar_lea.sflag [#allocation3], %s198
          %s200 = sand.u32 %s36, 1
          %s201 = smul.addr %s200, 64
          %s202 = scalar_lea.vmem [#allocation2], %s201
          %204 = vsyncadd %s199, 0
          %s205 = smul.addr %s21, 16
          %s206 = smul.addr %s205, 4
          %s207 = scalar_lea.hbm %s0, %s206
          %s208 = sshll.u32 %s207, 4
          %s209 = int_to_ptr.hbm [resolvable:$true] %s208
          %s210 = sshll.u32 %s202, 4
          %s211 = int_to_ptr.vmem [resolvable:$true] %s210
          %216 = dma.hbm_to_vmem [thread:$0]  %s209, 1024, %s211, %s199, 128, 128, 8
        $region28: #{tpu_custom_call.1} parent=23 // pred_fallthru
          _
        // Predicated region
        $region29: #{tpu_custom_call.1} parent=23 // pred_check
          %p217 = pneg %p74
        $region30: #{tpu_custom_call.1} parent=23 // pred_check_branch
          %219 = sbr.rel (%p217) target = $region32
        $region31: #{tpu_custom_call.1} parent=23 // pred_region
          %s220 = smul.u32 3, %s22
          %p221 = scmp.lt.s32.totalorder %s21, 1
          %s222 = scalar_select %p221, %s21, 1
          %p223 = scmp.lt.s32.totalorder %s220, 5
          %s224 = scalar_select %p223, %s220, 5
          %s225 = smul.addr %s222, 6
          %s226 = sadd.s32 %s224, %s225
          %s227 = smul.addr %s226, 4
          %s228 = scalar_lea.vmem %s1, %s227
          %s229 = smul.u32 3, %s22
        $region32: #{tpu_custom_call.1} parent=23 // pred_fallthru
          _
      $region24: #{tpu_custom_call.1} parent=5 // pred_fallthru
        _
      %p230 = scmp.le.s32.totalorder 1, %s14
      %p231 = scmp.lt.s32.totalorder %s14, 5
      %p232 = pnand %p230, %p231
      %p233 = pneg %p232
      // Predicated region
      $region33: #{tpu_custom_call.1} parent=5 // pred_check
        _
      $region34: #{tpu_custom_call.1} parent=5 // pred_check_branch
        %235 = sbr.rel (%p232) target = $region36
      $region35: #{tpu_custom_call.1} parent=5 // pred_region
        %s236 = ssub.s32 %s14, 1
        %s237 = sand.u32 %s39, 1
        %s238 = scalar_lea.sflag [#allocation3], %s237
        %s239 = sand.u32 %s39, 1
        %s240 = smul.addr %s239, 64
        %s241 = scalar_lea.vmem [#allocation2], %s240
        // Predicated region
        $region37: #{tpu_custom_call.1} parent=35 // pred_check
          %p242 = pneg %p52
        $region38: #{tpu_custom_call.1} parent=35 // pred_check_branch
          %244 = sbr.rel (%p242) target = $region40
        $region39: #{tpu_custom_call.1} parent=35 // pred_region
          %246 = dma.done %s238, 1024
        $region40: #{tpu_custom_call.1} parent=35 // pred_fallthru
          _
        // Predicated region
        $region41: #{tpu_custom_call.1} parent=35 // pred_check
          %p247 = pneg %p101
        $region42: #{tpu_custom_call.1} parent=35 // pred_check_branch
          %249 = sbr.rel (%p247) target = $region44
        $region43: #{tpu_custom_call.1} parent=35 // pred_region
          %251 = dma.done [#allocation5], 55296
        $region44: #{tpu_custom_call.1} parent=35 // pred_fallthru
          _
        // Predicated region
        $region45: #{tpu_custom_call.1} parent=35 // pred_check
          %p252 = pneg %p122
        $region46: #{tpu_custom_call.1} parent=35 // pred_check_branch
          %254 = sbr.rel (%p252) target = $region48
        $region47: #{tpu_custom_call.1} parent=35 // pred_region
          %256 = dma.done [#allocation5], 16
        $region48: #{tpu_custom_call.1} parent=35 // pred_fallthru
          _
        %s257 = sand.u32 %s39, 1
        %s258 = scalar_lea.sflag [#allocation3], %s257
        %s259 = sand.u32 %s39, 1
        %s260 = smul.addr %s259, 64
        %s261 = scalar_lea.vmem [#allocation2], %s260
        %p262 = pneg %p52
        %p263 = pneg %p49
        %s264 = smul.u32 3, %s24
        %p265 = scmp.lt.s32.totalorder %s23, 1
        %s266 = scalar_select %p265, %s23, 1
        %p267 = scmp.lt.s32.totalorder %s264, 5
        %s268 = scalar_select %p267, %s264, 5
        %s269 = smul.addr %s266, 6
        %s270 = sadd.s32 %s268, %s269
        %s271 = smul.addr %s270, 4
        %s272 = scalar_lea.vmem %s1, %s271
        %p273 = pneg %p80
        %p274 = pneg %p77
        %p275 = pneg %p101
        %p276 = pneg %p98
        %p277 = pneg %p122
        %p278 = pneg %p119
        %p279 = pneg %p150
        %p280 = pneg %p147
        %s281 = smul.u32 3, %s24
        %p282 = scmp.lt.s32.totalorder %s23, 1
        %s283 = scalar_select %p282, %s23, 1
        %p284 = scmp.lt.s32.totalorder %s281, 5
        %s285 = scalar_select %p284, %s281, 5
        %s286 = smul.addr %s285, 3
        %s287 = smul.addr %s283, 18
        %s288 = sadd.s32 %s286, %s287
        %s289 = smul.addr %s288, 8
        %s290 = scalar_lea.vmem %s4, %s289
        %s291 = smul.u32 3, %s24
        %p292 = scmp.lt.s32.totalorder %s23, 1
        %s293 = scalar_select %p292, %s23, 1
        %p294 = scmp.lt.s32.totalorder %s291, 5
        %s295 = scalar_select %p294, %s291, 5
        %s296 = smul.addr %s293, 6
        %s297 = sadd.s32 %s295, %s296
        %s298 = smul.addr %s297, 4
        %s299 = scalar_lea.vmem %s1, %s298
        %s300 = smul.u32 3, %s24
        %s301 = smul.u32 3, %s24
        %p302 = scmp.lt.s32.totalorder %s23, 1
        %s303 = scalar_select %p302, %s23, 1
        %p304 = scmp.lt.s32.totalorder %s301, 5
        %s305 = scalar_select %p304, %s301, 5
        %s306 = smul.addr %s305, 3
        %s307 = smul.addr %s303, 18
        %s308 = sadd.s32 %s306, %s307
        %s309 = smul.addr %s308, 8
        %s310 = scalar_lea.vmem %s4, %s309
        %s311 = smul.u32 3, %s24
        %s312 = smul.u32 %s24, 3
        %s313 = smul.u32 %s312, 2
        %s314 = smul.addr %s313, 4
        %s315 = scalar_lea.vmem %s241, %s314 [#allocation2]
        %v316 = vld [vmem:[%s315] sm:$0x77]
        %v317 = vld [vmem:[%s315 + $0x8] sm:$0x77]
        %v318 = vld [vmem:[%s315 + $0x10] sm:$0x77]
        %v322 = vrot.slane %v316, 3
        %v323 = vrot.slane %v317, 3
        %v324 = vrot.slane %v318, 3
        %vm325 = vcmask 1040384
        %v328 = vsel %vm325, %v316, %v322
        %vm329 = vcmask 1041409
        %v330 = vsel %vm329, %v316, %v322
        %v332 = vrot.slane %v330, 1
        %vm333 = vcmask 1042434
        %v334 = vsel %vm333, %v316, %v322
        %v336 = vrot.slane %v334, 2
        %v339 = vsel %vm325, %v317, %v323
        %v340 = vsel %vm329, %v317, %v323
        %v342 = vrot.slane %v340, 1
        %v343 = vsel %vm333, %v317, %v323
        %v345 = vrot.slane %v343, 2
        %v348 = vsel %vm325, %v318, %v324
        %v349 = vsel %vm329, %v318, %v324
        %v351 = vrot.slane %v349, 1
        %v352 = vsel %vm333, %v318, %v324
        %v354 = vrot.slane %v352, 2
        %v355 = vld [vmem:[#allocation4] sm:$0xff]
        %v356 = vld [vmem:[#allocation4 + $0x8] sm:$0xf]
        %v357 = vld [vmem:[#allocation4 + $0xc] sm:$0xff]
        %v358 = vld [vmem:[#allocation4 + $0x14] sm:$0xf]
        %v359 = vld [vmem:[#allocation4 + $0x18] sm:$0xff]
        %v360 = vld [vmem:[#allocation4 + $0x20] sm:$0xf]
        %v361 = vld [vmem:[#allocation4 + $0x24] sm:$0xff]
        %v362 = vld [vmem:[#allocation4 + $0x2c] sm:$0xf]
        %v363 = vld [vmem:[#allocation4 + $0x30] sm:$0xff]
        %v364 = vld [vmem:[#allocation4 + $0x38] sm:$0xf]
        %v365 = vld [vmem:[#allocation4 + $0x3c] sm:$0xff]
        %v366 = vld [vmem:[#allocation4 + $0x44] sm:$0xf]
        %v367 = vld [vmem:[#allocation4 + $0x48] sm:$0xff]
        %v368 = vld [vmem:[#allocation4 + $0x50] sm:$0xf]
        %v369 = vld [vmem:[#allocation4 + $0x54] sm:$0xff]
        %v370 = vld [vmem:[#allocation4 + $0x5c] sm:$0xf]
        %v371 = vld [vmem:[#allocation4 + $0x60] sm:$0xff]
        %v372 = vld [vmem:[#allocation4 + $0x68] sm:$0xf]
        %v373 = vld [vmem:[#allocation4 + $0x6c] sm:$0xff]
        %v374 = vld [vmem:[#allocation4 + $0x74] sm:$0xf]
        %v375 = vld [vmem:[#allocation4 + $0x78] sm:$0xff]
        %v376 = vld [vmem:[#allocation4 + $0x80] sm:$0xf]
        %v377 = vld [vmem:[#allocation4 + $0x84] sm:$0xff]
        %v378 = vld [vmem:[#allocation4 + $0x8c] sm:$0xf]
        %v379 = vld [vmem:[#allocation4 + $0x90] sm:$0xff]
        %v380 = vld [vmem:[#allocation4 + $0x98] sm:$0xf]
        %v381 = vld [vmem:[#allocation4 + $0x9c] sm:$0xff]
        %v382 = vld [vmem:[#allocation4 + $0xa4] sm:$0xf]
        %v383 = vld [vmem:[#allocation4 + $0xa8] sm:$0xff]
        %v384 = vld [vmem:[#allocation4 + $0xb0] sm:$0xf]
        %v385 = vld [vmem:[#allocation4 + $0xb4] sm:$0xff]
        %v386 = vld [vmem:[#allocation4 + $0xbc] sm:$0xf]
        %v387 = vld [vmem:[#allocation4 + $0xc0] sm:$0xff]
        %v388 = vld [vmem:[#allocation4 + $0xc8] sm:$0xf]
        %v389 = vld [vmem:[#allocation4 + $0xcc] sm:$0xff]
        %v390 = vld [vmem:[#allocation4 + $0xd4] sm:$0xf]
        %v391 = vld [vmem:[#allocation4 + $0xd8] sm:$0xff]
        %v392 = vld [vmem:[#allocation4 + $0xe0] sm:$0xf]
        %v393 = vld [vmem:[#allocation4 + $0xe4] sm:$0xff]
        %v394 = vld [vmem:[#allocation4 + $0xec] sm:$0xf]
        %v395 = vld [vmem:[#allocation4 + $0xf0] sm:$0xff]
        %v396 = vld [vmem:[#allocation4 + $0xf8] sm:$0xf]
        %v397 = vld [vmem:[#allocation4 + $0xfc] sm:$0xff]
        %v398 = vld [vmem:[#allocation4 + $0x104] sm:$0xf]
        %v399 = vld [vmem:[#allocation4 + $0x108] sm:$0xff]
        %v400 = vld [vmem:[#allocation4 + $0x110] sm:$0xf]
        %v401 = vld [vmem:[#allocation4 + $0x114] sm:$0xff]
        %v402 = vld [vmem:[#allocation4 + $0x11c] sm:$0xf]
        %v403 = vld [vmem:[#allocation4 + $0x120] sm:$0xff]
        %v404 = vld [vmem:[#allocation4 + $0x128] sm:$0xf]
        %v405 = vld [vmem:[#allocation4 + $0x12c] sm:$0xff]
        %v406 = vld [vmem:[#allocation4 + $0x134] sm:$0xf]
        %v407 = vld [vmem:[#allocation4 + $0x138] sm:$0xff]
        %v408 = vld [vmem:[#allocation4 + $0x140] sm:$0xf]
        %v409 = vld [vmem:[#allocation4 + $0x144] sm:$0xff]
        %v410 = vld [vmem:[#allocation4 + $0x14c] sm:$0xf]
        %v411 = vld [vmem:[#allocation4 + $0x150] sm:$0xff]
        %v412 = vld [vmem:[#allocation4 + $0x158] sm:$0xf]
        %v413 = vld [vmem:[#allocation4 + $0x15c] sm:$0xff]
        %v414 = vld [vmem:[#allocation4 + $0x164] sm:$0xf]
        %v415 = vld [vmem:[#allocation4 + $0x168] sm:$0xff]
        %v416 = vld [vmem:[#allocation4 + $0x170] sm:$0xf]
        %v417 = vld [vmem:[#allocation4 + $0x174] sm:$0xff]
        %v418 = vld [vmem:[#allocation4 + $0x17c] sm:$0xf]
        %v419 = vld [vmem:[%s315] sm:$0xff]
        %v420 = vld [vmem:[%s315 + $0x8] sm:$0xff]
        %v421 = vld [vmem:[%s315 + $0x10] sm:$0xff]
        %v425 = vrot.slane %v419, 3
        %v426 = vrot.slane %v420, 3
        %v427 = vrot.slane %v421, 3
        %v430 = vsel %vm325, %v419, %v425
        %v431 = vsel %vm329, %v419, %v425
        %v433 = vrot.slane %v431, 1
        %v434 = vsel %vm333, %v419, %v425
        %v436 = vrot.slane %v434, 2
        %vm437 = vcmask 1043459
        %v438 = vsel %vm437, %v419, %v425
        %v440 = vrot.slane %v438, 3
        %v443 = vsel %vm325, %v420, %v426
        %v444 = vsel %vm329, %v420, %v426
        %v446 = vrot.slane %v444, 1
        %v447 = vsel %vm333, %v420, %v426
        %v449 = vrot.slane %v447, 2
        %v450 = vsel %vm437, %v420, %v426
        %v452 = vrot.slane %v450, 3
        %v455 = vsel %vm325, %v421, %v427
        %v456 = vsel %vm329, %v421, %v427
        %v458 = vrot.slane %v456, 1
        %v459 = vsel %vm333, %v421, %v427
        %v461 = vrot.slane %v459, 2
        %v462 = vsel %vm437, %v421, %v427
        %v464 = vrot.slane %v462, 3
        %vm465 = vsmask.f32 256
        %vm466 = vsmask.f32 1284
        %vm467 = vmor %vm465, %vm466
        %vm468 = vsmask.f32 2312
        %vm469 = vmor %vm467, %vm468
        %vm470 = vsmask.f32 3340
        %vm471 = vmor %vm469, %vm470
        %vm472 = vsmask.f32 4368
        %vm473 = vmor %vm471, %vm472
        %vm474 = vsmask.f32 5396
        %vm475 = vmor %vm473, %vm474
        %vm476 = vsmask.f32 6424
        %vm477 = vmor %vm475, %vm476
        %vm478 = vsmask.f32 7452
        %vm479 = vmor %vm477, %vm478
        %v480 = vshrl.u32 %v430, 16
        %v482 = vrot.slane %v480, 7
        %v483 = vrot.slane %v482, 1
        %v485 = vshll.u32 %v433, 16
        %v487 = vsel %vm479, %v483, %v485
        %v488 = vshrl.u32 %v433, 16
        %v490 = vrot.slane %v488, 7
        %v491 = vrot.slane %v490, 1
        %v493 = vshll.u32 %v436, 16
        %v495 = vsel %vm479, %v491, %v493
        %v496 = vshrl.u32 %v436, 16
        %v498 = vrot.slane %v496, 7
        %v499 = vrot.slane %v498, 1
        %v501 = vshll.u32 %v440, 16
        %v503 = vsel %vm479, %v499, %v501
        %v504 = vshrl.u32 %v443, 16
        %v506 = vrot.slane %v504, 7
        %v507 = vrot.slane %v506, 1
        %v509 = vshll.u32 %v446, 16
        %v511 = vsel %vm479, %v507, %v509
        %v512 = vshrl.u32 %v446, 16
        %v514 = vrot.slane %v512, 7
        %v515 = vrot.slane %v514, 1
        %v517 = vshll.u32 %v449, 16
        %v519 = vsel %vm479, %v515, %v517
        %v520 = vshrl.u32 %v449, 16
        %v522 = vrot.slane %v520, 7
        %v523 = vrot.slane %v522, 1
        %v525 = vshll.u32 %v452, 16
        %v527 = vsel %vm479, %v523, %v525
        %v528 = vshrl.u32 %v455, 16
        %v530 = vrot.slane %v528, 7
        %v531 = vrot.slane %v530, 1
        %v533 = vshll.u32 %v458, 16
        %v535 = vsel %vm479, %v531, %v533
        %v536 = vshrl.u32 %v458, 16
        %v538 = vrot.slane %v536, 7
        %v539 = vrot.slane %v538, 1
        %v541 = vshll.u32 %v461, 16
        %v543 = vsel %vm479, %v539, %v541
        %v544 = vshrl.u32 %v461, 16
        %v546 = vrot.slane %v544, 7
        %v547 = vrot.slane %v546, 1
        %v549 = vshll.u32 %v464, 16
        %v551 = vsel %vm479, %v547, %v549
        %s552 = scalar_lea.vmem [#allocation4], 384
        %v553 = vld [vmem:[%s552] sm:$0xff]
        %v554 = vld [vmem:[%s552 + $0x8] sm:$0xf]
        %v555 = vld [vmem:[%s552 + $0xc] sm:$0xff]
        %v556 = vld [vmem:[%s552 + $0x14] sm:$0xf]
        %v557 = vld [vmem:[%s552 + $0x18] sm:$0xff]
        %v558 = vld [vmem:[%s552 + $0x20] sm:$0xf]
        %v559 = vld [vmem:[%s552 + $0x24] sm:$0xff]
        %v560 = vld [vmem:[%s552 + $0x2c] sm:$0xf]
        %v561 = vld [vmem:[%s552 + $0x30] sm:$0xff]
        %v562 = vld [vmem:[%s552 + $0x38] sm:$0xf]
        %v563 = vld [vmem:[%s552 + $0x3c] sm:$0xff]
        %v564 = vld [vmem:[%s552 + $0x44] sm:$0xf]
        %v565 = vld [vmem:[%s552 + $0x48] sm:$0xff]
        %v566 = vld [vmem:[%s552 + $0x50] sm:$0xf]
        %v567 = vld [vmem:[%s552 + $0x54] sm:$0xff]
        %v568 = vld [vmem:[%s552 + $0x5c] sm:$0xf]
        %v569 = vld [vmem:[%s552 + $0x60] sm:$0xff]
        %v570 = vld [vmem:[%s552 + $0x68] sm:$0xf]
        %v571 = vld [vmem:[%s552 + $0x6c] sm:$0xff]
        %v572 = vld [vmem:[%s552 + $0x74] sm:$0xf]
        %v573 = vld [vmem:[%s552 + $0x78] sm:$0xff]
        %v574 = vld [vmem:[%s552 + $0x80] sm:$0xf]
        %v575 = vld [vmem:[%s552 + $0x84] sm:$0xff]
        %v576 = vld [vmem:[%s552 + $0x8c] sm:$0xf]
        %v577 = vld [vmem:[%s552 + $0x90] sm:$0xff]
        %v578 = vld [vmem:[%s552 + $0x98] sm:$0xf]
        %v579 = vld [vmem:[%s552 + $0x9c] sm:$0xff]
        %v580 = vld [vmem:[%s552 + $0xa4] sm:$0xf]
        %v581 = vld [vmem:[%s552 + $0xa8] sm:$0xff]
        %v582 = vld [vmem:[%s552 + $0xb0] sm:$0xf]
        %v583 = vld [vmem:[%s552 + $0xb4] sm:$0xff]
        %v584 = vld [vmem:[%s552 + $0xbc] sm:$0xf]
        %v585 = vld [vmem:[%s552 + $0xc0] sm:$0xff]
        %v586 = vld [vmem:[%s552 + $0xc8] sm:$0xf]
        %v587 = vld [vmem:[%s552 + $0xcc] sm:$0xff]
        %v588 = vld [vmem:[%s552 + $0xd4] sm:$0xf]
        %v589 = vld [vmem:[%s552 + $0xd8] sm:$0xff]
        %v590 = vld [vmem:[%s552 + $0xe0] sm:$0xf]
        %v591 = vld [vmem:[%s552 + $0xe4] sm:$0xff]
        %v592 = vld [vmem:[%s552 + $0xec] sm:$0xf]
        %v593 = vld [vmem:[%s552 + $0xf0] sm:$0xff]
        %v594 = vld [vmem:[%s552 + $0xf8] sm:$0xf]
        %v595 = vld [vmem:[%s552 + $0xfc] sm:$0xff]
        %v596 = vld [vmem:[%s552 + $0x104] sm:$0xf]
        %v597 = vld [vmem:[%s552 + $0x108] sm:$0xff]
        %v598 = vld [vmem:[%s552 + $0x110] sm:$0xf]
        %v599 = vld [vmem:[%s552 + $0x114] sm:$0xff]
        %v600 = vld [vmem:[%s552 + $0x11c] sm:$0xf]
        %v601 = vld [vmem:[%s552 + $0x120] sm:$0xff]
        %v602 = vld [vmem:[%s552 + $0x128] sm:$0xf]
        %v603 = vld [vmem:[%s552 + $0x12c] sm:$0xff]
        %v604 = vld [vmem:[%s552 + $0x134] sm:$0xf]
        %v605 = vld [vmem:[%s552 + $0x138] sm:$0xff]
        %v606 = vld [vmem:[%s552 + $0x140] sm:$0xf]
        %v607 = vld [vmem:[%s552 + $0x144] sm:$0xff]
        %v608 = vld [vmem:[%s552 + $0x14c] sm:$0xf]
        %v609 = vld [vmem:[%s552 + $0x150] sm:$0xff]
        %v610 = vld [vmem:[%s552 + $0x158] sm:$0xf]
        %v611 = vld [vmem:[%s552 + $0x15c] sm:$0xff]
        %v612 = vld [vmem:[%s552 + $0x164] sm:$0xf]
        %v613 = vld [vmem:[%s552 + $0x168] sm:$0xff]
        %v614 = vld [vmem:[%s552 + $0x170] sm:$0xf]
        %v615 = vld [vmem:[%s552 + $0x174] sm:$0xff]
        %v616 = vld [vmem:[%s552 + $0x17c] sm:$0xf]
        %618 = vst [vmem:[#allocation1] ss:$9 sm:$0xff] %v487
        %s620 = scalar_lea.vmem [#allocation1], 1
        %621 = vst [vmem:[%s620] ss:$9 sm:$0xff] %v495
        %s623 = scalar_lea.vmem [#allocation1], 2
        %624 = vst [vmem:[%s623] ss:$9 sm:$0xff] %v503
        %s626 = scalar_lea.vmem [#allocation1], 3
        %627 = vst [vmem:[%s626] ss:$9 sm:$0xff] %v511
        %s629 = scalar_lea.vmem [#allocation1], 4
        %630 = vst [vmem:[%s629] ss:$9 sm:$0xff] %v519
        %s632 = scalar_lea.vmem [#allocation1], 5
        %633 = vst [vmem:[%s632] ss:$9 sm:$0xff] %v527
        %s635 = scalar_lea.vmem [#allocation1], 6
        %636 = vst [vmem:[%s635] ss:$9 sm:$0xff] %v535
        %s638 = scalar_lea.vmem [#allocation1], 7
        %639 = vst [vmem:[%s638] ss:$9 sm:$0xff] %v543
        %v640 = vld [vmem:[#allocation1] sm:$0xff]
        %v641 = vld [vmem:[#allocation1 + $0x9] sm:$0xff]
        %643 = vst [vmem:[#allocation1] ss:$9 sm:$0xff] %v551
        %v644 = vld [vmem:[#allocation1] sm:$0xff]
        %v645 = vld [vmem:[#allocation1 + $0x9] sm:$0xff]
        %v714 = vunpack.c.l.b16 %v553
        %v715 = vunpack.c.h.b16 %v553
        %v716 = vunpack.c.l.b16 %v554
        %v717 = vunpack.c.l.b16 %v555
        %v718 = vunpack.c.h.b16 %v555
        %v719 = vunpack.c.l.b16 %v556
        %v720 = vunpack.c.l.b16 %v557
        %v721 = vunpack.c.h.b16 %v557
        %v722 = vunpack.c.l.b16 %v558
        %v723 = vunpack.c.l.b16 %v559
        %v724 = vunpack.c.h.b16 %v559
        %v725 = vunpack.c.l.b16 %v560
        %v726 = vunpack.c.l.b16 %v561
        %v727 = vunpack.c.h.b16 %v561
        %v728 = vunpack.c.l.b16 %v562
        %v729 = vunpack.c.l.b16 %v563
        %v730 = vunpack.c.h.b16 %v563
        %v731 = vunpack.c.l.b16 %v564
        %v732 = vunpack.c.l.b16 %v565
        %v733 = vunpack.c.h.b16 %v565
        %v734 = vunpack.c.l.b16 %v566
        %v735 = vunpack.c.l.b16 %v567
        %v736 = vunpack.c.h.b16 %v567
        %v737 = vunpack.c.l.b16 %v568
        %v738 = vunpack.c.l.b16 %v569
        %v739 = vunpack.c.h.b16 %v569
        %v740 = vunpack.c.l.b16 %v570
        %v741 = vunpack.c.l.b16 %v571
        %v742 = vunpack.c.h.b16 %v571
        %v743 = vunpack.c.l.b16 %v572
        %v744 = vunpack.c.l.b16 %v573
        %v745 = vunpack.c.h.b16 %v573
        %v746 = vunpack.c.l.b16 %v574
        %v747 = vunpack.c.l.b16 %v575
        %v748 = vunpack.c.h.b16 %v575
        %v749 = vunpack.c.l.b16 %v576
        %v750 = vunpack.c.l.b16 %v577
        %v751 = vunpack.c.h.b16 %v577
        %v752 = vunpack.c.l.b16 %v578
        %v753 = vunpack.c.l.b16 %v579
        %v754 = vunpack.c.h.b16 %v579
        %v755 = vunpack.c.l.b16 %v580
        %v756 = vunpack.c.l.b16 %v581
        %v757 = vunpack.c.h.b16 %v581
        %v758 = vunpack.c.l.b16 %v582
        %v759 = vunpack.c.l.b16 %v583
        %v760 = vunpack.c.h.b16 %v583
        %v761 = vunpack.c.l.b16 %v584
        %v762 = vunpack.c.l.b16 %v585
        %v763 = vunpack.c.h.b16 %v585
        %v764 = vunpack.c.l.b16 %v586
        %v765 = vunpack.c.l.b16 %v587
        %v766 = vunpack.c.h.b16 %v587
        %v767 = vunpack.c.l.b16 %v588
        %v768 = vunpack.c.l.b16 %v589
        %v769 = vunpack.c.h.b16 %v589
        %v770 = vunpack.c.l.b16 %v590
        %v771 = vunpack.c.l.b16 %v591
        %v772 = vunpack.c.h.b16 %v591
        %v773 = vunpack.c.l.b16 %v592
        %v774 = vunpack.c.l.b16 %v593
        %v775 = vunpack.c.h.b16 %v593
        %v776 = vunpack.c.l.b16 %v594
        %v777 = vunpack.c.l.b16 %v595
        %v778 = vunpack.c.h.b16 %v595
        %v779 = vunpack.c.l.b16 %v596
        %v780 = vunpack.c.l.b16 %v597
        %v781 = vunpack.c.h.b16 %v597
        %v782 = vunpack.c.l.b16 %v598
        %v783 = vunpack.c.l.b16 %v599
        %v784 = vunpack.c.h.b16 %v599
        %v785 = vunpack.c.l.b16 %v600
        %v786 = vunpack.c.l.b16 %v601
        %v787 = vunpack.c.h.b16 %v601
        %v788 = vunpack.c.l.b16 %v602
        %v789 = vunpack.c.l.b16 %v603
        %v790 = vunpack.c.h.b16 %v603
        %v791 = vunpack.c.l.b16 %v604
        %v792 = vunpack.c.l.b16 %v605
        %v793 = vunpack.c.h.b16 %v605
        %v794 = vunpack.c.l.b16 %v606
        %v795 = vunpack.c.l.b16 %v607
        %v796 = vunpack.c.h.b16 %v607
        %v797 = vunpack.c.l.b16 %v608
        %v798 = vunpack.c.l.b16 %v609
        %v799 = vunpack.c.h.b16 %v609
        %v800 = vunpack.c.l.b16 %v610
        %v801 = vunpack.c.l.b16 %v611
        %v802 = vunpack.c.h.b16 %v611
        %v803 = vunpack.c.l.b16 %v612
        %v804 = vunpack.c.l.b16 %v613
        %v805 = vunpack.c.h.b16 %v613
        %v806 = vunpack.c.l.b16 %v614
        %v807 = vunpack.c.l.b16 %v615
        %v808 = vunpack.c.h.b16 %v615
        %v809 = vunpack.c.l.b16 %v616
        %v810 = vpack.c.b16 %v717, %v714
        %v811 = vpack.c.b16 %v718, %v715
        %v812 = vpack.c.b16 %v719, %v716
        %v813 = vpack.c.b16 %v723, %v720
        %v814 = vpack.c.b16 %v724, %v721
        %v815 = vpack.c.b16 %v725, %v722
        %v816 = vpack.c.b16 %v729, %v726
        %v817 = vpack.c.b16 %v730, %v727
        %v818 = vpack.c.b16 %v731, %v728
        %v819 = vpack.c.b16 %v735, %v732
        %v820 = vpack.c.b16 %v736, %v733
        %v821 = vpack.c.b16 %v737, %v734
        %v822 = vpack.c.b16 %v741, %v738
        %v823 = vpack.c.b16 %v742, %v739
        %v824 = vpack.c.b16 %v743, %v740
        %v825 = vpack.c.b16 %v747, %v744
        %v826 = vpack.c.b16 %v748, %v745
        %v827 = vpack.c.b16 %v749, %v746
        %v828 = vpack.c.b16 %v753, %v750
        %v829 = vpack.c.b16 %v754, %v751
        %v830 = vpack.c.b16 %v755, %v752
        %v831 = vpack.c.b16 %v759, %v756
        %v832 = vpack.c.b16 %v760, %v757
        %v833 = vpack.c.b16 %v761, %v758
        %v834 = vpack.c.b16 %v765, %v762
        %v835 = vpack.c.b16 %v766, %v763
        %v836 = vpack.c.b16 %v767, %v764
        %v837 = vpack.c.b16 %v771, %v768
        %v838 = vpack.c.b16 %v772, %v769
        %v839 = vpack.c.b16 %v773, %v770
        %v840 = vpack.c.b16 %v777, %v774
        %v841 = vpack.c.b16 %v778, %v775
        %v842 = vpack.c.b16 %v779, %v776
        %v843 = vpack.c.b16 %v783, %v780
        %v844 = vpack.c.b16 %v784, %v781
        %v845 = vpack.c.b16 %v785, %v782
        %v846 = vpack.c.b16 %v789, %v786
        %v847 = vpack.c.b16 %v790, %v787
        %v848 = vpack.c.b16 %v791, %v788
        %v849 = vpack.c.b16 %v795, %v792
        %v850 = vpack.c.b16 %v796, %v793
        %v851 = vpack.c.b16 %v797, %v794
        %v852 = vpack.c.b16 %v801, %v798
        %v853 = vpack.c.b16 %v802, %v799
        %v854 = vpack.c.b16 %v803, %v800
        %v855 = vpack.c.b16 %v807, %v804
        %v856 = vpack.c.b16 %v808, %v805
        %v857 = vpack.c.b16 %v809, %v806
        %906 = vmatpush.bf16.msra.mxu0 %v831
        %907 = vmatpush.bf16.msra.mxu0 %v828
        %908 = vmatpush.bf16.msra.mxu0 %v825
        %909 = vmatpush.bf16.msra.mxu0 %v822
        %910 = vmatpush.bf16.msra.mxu0 %v819
        %911 = vmatpush.bf16.msra.mxu0 %v816
        %912 = vmatpush.bf16.msra.mxu0 %v813
        %913 = vmatpush.bf16.msra.mxu0 %v810
        %914 = vmatmul.bf16.gmra.mxu0 %v640
        %v915 = vpop.f32.mrf.mxu0
        %v916 = vadd.f32 0.0, %v915
        %v917 = vpop.f32.mrf.mxu0
        %v918 = vadd.f32 0.0, %v917
        %919 = vmatmul.bf16.gmra.mxu0 %v644
        %v920 = vpop.f32.mrf.mxu0
        %v921 = vadd.f32 0.0, %v920
        %v922 = vpop.f32.mrf.mxu0
        %923 = vdwg.mxu0
        %924 = vmatpush.bf16.msra.mxu0 %v855
        %925 = vmatpush.bf16.msra.mxu0 %v852
        %926 = vmatpush.bf16.msra.mxu0 %v849
        %927 = vmatpush.bf16.msra.mxu0 %v846
        %928 = vmatpush.bf16.msra.mxu0 %v843
        %929 = vmatpush.bf16.msra.mxu0 %v840
        %930 = vmatpush.bf16.msra.mxu0 %v837
        %931 = vmatpush.bf16.msra.mxu0 %v834
        %932 = vmatmul.bf16.gmra.mxu0 %v641
        %v933 = vpop.f32.mrf.mxu0
        %v934 = vadd.f32 %v916, %v933
        %v935 = vpop.f32.mrf.mxu0
        %v936 = vadd.f32 %v918, %v935
        %937 = vmatmul.bf16.gmra.mxu0 %v645
        %v938 = vpop.f32.mrf.mxu0
        %v939 = vadd.f32 %v921, %v938
        %v940 = vpop.f32.mrf.mxu0
        %941 = vdwg.mxu0
        %942 = vmatpush.bf16.msra.mxu0 %v832
        %943 = vmatpush.bf16.msra.mxu0 %v829
        %944 = vmatpush.bf16.msra.mxu0 %v826
        %945 = vmatpush.bf16.msra.mxu0 %v823
        %946 = vmatpush.bf16.msra.mxu0 %v820
        %947 = vmatpush.bf16.msra.mxu0 %v817
        %948 = vmatpush.bf16.msra.mxu0 %v814
        %949 = vmatpush.bf16.msra.mxu0 %v811
        %950 = vmatmul.bf16.gmra.mxu0 %v640
        %v951 = vpop.f32.mrf.mxu0
        %v952 = vadd.f32 0.0, %v951
        %v953 = vpop.f32.mrf.mxu0
        %v954 = vadd.f32 0.0, %v953
        %955 = vmatmul.bf16.gmra.mxu0 %v644
        %v956 = vpop.f32.mrf.mxu0
        %v957 = vadd.f32 0.0, %v956
        %v958 = vpop.f32.mrf.mxu0
        %959 = vdwg.mxu0
        %960 = vmatpush.bf16.msra.mxu0 %v856
        %961 = vmatpush.bf16.msra.mxu0 %v853
        %962 = vmatpush.bf16.msra.mxu0 %v850
        %963 = vmatpush.bf16.msra.mxu0 %v847
        %964 = vmatpush.bf16.msra.mxu0 %v844
        %965 = vmatpush.bf16.msra.mxu0 %v841
        %966 = vmatpush.bf16.msra.mxu0 %v838
        %967 = vmatpush.bf16.msra.mxu0 %v835
        %968 = vmatmul.bf16.gmra.mxu0 %v641
        %v969 = vpop.f32.mrf.mxu0
        %v970 = vadd.f32 %v952, %v969
        %v971 = vpop.f32.mrf.mxu0
        %v972 = vadd.f32 %v954, %v971
        %973 = vmatmul.bf16.gmra.mxu0 %v645
        %v974 = vpop.f32.mrf.mxu0
        %v975 = vadd.f32 %v957, %v974
        %v976 = vpop.f32.mrf.mxu0
        %977 = vdwg.mxu0
        %978 = vmatpush.bf16.msra.mxu0 %v833
        %979 = vmatpush.bf16.msra.mxu0 %v830
        %980 = vmatpush.bf16.msra.mxu0 %v827
        %981 = vmatpush.bf16.msra.mxu0 %v824
        %982 = vmatpush.bf16.msra.mxu0 %v821
        %983 = vmatpush.bf16.msra.mxu0 %v818
        %984 = vmatpush.bf16.msra.mxu0 %v815
        %985 = vmatpush.bf16.msra.mxu0 %v812
        %986 = vmatmul.bf16.gmra.mxu0 %v640
        %v987 = vpop.f32.mrf.mxu0
        %v988 = vadd.f32 0.0, %v987
        %v989 = vpop.f32.mrf.mxu0
        %v990 = vadd.f32 0.0, %v989
        %991 = vmatmul.bf16.gmra.mxu0 %v644
        %v992 = vpop.f32.mrf.mxu0
        %v993 = vadd.f32 0.0, %v992
        %v994 = vpop.f32.mrf.mxu0
        %995 = vdwg.mxu0
        %996 = vmatpush.bf16.msra.mxu0 %v857
        %997 = vmatpush.bf16.msra.mxu0 %v854
        %998 = vmatpush.bf16.msra.mxu0 %v851
        %999 = vmatpush.bf16.msra.mxu0 %v848
        %1000 = vmatpush.bf16.msra.mxu0 %v845
        %1001 = vmatpush.bf16.msra.mxu0 %v842
        %1002 = vmatpush.bf16.msra.mxu0 %v839
        %1003 = vmatpush.bf16.msra.mxu0 %v836
        %1004 = vmatmul.bf16.gmra.mxu0 %v641
        %v1005 = vpop.f32.mrf.mxu0
        %v1006 = vadd.f32 %v988, %v1005
        %v1007 = vpop.f32.mrf.mxu0
        %v1008 = vadd.f32 %v990, %v1007
        %1009 = vmatmul.bf16.gmra.mxu0 %v645
        %v1010 = vpop.f32.mrf.mxu0
        %v1011 = vadd.f32 %v993, %v1010
        %v1012 = vpop.f32.mrf.mxu0
        %1013 = vdwg.mxu0
        %1014 = vst [vmem:[#allocation1] ss:$9 sm:$0xff] %v328
        %s1016 = scalar_lea.vmem [#allocation1], 1
        %1017 = vst [vmem:[%s1016] ss:$9 sm:$0xff] %v332
        %s1019 = scalar_lea.vmem [#allocation1], 2
        %1020 = vst [vmem:[%s1019] ss:$9 sm:$0xff] %v336
        %s1021 = scalar_lea.vmem [#allocation1], 3
        %1022 = vst [vmem:[%s1021] ss:$9 sm:$0xff] %v339
        %s1024 = scalar_lea.vmem [#allocation1], 4
        %1025 = vst [vmem:[%s1024] ss:$9 sm:$0xff] %v342
        %s1027 = scalar_lea.vmem [#allocation1], 5
        %1028 = vst [vmem:[%s1027] ss:$9 sm:$0xff] %v345
        %s1029 = scalar_lea.vmem [#allocation1], 6
        %1030 = vst [vmem:[%s1029] ss:$9 sm:$0xff] %v348
        %s1032 = scalar_lea.vmem [#allocation1], 7
        %1033 = vst [vmem:[%s1032] ss:$9 sm:$0xff] %v351
        %v1034 = vld [vmem:[#allocation1] sm:$0xff]
        %v1035 = vld [vmem:[#allocation1 + $0x9] sm:$0xff]
        %1037 = vst [vmem:[#allocation1] ss:$9 sm:$0xff] %v354
        %v1038 = vld [vmem:[#allocation1] sm:$0xff]
        %v1039 = vld [vmem:[#allocation1 + $0x9] sm:$0xff]
        %v1108 = vunpack.c.l.b16 %v355
        %v1109 = vunpack.c.h.b16 %v355
        %v1110 = vunpack.c.l.b16 %v356
        %v1111 = vunpack.c.l.b16 %v357
        %v1112 = vunpack.c.h.b16 %v357
        %v1113 = vunpack.c.l.b16 %v358
        %v1114 = vunpack.c.l.b16 %v359
        %v1115 = vunpack.c.h.b16 %v359
        %v1116 = vunpack.c.l.b16 %v360
        %v1117 = vunpack.c.l.b16 %v361
        %v1118 = vunpack.c.h.b16 %v361
        %v1119 = vunpack.c.l.b16 %v362
        %v1120 = vunpack.c.l.b16 %v363
        %v1121 = vunpack.c.h.b16 %v363
        %v1122 = vunpack.c.l.b16 %v364
        %v1123 = vunpack.c.l.b16 %v365
        %v1124 = vunpack.c.h.b16 %v365
        %v1125 = vunpack.c.l.b16 %v366
        %v1126 = vunpack.c.l.b16 %v367
        %v1127 = vunpack.c.h.b16 %v367
        %v1128 = vunpack.c.l.b16 %v368
        %v1129 = vunpack.c.l.b16 %v369
        %v1130 = vunpack.c.h.b16 %v369
        %v1131 = vunpack.c.l.b16 %v370
        %v1132 = vunpack.c.l.b16 %v371
        %v1133 = vunpack.c.h.b16 %v371
        %v1134 = vunpack.c.l.b16 %v372
        %v1135 = vunpack.c.l.b16 %v373
        %v1136 = vunpack.c.h.b16 %v373
        %v1137 = vunpack.c.l.b16 %v374
        %v1138 = vunpack.c.l.b16 %v375
        %v1139 = vunpack.c.h.b16 %v375
        %v1140 = vunpack.c.l.b16 %v376
        %v1141 = vunpack.c.l.b16 %v377
        %v1142 = vunpack.c.h.b16 %v377
        %v1143 = vunpack.c.l.b16 %v378
        %v1144 = vunpack.c.l.b16 %v379
        %v1145 = vunpack.c.h.b16 %v379
        %v1146 = vunpack.c.l.b16 %v380
        %v1147 = vunpack.c.l.b16 %v381
        %v1148 = vunpack.c.h.b16 %v381
        %v1149 = vunpack.c.l.b16 %v382
        %v1150 = vunpack.c.l.b16 %v383
        %v1151 = vunpack.c.h.b16 %v383
        %v1152 = vunpack.c.l.b16 %v384
        %v1153 = vunpack.c.l.b16 %v385
        %v1154 = vunpack.c.h.b16 %v385
        %v1155 = vunpack.c.l.b16 %v386
        %v1156 = vunpack.c.l.b16 %v387
        %v1157 = vunpack.c.h.b16 %v387
        %v1158 = vunpack.c.l.b16 %v388
        %v1159 = vunpack.c.l.b16 %v389
        %v1160 = vunpack.c.h.b16 %v389
        %v1161 = vunpack.c.l.b16 %v390
        %v1162 = vunpack.c.l.b16 %v391
        %v1163 = vunpack.c.h.b16 %v391
        %v1164 = vunpack.c.l.b16 %v392
        %v1165 = vunpack.c.l.b16 %v393
        %v1166 = vunpack.c.h.b16 %v393
        %v1167 = vunpack.c.l.b16 %v394
        %v1168 = vunpack.c.l.b16 %v395
        %v1169 = vunpack.c.h.b16 %v395
        %v1170 = vunpack.c.l.b16 %v396
        %v1171 = vunpack.c.l.b16 %v397
        %v1172 = vunpack.c.h.b16 %v397
        %v1173 = vunpack.c.l.b16 %v398
        %v1174 = vunpack.c.l.b16 %v399
        %v1175 = vunpack.c.h.b16 %v399
        %v1176 = vunpack.c.l.b16 %v400
        %v1177 = vunpack.c.l.b16 %v401
        %v1178 = vunpack.c.h.b16 %v401
        %v1179 = vunpack.c.l.b16 %v402
        %v1180 = vunpack.c.l.b16 %v403
        %v1181 = vunpack.c.h.b16 %v403
        %v1182 = vunpack.c.l.b16 %v404
        %v1183 = vunpack.c.l.b16 %v405
        %v1184 = vunpack.c.h.b16 %v405
        %v1185 = vunpack.c.l.b16 %v406
        %v1186 = vunpack.c.l.b16 %v407
        %v1187 = vunpack.c.h.b16 %v407
        %v1188 = vunpack.c.l.b16 %v408
        %v1189 = vunpack.c.l.b16 %v409
        %v1190 = vunpack.c.h.b16 %v409
        %v1191 = vunpack.c.l.b16 %v410
        %v1192 = vunpack.c.l.b16 %v411
        %v1193 = vunpack.c.h.b16 %v411
        %v1194 = vunpack.c.l.b16 %v412
        %v1195 = vunpack.c.l.b16 %v413
        %v1196 = vunpack.c.h.b16 %v413
        %v1197 = vunpack.c.l.b16 %v414
        %v1198 = vunpack.c.l.b16 %v415
        %v1199 = vunpack.c.h.b16 %v415
        %v1200 = vunpack.c.l.b16 %v416
        %v1201 = vunpack.c.l.b16 %v417
        %v1202 = vunpack.c.h.b16 %v417
        %v1203 = vunpack.c.l.b16 %v418
        %v1204 = vpack.c.b16 %v1111, %v1108
        %v1205 = vpack.c.b16 %v1112, %v1109
        %v1206 = vpack.c.b16 %v1113, %v1110
        %v1207 = vpack.c.b16 %v1117, %v1114
        %v1208 = vpack.c.b16 %v1118, %v1115
        %v1209 = vpack.c.b16 %v1119, %v1116
        %v1210 = vpack.c.b16 %v1123, %v1120
        %v1211 = vpack.c.b16 %v1124, %v1121
        %v1212 = vpack.c.b16 %v1125, %v1122
        %v1213 = vpack.c.b16 %v1129, %v1126
        %v1214 = vpack.c.b16 %v1130, %v1127
        %v1215 = vpack.c.b16 %v1131, %v1128
        %v1216 = vpack.c.b16 %v1135, %v1132
        %v1217 = vpack.c.b16 %v1136, %v1133
        %v1218 = vpack.c.b16 %v1137, %v1134
        %v1219 = vpack.c.b16 %v1141, %v1138
        %v1220 = vpack.c.b16 %v1142, %v1139
        %v1221 = vpack.c.b16 %v1143, %v1140
        %v1222 = vpack.c.b16 %v1147, %v1144
        %v1223 = vpack.c.b16 %v1148, %v1145
        %v1224 = vpack.c.b16 %v1149, %v1146
        %v1225 = vpack.c.b16 %v1153, %v1150
        %v1226 = vpack.c.b16 %v1154, %v1151
        %v1227 = vpack.c.b16 %v1155, %v1152
        %v1228 = vpack.c.b16 %v1159, %v1156
        %v1229 = vpack.c.b16 %v1160, %v1157
        %v1230 = vpack.c.b16 %v1161, %v1158
        %v1231 = vpack.c.b16 %v1165, %v1162
        %v1232 = vpack.c.b16 %v1166, %v1163
        %v1233 = vpack.c.b16 %v1167, %v1164
        %v1234 = vpack.c.b16 %v1171, %v1168
        %v1235 = vpack.c.b16 %v1172, %v1169
        %v1236 = vpack.c.b16 %v1173, %v1170
        %v1237 = vpack.c.b16 %v1177, %v1174
        %v1238 = vpack.c.b16 %v1178, %v1175
        %v1239 = vpack.c.b16 %v1179, %v1176
        %v1240 = vpack.c.b16 %v1183, %v1180
        %v1241 = vpack.c.b16 %v1184, %v1181
        %v1242 = vpack.c.b16 %v1185, %v1182
        %v1243 = vpack.c.b16 %v1189, %v1186
        %v1244 = vpack.c.b16 %v1190, %v1187
        %v1245 = vpack.c.b16 %v1191, %v1188
        %v1246 = vpack.c.b16 %v1195, %v1192
        %v1247 = vpack.c.b16 %v1196, %v1193
        %v1248 = vpack.c.b16 %v1197, %v1194
        %v1249 = vpack.c.b16 %v1201, %v1198
        %v1250 = vpack.c.b16 %v1202, %v1199
        %v1251 = vpack.c.b16 %v1203, %v1200
        %1300 = vmatpush.bf16.msra.mxu0 %v1225
        %1301 = vmatpush.bf16.msra.mxu0 %v1222
        %1302 = vmatpush.bf16.msra.mxu0 %v1219
        %1303 = vmatpush.bf16.msra.mxu0 %v1216
        %1304 = vmatpush.bf16.msra.mxu0 %v1213
        %1305 = vmatpush.bf16.msra.mxu0 %v1210
        %1306 = vmatpush.bf16.msra.mxu0 %v1207
        %1307 = vmatpush.bf16.msra.mxu0 %v1204
        %1308 = vmatmul.bf16.gmra.mxu0 %v1034
        %v1309 = vpop.f32.mrf.mxu0
        %v1310 = vadd.f32 %v934, %v1309
        %v1311 = vpop.f32.mrf.mxu0
        %v1312 = vadd.f32 %v936, %v1311
        %1313 = vmatmul.bf16.gmra.mxu0 %v1038
        %v1314 = vpop.f32.mrf.mxu0
        %v1315 = vadd.f32 %v939, %v1314
        %v1316 = vpop.f32.mrf.mxu0
        %1317 = vdwg.mxu0
        %1318 = vmatpush.bf16.msra.mxu0 %v1249
        %1319 = vmatpush.bf16.msra.mxu0 %v1246
        %1320 = vmatpush.bf16.msra.mxu0 %v1243
        %1321 = vmatpush.bf16.msra.mxu0 %v1240
        %1322 = vmatpush.bf16.msra.mxu0 %v1237
        %1323 = vmatpush.bf16.msra.mxu0 %v1234
        %1324 = vmatpush.bf16.msra.mxu0 %v1231
        %1325 = vmatpush.bf16.msra.mxu0 %v1228
        %1326 = vmatmul.bf16.gmra.mxu0 %v1035
        %v1327 = vpop.f32.mrf.mxu0
        %v1328 = vadd.f32 %v1310, %v1327
        %v1329 = vpop.f32.mrf.mxu0
        %v1330 = vadd.f32 %v1312, %v1329
        %1331 = vmatmul.bf16.gmra.mxu0 %v1039
        %v1332 = vpop.f32.mrf.mxu0
        %v1333 = vadd.f32 %v1315, %v1332
        %v1334 = vpop.f32.mrf.mxu0
        %1335 = vdwg.mxu0
        %1336 = vmatpush.bf16.msra.mxu0 %v1226
        %1337 = vmatpush.bf16.msra.mxu0 %v1223
        %1338 = vmatpush.bf16.msra.mxu0 %v1220
        %1339 = vmatpush.bf16.msra.mxu0 %v1217
        %1340 = vmatpush.bf16.msra.mxu0 %v1214
        %1341 = vmatpush.bf16.msra.mxu0 %v1211
        %1342 = vmatpush.bf16.msra.mxu0 %v1208
        %1343 = vmatpush.bf16.msra.mxu0 %v1205
        %1344 = vmatmul.bf16.gmra.mxu0 %v1034
        %v1345 = vpop.f32.mrf.mxu0
        %v1346 = vadd.f32 %v970, %v1345
        %v1347 = vpop.f32.mrf.mxu0
        %v1348 = vadd.f32 %v972, %v1347
        %1349 = vmatmul.bf16.gmra.mxu0 %v1038
        %v1350 = vpop.f32.mrf.mxu0
        %v1351 = vadd.f32 %v975, %v1350
        %v1352 = vpop.f32.mrf.mxu0
        %1353 = vdwg.mxu0
        %1354 = vmatpush.bf16.msra.mxu0 %v1250
        %1355 = vmatpush.bf16.msra.mxu0 %v1247
        %1356 = vmatpush.bf16.msra.mxu0 %v1244
        %1357 = vmatpush.bf16.msra.mxu0 %v1241
        %1358 = vmatpush.bf16.msra.mxu0 %v1238
        %1359 = vmatpush.bf16.msra.mxu0 %v1235
        %1360 = vmatpush.bf16.msra.mxu0 %v1232
        %1361 = vmatpush.bf16.msra.mxu0 %v1229
        %1362 = vmatmul.bf16.gmra.mxu0 %v1035
        %v1363 = vpop.f32.mrf.mxu0
        %v1364 = vadd.f32 %v1346, %v1363
        %v1365 = vpop.f32.mrf.mxu0
        %v1366 = vadd.f32 %v1348, %v1365
        %1367 = vmatmul.bf16.gmra.mxu0 %v1039
        %v1368 = vpop.f32.mrf.mxu0
        %v1369 = vadd.f32 %v1351, %v1368
        %v1370 = vpop.f32.mrf.mxu0
        %1371 = vdwg.mxu0
        %1372 = vmatpush.bf16.msra.mxu0 %v1227
        %1373 = vmatpush.bf16.msra.mxu0 %v1224
        %1374 = vmatpush.bf16.msra.mxu0 %v1221
        %1375 = vmatpush.bf16.msra.mxu0 %v1218
        %1376 = vmatpush.bf16.msra.mxu0 %v1215
        %1377 = vmatpush.bf16.msra.mxu0 %v1212
        %1378 = vmatpush.bf16.msra.mxu0 %v1209
        %1379 = vmatpush.bf16.msra.mxu0 %v1206
        %1380 = vmatmul.bf16.gmra.mxu0 %v1034
        %v1381 = vpop.f32.mrf.mxu0
        %v1382 = vadd.f32 %v1006, %v1381
        %v1383 = vpop.f32.mrf.mxu0
        %v1384 = vadd.f32 %v1008, %v1383
        %1385 = vmatmul.bf16.gmra.mxu0 %v1038
        %v1386 = vpop.f32.mrf.mxu0
        %v1387 = vadd.f32 %v1011, %v1386
        %v1388 = vpop.f32.mrf.mxu0
        %1389 = vdwg.mxu0
        %1390 = vmatpush.bf16.msra.mxu0 %v1251
        %1391 = vmatpush.bf16.msra.mxu0 %v1248
        %1392 = vmatpush.bf16.msra.mxu0 %v1245
        %1393 = vmatpush.bf16.msra.mxu0 %v1242
        %1394 = vmatpush.bf16.msra.mxu0 %v1239
        %1395 = vmatpush.bf16.msra.mxu0 %v1236
        %1396 = vmatpush.bf16.msra.mxu0 %v1233
        %1397 = vmatpush.bf16.msra.mxu0 %v1230
        %1398 = vmatmul.bf16.gmra.mxu0 %v1035
        %v1399 = vpop.f32.mrf.mxu0
        %v1400 = vadd.f32 %v1382, %v1399
        %v1401 = vpop.f32.mrf.mxu0
        %v1402 = vadd.f32 %v1384, %v1401
        %1403 = vmatmul.bf16.gmra.mxu0 %v1039
        %v1404 = vpop.f32.mrf.mxu0
        %v1405 = vadd.f32 %v1387, %v1404
        %v1406 = vpop.f32.mrf.mxu0
        %1407 = vdwg.mxu0
        %v1408 = vld [vmem:[%s315] sm:$0xee]
        %v1409 = vld [vmem:[%s315 + $0x8] sm:$0xee]
        %v1410 = vld [vmem:[%s315 + $0x10] sm:$0xee]
        %1412 = vst [vmem:[#allocation1] sm:$0xff] %v1408
        %s1413 = scalar_lea.vmem [#allocation1], 1
        %v1414 = vld [vmem:[%s1413] ss:$4 sm:$0xff]
        %s1415 = scalar_lea.vmem [#allocation1], 2
        %v1416 = vld [vmem:[%s1415] ss:$4 sm:$0xff]
        %s1417 = scalar_lea.vmem [#allocation1], 3
        %v1418 = vld [vmem:[%s1417] ss:$4 sm:$0xff]
        %1420 = vst [vmem:[#allocation1 + $0x20] sm:$0xff] %v1409
        %s1421 = scalar_lea.vmem [#allocation1], 33
        %v1422 = vld [vmem:[%s1421] ss:$4 sm:$0xff]
        %s1423 = scalar_lea.vmem [#allocation1], 34
        %v1424 = vld [vmem:[%s1423] ss:$4 sm:$0xff]
        %s1425 = scalar_lea.vmem [#allocation1], 35
        %v1426 = vld [vmem:[%s1425] ss:$4 sm:$0xff]
        %1428 = vst [vmem:[#allocation1] sm:$0xff] %v1410
        %v1429 = vld [vmem:[%s1413] ss:$4 sm:$0xff]
        %v1430 = vld [vmem:[%s1415] ss:$4 sm:$0xff]
        %v1431 = vld [vmem:[%s1417] ss:$4 sm:$0xff]
        %s1432 = scalar_lea.vmem [#allocation4], 768
        %v1433 = vld [vmem:[%s1432] sm:$0xff]
        %v1434 = vld [vmem:[%s1432 + $0x8] sm:$0xf]
        %v1435 = vld [vmem:[%s1432 + $0xc] sm:$0xff]
        %v1436 = vld [vmem:[%s1432 + $0x14] sm:$0xf]
        %v1437 = vld [vmem:[%s1432 + $0x18] sm:$0xff]
        %v1438 = vld [vmem:[%s1432 + $0x20] sm:$0xf]
        %v1439 = vld [vmem:[%s1432 + $0x24] sm:$0xff]
        %v1440 = vld [vmem:[%s1432 + $0x2c] sm:$0xf]
        %v1441 = vld [vmem:[%s1432 + $0x30] sm:$0xff]
        %v1442 = vld [vmem:[%s1432 + $0x38] sm:$0xf]
        %v1443 = vld [vmem:[%s1432 + $0x3c] sm:$0xff]
        %v1444 = vld [vmem:[%s1432 + $0x44] sm:$0xf]
        %v1445 = vld [vmem:[%s1432 + $0x48] sm:$0xff]
        %v1446 = vld [vmem:[%s1432 + $0x50] sm:$0xf]
        %v1447 = vld [vmem:[%s1432 + $0x54] sm:$0xff]
        %v1448 = vld [vmem:[%s1432 + $0x5c] sm:$0xf]
        %v1449 = vld [vmem:[%s1432 + $0x60] sm:$0xff]
        %v1450 = vld [vmem:[%s1432 + $0x68] sm:$0xf]
        %v1451 = vld [vmem:[%s1432 + $0x6c] sm:$0xff]
        %v1452 = vld [vmem:[%s1432 + $0x74] sm:$0xf]
        %v1453 = vld [vmem:[%s1432 + $0x78] sm:$0xff]
        %v1454 = vld [vmem:[%s1432 + $0x80] sm:$0xf]
        %v1455 = vld [vmem:[%s1432 + $0x84] sm:$0xff]
        %v1456 = vld [vmem:[%s1432 + $0x8c] sm:$0xf]
        %v1457 = vld [vmem:[%s1432 + $0x90] sm:$0xff]
        %v1458 = vld [vmem:[%s1432 + $0x98] sm:$0xf]
        %v1459 = vld [vmem:[%s1432 + $0x9c] sm:$0xff]
        %v1460 = vld [vmem:[%s1432 + $0xa4] sm:$0xf]
        %v1461 = vld [vmem:[%s1432 + $0xa8] sm:$0xff]
        %v1462 = vld [vmem:[%s1432 + $0xb0] sm:$0xf]
        %v1463 = vld [vmem:[%s1432 + $0xb4] sm:$0xff]
        %v1464 = vld [vmem:[%s1432 + $0xbc] sm:$0xf]
        %v1465 = vld [vmem:[%s1432 + $0xc0] sm:$0xff]
        %v1466 = vld [vmem:[%s1432 + $0xc8] sm:$0xf]
        %v1467 = vld [vmem:[%s1432 + $0xcc] sm:$0xff]
        %v1468 = vld [vmem:[%s1432 + $0xd4] sm:$0xf]
        %v1469 = vld [vmem:[%s1432 + $0xd8] sm:$0xff]
        %v1470 = vld [vmem:[%s1432 + $0xe0] sm:$0xf]
        %v1471 = vld [vmem:[%s1432 + $0xe4] sm:$0xff]
        %v1472 = vld [vmem:[%s1432 + $0xec] sm:$0xf]
        %v1473 = vld [vmem:[%s1432 + $0xf0] sm:$0xff]
        %v1474 = vld [vmem:[%s1432 + $0xf8] sm:$0xf]
        %v1475 = vld [vmem:[%s1432 + $0xfc] sm:$0xff]
        %v1476 = vld [vmem:[%s1432 + $0x104] sm:$0xf]
        %v1477 = vld [vmem:[%s1432 + $0x108] sm:$0xff]
        %v1478 = vld [vmem:[%s1432 + $0x110] sm:$0xf]
        %v1479 = vld [vmem:[%s1432 + $0x114] sm:$0xff]
        %v1480 = vld [vmem:[%s1432 + $0x11c] sm:$0xf]
        %v1481 = vld [vmem:[%s1432 + $0x120] sm:$0xff]
        %v1482 = vld [vmem:[%s1432 + $0x128] sm:$0xf]
        %v1483 = vld [vmem:[%s1432 + $0x12c] sm:$0xff]
        %v1484 = vld [vmem:[%s1432 + $0x134] sm:$0xf]
        %v1485 = vld [vmem:[%s1432 + $0x138] sm:$0xff]
        %v1486 = vld [vmem:[%s1432 + $0x140] sm:$0xf]
        %v1487 = vld [vmem:[%s1432 + $0x144] sm:$0xff]
        %v1488 = vld [vmem:[%s1432 + $0x14c] sm:$0xf]
        %v1489 = vld [vmem:[%s1432 + $0x150] sm:$0xff]
        %v1490 = vld [vmem:[%s1432 + $0x158] sm:$0xf]
        %v1491 = vld [vmem:[%s1432 + $0x15c] sm:$0xff]
        %v1492 = vld [vmem:[%s1432 + $0x164] sm:$0xf]
        %v1493 = vld [vmem:[%s1432 + $0x168] sm:$0xff]
        %v1494 = vld [vmem:[%s1432 + $0x170] sm:$0xf]
        %v1495 = vld [vmem:[%s1432 + $0x174] sm:$0xff]
        %v1496 = vld [vmem:[%s1432 + $0x17c] sm:$0xf]
        %1497 = vst [vmem:[#allocation1] ss:$9 sm:$0xff] %v1414
        %s1498 = scalar_lea.vmem [#allocation1], 1
        %1499 = vst [vmem:[%s1498] ss:$9 sm:$0xff] %v1416
        %s1500 = scalar_lea.vmem [#allocation1], 2
        %1501 = vst [vmem:[%s1500] ss:$9 sm:$0xff] %v1418
        %s1502 = scalar_lea.vmem [#allocation1], 3
        %1503 = vst [vmem:[%s1502] ss:$9 sm:$0xff] %v1422
        %s1504 = scalar_lea.vmem [#allocation1], 4
        %1505 = vst [vmem:[%s1504] ss:$9 sm:$0xff] %v1424
        %s1506 = scalar_lea.vmem [#allocation1], 5
        %1507 = vst [vmem:[%s1506] ss:$9 sm:$0xff] %v1426
        %s1508 = scalar_lea.vmem [#allocation1], 6
        %1509 = vst [vmem:[%s1508] ss:$9 sm:$0xff] %v1429
        %s1510 = scalar_lea.vmem [#allocation1], 7
        %1511 = vst [vmem:[%s1510] ss:$9 sm:$0xff] %v1430
        %v1512 = vld [vmem:[#allocation1] sm:$0xff]
        %v1513 = vld [vmem:[#allocation1 + $0x9] sm:$0xff]
        %1514 = vst [vmem:[#allocation1] ss:$9 sm:$0xff] %v1431
        %v1515 = vld [vmem:[#allocation1] sm:$0xff]
        %v1516 = vld [vmem:[#allocation1 + $0x9] sm:$0xff]
        %v1585 = vunpack.c.l.b16 %v1433
        %v1586 = vunpack.c.h.b16 %v1433
        %v1587 = vunpack.c.l.b16 %v1434
        %v1588 = vunpack.c.l.b16 %v1435
        %v1589 = vunpack.c.h.b16 %v1435
        %v1590 = vunpack.c.l.b16 %v1436
        %v1591 = vunpack.c.l.b16 %v1437
        %v1592 = vunpack.c.h.b16 %v1437
        %v1593 = vunpack.c.l.b16 %v1438
        %v1594 = vunpack.c.l.b16 %v1439
        %v1595 = vunpack.c.h.b16 %v1439
        %v1596 = vunpack.c.l.b16 %v1440
        %v1597 = vunpack.c.l.b16 %v1441
        %v1598 = vunpack.c.h.b16 %v1441
        %v1599 = vunpack.c.l.b16 %v1442
        %v1600 = vunpack.c.l.b16 %v1443
        %v1601 = vunpack.c.h.b16 %v1443
        %v1602 = vunpack.c.l.b16 %v1444
        %v1603 = vunpack.c.l.b16 %v1445
        %v1604 = vunpack.c.h.b16 %v1445
        %v1605 = vunpack.c.l.b16 %v1446
        %v1606 = vunpack.c.l.b16 %v1447
        %v1607 = vunpack.c.h.b16 %v1447
        %v1608 = vunpack.c.l.b16 %v1448
        %v1609 = vunpack.c.l.b16 %v1449
        %v1610 = vunpack.c.h.b16 %v1449
        %v1611 = vunpack.c.l.b16 %v1450
        %v1612 = vunpack.c.l.b16 %v1451
        %v1613 = vunpack.c.h.b16 %v1451
        %v1614 = vunpack.c.l.b16 %v1452
        %v1615 = vunpack.c.l.b16 %v1453
        %v1616 = vunpack.c.h.b16 %v1453
        %v1617 = vunpack.c.l.b16 %v1454
        %v1618 = vunpack.c.l.b16 %v1455
        %v1619 = vunpack.c.h.b16 %v1455
        %v1620 = vunpack.c.l.b16 %v1456
        %v1621 = vunpack.c.l.b16 %v1457
        %v1622 = vunpack.c.h.b16 %v1457
        %v1623 = vunpack.c.l.b16 %v1458
        %v1624 = vunpack.c.l.b16 %v1459
        %v1625 = vunpack.c.h.b16 %v1459
        %v1626 = vunpack.c.l.b16 %v1460
        %v1627 = vunpack.c.l.b16 %v1461
        %v1628 = vunpack.c.h.b16 %v1461
        %v1629 = vunpack.c.l.b16 %v1462
        %v1630 = vunpack.c.l.b16 %v1463
        %v1631 = vunpack.c.h.b16 %v1463
        %v1632 = vunpack.c.l.b16 %v1464
        %v1633 = vunpack.c.l.b16 %v1465
        %v1634 = vunpack.c.h.b16 %v1465
        %v1635 = vunpack.c.l.b16 %v1466
        %v1636 = vunpack.c.l.b16 %v1467
        %v1637 = vunpack.c.h.b16 %v1467
        %v1638 = vunpack.c.l.b16 %v1468
        %v1639 = vunpack.c.l.b16 %v1469
        %v1640 = vunpack.c.h.b16 %v1469
        %v1641 = vunpack.c.l.b16 %v1470
        %v1642 = vunpack.c.l.b16 %v1471
        %v1643 = vunpack.c.h.b16 %v1471
        %v1644 = vunpack.c.l.b16 %v1472
        %v1645 = vunpack.c.l.b16 %v1473
        %v1646 = vunpack.c.h.b16 %v1473
        %v1647 = vunpack.c.l.b16 %v1474
        %v1648 = vunpack.c.l.b16 %v1475
        %v1649 = vunpack.c.h.b16 %v1475
        %v1650 = vunpack.c.l.b16 %v1476
        %v1651 = vunpack.c.l.b16 %v1477
        %v1652 = vunpack.c.h.b16 %v1477
        %v1653 = vunpack.c.l.b16 %v1478
        %v1654 = vunpack.c.l.b16 %v1479
        %v1655 = vunpack.c.h.b16 %v1479
        %v1656 = vunpack.c.l.b16 %v1480
        %v1657 = vunpack.c.l.b16 %v1481
        %v1658 = vunpack.c.h.b16 %v1481
        %v1659 = vunpack.c.l.b16 %v1482
        %v1660 = vunpack.c.l.b16 %v1483
        %v1661 = vunpack.c.h.b16 %v1483
        %v1662 = vunpack.c.l.b16 %v1484
        %v1663 = vunpack.c.l.b16 %v1485
        %v1664 = vunpack.c.h.b16 %v1485
        %v1665 = vunpack.c.l.b16 %v1486
        %v1666 = vunpack.c.l.b16 %v1487
        %v1667 = vunpack.c.h.b16 %v1487
        %v1668 = vunpack.c.l.b16 %v1488
        %v1669 = vunpack.c.l.b16 %v1489
        %v1670 = vunpack.c.h.b16 %v1489
        %v1671 = vunpack.c.l.b16 %v1490
        %v1672 = vunpack.c.l.b16 %v1491
        %v1673 = vunpack.c.h.b16 %v1491
        %v1674 = vunpack.c.l.b16 %v1492
        %v1675 = vunpack.c.l.b16 %v1493
        %v1676 = vunpack.c.h.b16 %v1493
        %v1677 = vunpack.c.l.b16 %v1494
        %v1678 = vunpack.c.l.b16 %v1495
        %v1679 = vunpack.c.h.b16 %v1495
        %v1680 = vunpack.c.l.b16 %v1496
        %v1681 = vpack.c.b16 %v1588, %v1585
        %v1682 = vpack.c.b16 %v1589, %v1586
        %v1683 = vpack.c.b16 %v1590, %v1587
        %v1684 = vpack.c.b16 %v1594, %v1591
        %v1685 = vpack.c.b16 %v1595, %v1592
        %v1686 = vpack.c.b16 %v1596, %v1593
        %v1687 = vpack.c.b16 %v1600, %v1597
        %v1688 = vpack.c.b16 %v1601, %v1598
        %v1689 = vpack.c.b16 %v1602, %v1599
        %v1690 = vpack.c.b16 %v1606, %v1603
        %v1691 = vpack.c.b16 %v1607, %v1604
        %v1692 = vpack.c.b16 %v1608, %v1605
        %v1693 = vpack.c.b16 %v1612, %v1609
        %v1694 = vpack.c.b16 %v1613, %v1610
        %v1695 = vpack.c.b16 %v1614, %v1611
        %v1696 = vpack.c.b16 %v1618, %v1615
        %v1697 = vpack.c.b16 %v1619, %v1616
        %v1698 = vpack.c.b16 %v1620, %v1617
        %v1699 = vpack.c.b16 %v1624, %v1621
        %v1700 = vpack.c.b16 %v1625, %v1622
        %v1701 = vpack.c.b16 %v1626, %v1623
        %v1702 = vpack.c.b16 %v1630, %v1627
        %v1703 = vpack.c.b16 %v1631, %v1628
        %v1704 = vpack.c.b16 %v1632, %v1629
        %v1705 = vpack.c.b16 %v1636, %v1633
        %v1706 = vpack.c.b16 %v1637, %v1634
        %v1707 = vpack.c.b16 %v1638, %v1635
        %v1708 = vpack.c.b16 %v1642, %v1639
        %v1709 = vpack.c.b16 %v1643, %v1640
        %v1710 = vpack.c.b16 %v1644, %v1641
        %v1711 = vpack.c.b16 %v1648, %v1645
        %v1712 = vpack.c.b16 %v1649, %v1646
        %v1713 = vpack.c.b16 %v1650, %v1647
        %v1714 = vpack.c.b16 %v1654, %v1651
        %v1715 = vpack.c.b16 %v1655, %v1652
        %v1716 = vpack.c.b16 %v1656, %v1653
        %v1717 = vpack.c.b16 %v1660, %v1657
        %v1718 = vpack.c.b16 %v1661, %v1658
        %v1719 = vpack.c.b16 %v1662, %v1659
        %v1720 = vpack.c.b16 %v1666, %v1663
        %v1721 = vpack.c.b16 %v1667, %v1664
        %v1722 = vpack.c.b16 %v1668, %v1665
        %v1723 = vpack.c.b16 %v1672, %v1669
        %v1724 = vpack.c.b16 %v1673, %v1670
        %v1725 = vpack.c.b16 %v1674, %v1671
        %v1726 = vpack.c.b16 %v1678, %v1675
        %v1727 = vpack.c.b16 %v1679, %v1676
        %v1728 = vpack.c.b16 %v1680, %v1677
        %1777 = vmatpush.bf16.msra.mxu0 %v1702
        %1778 = vmatpush.bf16.msra.mxu0 %v1699
        %1779 = vmatpush.bf16.msra.mxu0 %v1696
        %1780 = vmatpush.bf16.msra.mxu0 %v1693
        %1781 = vmatpush.bf16.msra.mxu0 %v1690
        %1782 = vmatpush.bf16.msra.mxu0 %v1687
        %1783 = vmatpush.bf16.msra.mxu0 %v1684
        %1784 = vmatpush.bf16.msra.mxu0 %v1681
        %1785 = vmatmul.bf16.gmra.mxu0 %v1512
        %v1786 = vpop.f32.mrf.mxu0
        %v1787 = vadd.f32 0.0, %v1786
        %v1788 = vpop.f32.mrf.mxu0
        %v1789 = vadd.f32 0.0, %v1788
        %1790 = vmatmul.bf16.gmra.mxu0 %v1515
        %v1791 = vpop.f32.mrf.mxu0
        %v1792 = vadd.f32 0.0, %v1791
        %v1793 = vpop.f32.mrf.mxu0
        %1794 = vdwg.mxu0
        %1795 = vmatpush.bf16.msra.mxu0 %v1726
        %1796 = vmatpush.bf16.msra.mxu0 %v1723
        %1797 = vmatpush.bf16.msra.mxu0 %v1720
        %1798 = vmatpush.bf16.msra.mxu0 %v1717
        %1799 = vmatpush.bf16.msra.mxu0 %v1714
        %1800 = vmatpush.bf16.msra.mxu0 %v1711
        %1801 = vmatpush.bf16.msra.mxu0 %v1708
        %1802 = vmatpush.bf16.msra.mxu0 %v1705
        %1803 = vmatmul.bf16.gmra.mxu0 %v1513
        %v1804 = vpop.f32.mrf.mxu0
        %v1805 = vadd.f32 %v1787, %v1804
        %v1806 = vpop.f32.mrf.mxu0
        %v1807 = vadd.f32 %v1789, %v1806
        %1808 = vmatmul.bf16.gmra.mxu0 %v1516
        %v1809 = vpop.f32.mrf.mxu0
        %v1810 = vadd.f32 %v1792, %v1809
        %v1811 = vpop.f32.mrf.mxu0
        %1812 = vdwg.mxu0
        %1813 = vmatpush.bf16.msra.mxu0 %v1703
        %1814 = vmatpush.bf16.msra.mxu0 %v1700
        %1815 = vmatpush.bf16.msra.mxu0 %v1697
        %1816 = vmatpush.bf16.msra.mxu0 %v1694
        %1817 = vmatpush.bf16.msra.mxu0 %v1691
        %1818 = vmatpush.bf16.msra.mxu0 %v1688
        %1819 = vmatpush.bf16.msra.mxu0 %v1685
        %1820 = vmatpush.bf16.msra.mxu0 %v1682
        %1821 = vmatmul.bf16.gmra.mxu0 %v1512
        %v1822 = vpop.f32.mrf.mxu0
        %v1823 = vadd.f32 0.0, %v1822
        %v1824 = vpop.f32.mrf.mxu0
        %v1825 = vadd.f32 0.0, %v1824
        %1826 = vmatmul.bf16.gmra.mxu0 %v1515
        %v1827 = vpop.f32.mrf.mxu0
        %v1828 = vadd.f32 0.0, %v1827
        %v1829 = vpop.f32.mrf.mxu0
        %1830 = vdwg.mxu0
        %1831 = vmatpush.bf16.msra.mxu0 %v1727
        %1832 = vmatpush.bf16.msra.mxu0 %v1724
        %1833 = vmatpush.bf16.msra.mxu0 %v1721
        %1834 = vmatpush.bf16.msra.mxu0 %v1718
        %1835 = vmatpush.bf16.msra.mxu0 %v1715
        %1836 = vmatpush.bf16.msra.mxu0 %v1712
        %1837 = vmatpush.bf16.msra.mxu0 %v1709
        %1838 = vmatpush.bf16.msra.mxu0 %v1706
        %1839 = vmatmul.bf16.gmra.mxu0 %v1513
        %v1840 = vpop.f32.mrf.mxu0
        %v1841 = vadd.f32 %v1823, %v1840
        %v1842 = vpop.f32.mrf.mxu0
        %v1843 = vadd.f32 %v1825, %v1842
        %1844 = vmatmul.bf16.gmra.mxu0 %v1516
        %v1845 = vpop.f32.mrf.mxu0
        %v1846 = vadd.f32 %v1828, %v1845
        %v1847 = vpop.f32.mrf.mxu0
        %1848 = vdwg.mxu0
        %1849 = vmatpush.bf16.msra.mxu0 %v1704
        %1850 = vmatpush.bf16.msra.mxu0 %v1701
        %1851 = vmatpush.bf16.msra.mxu0 %v1698
        %1852 = vmatpush.bf16.msra.mxu0 %v1695
        %1853 = vmatpush.bf16.msra.mxu0 %v1692
        %1854 = vmatpush.bf16.msra.mxu0 %v1689
        %1855 = vmatpush.bf16.msra.mxu0 %v1686
        %1856 = vmatpush.bf16.msra.mxu0 %v1683
        %1857 = vmatmul.bf16.gmra.mxu0 %v1512
        %v1858 = vpop.f32.mrf.mxu0
        %v1859 = vadd.f32 0.0, %v1858
        %v1860 = vpop.f32.mrf.mxu0
        %v1861 = vadd.f32 0.0, %v1860
        %1862 = vmatmul.bf16.gmra.mxu0 %v1515
        %v1863 = vpop.f32.mrf.mxu0
        %v1864 = vadd.f32 0.0, %v1863
        %v1865 = vpop.f32.mrf.mxu0
        %1866 = vdwg.mxu0
        %1867 = vmatpush.bf16.msra.mxu0 %v1728
        %1868 = vmatpush.bf16.msra.mxu0 %v1725
        %1869 = vmatpush.bf16.msra.mxu0 %v1722
        %1870 = vmatpush.bf16.msra.mxu0 %v1719
        %1871 = vmatpush.bf16.msra.mxu0 %v1716
        %1872 = vmatpush.bf16.msra.mxu0 %v1713
        %1873 = vmatpush.bf16.msra.mxu0 %v1710
        %1874 = vmatpush.bf16.msra.mxu0 %v1707
        %1875 = vmatmul.bf16.gmra.mxu0 %v1513
        %v1876 = vpop.f32.mrf.mxu0
        %v1877 = vadd.f32 %v1859, %v1876
        %v1878 = vpop.f32.mrf.mxu0
        %v1879 = vadd.f32 %v1861, %v1878
        %1880 = vmatmul.bf16.gmra.mxu0 %v1516
        %v1881 = vpop.f32.mrf.mxu0
        %v1882 = vadd.f32 %v1864, %v1881
        %v1883 = vpop.f32.mrf.mxu0
        %1884 = vdwg.mxu0
        %v1885 = vadd.f32 %v1328, %v1805
        %v1886 = vadd.f32 %v1364, %v1841
        %v1887 = vadd.f32 %v1400, %v1877
        %v1888 = vadd.f32 %v1330, %v1807
        %v1889 = vadd.f32 %v1366, %v1843
        %v1890 = vadd.f32 %v1402, %v1879
        %v1891 = vadd.f32 %v1333, %v1810
        %v1892 = vadd.f32 %v1369, %v1846
        %v1893 = vadd.f32 %v1405, %v1882
        %s1894 = sadd.s32 %s312, 1
        %s1895 = smul.u32 %s1894, 2
        %s1896 = smul.addr %s1895, 4
        %s1897 = scalar_lea.vmem %s241, %s1896 [#allocation2]
        %v1898 = vld [vmem:[%s1897] sm:$0x77]
        %v1899 = vld [vmem:[%s1897 + $0x8] sm:$0x77]
        %v1900 = vld [vmem:[%s1897 + $0x10] sm:$0x77]
        %v1904 = vrot.slane %v1898, 3
        %v1905 = vrot.slane %v1899, 3
        %v1906 = vrot.slane %v1900, 3
        %v1909 = vsel %vm325, %v1898, %v1904
        %v1910 = vsel %vm329, %v1898, %v1904
        %v1912 = vrot.slane %v1910, 1
        %v1913 = vsel %vm333, %v1898, %v1904
        %v1915 = vrot.slane %v1913, 2
        %v1918 = vsel %vm325, %v1899, %v1905
        %v1919 = vsel %vm329, %v1899, %v1905
        %v1921 = vrot.slane %v1919, 1
        %v1922 = vsel %vm333, %v1899, %v1905
        %v1924 = vrot.slane %v1922, 2
        %v1927 = vsel %vm325, %v1900, %v1906
        %v1928 = vsel %vm329, %v1900, %v1906
        %v1930 = vrot.slane %v1928, 1
        %v1931 = vsel %vm333, %v1900, %v1906
        %v1933 = vrot.slane %v1931, 2
        %s1934 = scalar_lea.vmem [#allocation4], 1152
        %v1935 = vld [vmem:[%s1934] sm:$0xff]
        %v1936 = vld [vmem:[%s1934 + $0x8] sm:$0xf]
        %v1937 = vld [vmem:[%s1934 + $0xc] sm:$0xff]
        %v1938 = vld [vmem:[%s1934 + $0x14] sm:$0xf]
        %v1939 = vld [vmem:[%s1934 + $0x18] sm:$0xff]
        %v1940 = vld [vmem:[%s1934 + $0x20] sm:$0xf]
        %v1941 = vld [vmem:[%s1934 + $0x24] sm:$0xff]
        %v1942 = vld [vmem:[%s1934 + $0x2c] sm:$0xf]
        %v1943 = vld [vmem:[%s1934 + $0x30] sm:$0xff]
        %v1944 = vld [vmem:[%s1934 + $0x38] sm:$0xf]
        %v1945 = vld [vmem:[%s1934 + $0x3c] sm:$0xff]
        %v1946 = vld [vmem:[%s1934 + $0x44] sm:$0xf]
        %v1947 = vld [vmem:[%s1934 + $0x48] sm:$0xff]
        %v1948 = vld [vmem:[%s1934 + $0x50] sm:$0xf]
        %v1949 = vld [vmem:[%s1934 + $0x54] sm:$0xff]
        %v1950 = vld [vmem:[%s1934 + $0x5c] sm:$0xf]
        %v1951 = vld [vmem:[%s1934 + $0x60] sm:$0xff]
        %v1952 = vld [vmem:[%s1934 + $0x68] sm:$0xf]
        %v1953 = vld [vmem:[%s1934 + $0x6c] sm:$0xff]
        %v1954 = vld [vmem:[%s1934 + $0x74] sm:$0xf]
        %v1955 = vld [vmem:[%s1934 + $0x78] sm:$0xff]
        %v1956 = vld [vmem:[%s1934 + $0x80] sm:$0xf]
        %v1957 = vld [vmem:[%s1934 + $0x84] sm:$0xff]
        %v1958 = vld [vmem:[%s1934 + $0x8c] sm:$0xf]
        %v1959 = vld [vmem:[%s1934 + $0x90] sm:$0xff]
        %v1960 = vld [vmem:[%s1934 + $0x98] sm:$0xf]
        %v1961 = vld [vmem:[%s1934 + $0x9c] sm:$0xff]
        %v1962 = vld [vmem:[%s1934 + $0xa4] sm:$0xf]
        %v1963 = vld [vmem:[%s1934 + $0xa8] sm:$0xff]
        %v1964 = vld [vmem:[%s1934 + $0xb0] sm:$0xf]
        %v1965 = vld [vmem:[%s1934 + $0xb4] sm:$0xff]
        %v1966 = vld [vmem:[%s1934 + $0xbc] sm:$0xf]
        %v1967 = vld [vmem:[%s1934 + $0xc0] sm:$0xff]
        %v1968 = vld [vmem:[%s1934 + $0xc8] sm:$0xf]
        %v1969 = vld [vmem:[%s1934 + $0xcc] sm:$0xff]
        %v1970 = vld [vmem:[%s1934 + $0xd4] sm:$0xf]
        %v1971 = vld [vmem:[%s1934 + $0xd8] sm:$0xff]
        %v1972 = vld [vmem:[%s1934 + $0xe0] sm:$0xf]
        %v1973 = vld [vmem:[%s1934 + $0xe4] sm:$0xff]
        %v1974 = vld [vmem:[%s1934 + $0xec] sm:$0xf]
        %v1975 = vld [vmem:[%s1934 + $0xf0] sm:$0xff]
        %v1976 = vld [vmem:[%s1934 + $0xf8] sm:$0xf]
        %v1977 = vld [vmem:[%s1934 + $0xfc] sm:$0xff]
        %v1978 = vld [vmem:[%s1934 + $0x104] sm:$0xf]
        %v1979 = vld [vmem:[%s1934 + $0x108] sm:$0xff]
        %v1980 = vld [vmem:[%s1934 + $0x110] sm:$0xf]
        %v1981 = vld [vmem:[%s1934 + $0x114] sm:$0xff]
        %v1982 = vld [vmem:[%s1934 + $0x11c] sm:$0xf]
        %v1983 = vld [vmem:[%s1934 + $0x120] sm:$0xff]
        %v1984 = vld [vmem:[%s1934 + $0x128] sm:$0xf]
        %v1985 = vld [vmem:[%s1934 + $0x12c] sm:$0xff]
        %v1986 = vld [vmem:[%s1934 + $0x134] sm:$0xf]
        %v1987 = vld [vmem:[%s1934 + $0x138] sm:$0xff]
        %v1988 = vld [vmem:[%s1934 + $0x140] sm:$0xf]
        %v1989 = vld [vmem:[%s1934 + $0x144] sm:$0xff]
        %v1990 = vld [vmem:[%s1934 + $0x14c] sm:$0xf]
        %v1991 = vld [vmem:[%s1934 + $0x150] sm:$0xff]
        %v1992 = vld [vmem:[%s1934 + $0x158] sm:$0xf]
        %v1993 = vld [vmem:[%s1934 + $0x15c] sm:$0xff]
        %v1994 = vld [vmem:[%s1934 + $0x164] sm:$0xf]
        %v1995 = vld [vmem:[%s1934 + $0x168] sm:$0xff]
        %v1996 = vld [vmem:[%s1934 + $0x170] sm:$0xf]
        %v1997 = vld [vmem:[%s1934 + $0x174] sm:$0xff]
        %v1998 = vld [vmem:[%s1934 + $0x17c] sm:$0xf]
        %1999 = vst [vmem:[#allocation1] ss:$9 sm:$0xff] %v1909
        %s2001 = scalar_lea.vmem [#allocation1], 1
        %2002 = vst [vmem:[%s2001] ss:$9 sm:$0xff] %v1912
        %s2004 = scalar_lea.vmem [#allocation1], 2
        %2005 = vst [vmem:[%s2004] ss:$9 sm:$0xff] %v1915
        %s2006 = scalar_lea.vmem [#allocation1], 3
        %2007 = vst [vmem:[%s2006] ss:$9 sm:$0xff] %v1918
        %s2009 = scalar_lea.vmem [#allocation1], 4
        %2010 = vst [vmem:[%s2009] ss:$9 sm:$0xff] %v1921
        %s2012 = scalar_lea.vmem [#allocation1], 5
        %2013 = vst [vmem:[%s2012] ss:$9 sm:$0xff] %v1924
        %s2014 = scalar_lea.vmem [#allocation1], 6
        %2015 = vst [vmem:[%s2014] ss:$9 sm:$0xff] %v1927
        %s2017 = scalar_lea.vmem [#allocation1], 7
        %2018 = vst [vmem:[%s2017] ss:$9 sm:$0xff] %v1930
        %v2019 = vld [vmem:[#allocation1] sm:$0xff]
        %v2020 = vld [vmem:[#allocation1 + $0x9] sm:$0xff]
        %2022 = vst [vmem:[#allocation1] ss:$9 sm:$0xff] %v1933
        %v2023 = vld [vmem:[#allocation1] sm:$0xff]
        %v2024 = vld [vmem:[#allocation1 + $0x9] sm:$0xff]
        %v2093 = vunpack.c.l.b16 %v1935
        %v2094 = vunpack.c.h.b16 %v1935
        %v2095 = vunpack.c.l.b16 %v1936
        %v2096 = vunpack.c.l.b16 %v1937
        %v2097 = vunpack.c.h.b16 %v1937
        %v2098 = vunpack.c.l.b16 %v1938
        %v2099 = vunpack.c.l.b16 %v1939
        %v2100 = vunpack.c.h.b16 %v1939
        %v2101 = vunpack.c.l.b16 %v1940
        %v2102 = vunpack.c.l.b16 %v1941
        %v2103 = vunpack.c.h.b16 %v1941
        %v2104 = vunpack.c.l.b16 %v1942
        %v2105 = vunpack.c.l.b16 %v1943
        %v2106 = vunpack.c.h.b16 %v1943
        %v2107 = vunpack.c.l.b16 %v1944
        %v2108 = vunpack.c.l.b16 %v1945
        %v2109 = vunpack.c.h.b16 %v1945
        %v2110 = vunpack.c.l.b16 %v1946
        %v2111 = vunpack.c.l.b16 %v1947
        %v2112 = vunpack.c.h.b16 %v1947
        %v2113 = vunpack.c.l.b16 %v1948
        %v2114 = vunpack.c.l.b16 %v1949
        %v2115 = vunpack.c.h.b16 %v1949
        %v2116 = vunpack.c.l.b16 %v1950
        %v2117 = vunpack.c.l.b16 %v1951
        %v2118 = vunpack.c.h.b16 %v1951
        %v2119 = vunpack.c.l.b16 %v1952
        %v2120 = vunpack.c.l.b16 %v1953
        %v2121 = vunpack.c.h.b16 %v1953
        %v2122 = vunpack.c.l.b16 %v1954
        %v2123 = vunpack.c.l.b16 %v1955
        %v2124 = vunpack.c.h.b16 %v1955
        %v2125 = vunpack.c.l.b16 %v1956
        %v2126 = vunpack.c.l.b16 %v1957
        %v2127 = vunpack.c.h.b16 %v1957
        %v2128 = vunpack.c.l.b16 %v1958
        %v2129 = vunpack.c.l.b16 %v1959
        %v2130 = vunpack.c.h.b16 %v1959
        %v2131 = vunpack.c.l.b16 %v1960
        %v2132 = vunpack.c.l.b16 %v1961
        %v2133 = vunpack.c.h.b16 %v1961
        %v2134 = vunpack.c.l.b16 %v1962
        %v2135 = vunpack.c.l.b16 %v1963
        %v2136 = vunpack.c.h.b16 %v1963
        %v2137 = vunpack.c.l.b16 %v1964
        %v2138 = vunpack.c.l.b16 %v1965
        %v2139 = vunpack.c.h.b16 %v1965
        %v2140 = vunpack.c.l.b16 %v1966
        %v2141 = vunpack.c.l.b16 %v1967
        %v2142 = vunpack.c.h.b16 %v1967
        %v2143 = vunpack.c.l.b16 %v1968
        %v2144 = vunpack.c.l.b16 %v1969
        %v2145 = vunpack.c.h.b16 %v1969
        %v2146 = vunpack.c.l.b16 %v1970
        %v2147 = vunpack.c.l.b16 %v1971
        %v2148 = vunpack.c.h.b16 %v1971
        %v2149 = vunpack.c.l.b16 %v1972
        %v2150 = vunpack.c.l.b16 %v1973
        %v2151 = vunpack.c.h.b16 %v1973
        %v2152 = vunpack.c.l.b16 %v1974
        %v2153 = vunpack.c.l.b16 %v1975
        %v2154 = vunpack.c.h.b16 %v1975
        %v2155 = vunpack.c.l.b16 %v1976
        %v2156 = vunpack.c.l.b16 %v1977
        %v2157 = vunpack.c.h.b16 %v1977
        %v2158 = vunpack.c.l.b16 %v1978
        %v2159 = vunpack.c.l.b16 %v1979
        %v2160 = vunpack.c.h.b16 %v1979
        %v2161 = vunpack.c.l.b16 %v1980
        %v2162 = vunpack.c.l.b16 %v1981
        %v2163 = vunpack.c.h.b16 %v1981
        %v2164 = vunpack.c.l.b16 %v1982
        %v2165 = vunpack.c.l.b16 %v1983
        %v2166 = vunpack.c.h.b16 %v1983
        %v2167 = vunpack.c.l.b16 %v1984
        %v2168 = vunpack.c.l.b16 %v1985
        %v2169 = vunpack.c.h.b16 %v1985
        %v2170 = vunpack.c.l.b16 %v1986
        %v2171 = vunpack.c.l.b16 %v1987
        %v2172 = vunpack.c.h.b16 %v1987
        %v2173 = vunpack.c.l.b16 %v1988
        %v2174 = vunpack.c.l.b16 %v1989
        %v2175 = vunpack.c.h.b16 %v1989
        %v2176 = vunpack.c.l.b16 %v1990
        %v2177 = vunpack.c.l.b16 %v1991
        %v2178 = vunpack.c.h.b16 %v1991
        %v2179 = vunpack.c.l.b16 %v1992
        %v2180 = vunpack.c.l.b16 %v1993
        %v2181 = vunpack.c.h.b16 %v1993
        %v2182 = vunpack.c.l.b16 %v1994
        %v2183 = vunpack.c.l.b16 %v1995
        %v2184 = vunpack.c.h.b16 %v1995
        %v2185 = vunpack.c.l.b16 %v1996
        %v2186 = vunpack.c.l.b16 %v1997
        %v2187 = vunpack.c.h.b16 %v1997
        %v2188 = vunpack.c.l.b16 %v1998
        %v2189 = vpack.c.b16 %v2096, %v2093
        %v2190 = vpack.c.b16 %v2097, %v2094
        %v2191 = vpack.c.b16 %v2098, %v2095
        %v2192 = vpack.c.b16 %v2102, %v2099
        %v2193 = vpack.c.b16 %v2103, %v2100
        %v2194 = vpack.c.b16 %v2104, %v2101
        %v2195 = vpack.c.b16 %v2108, %v2105
        %v2196 = vpack.c.b16 %v2109, %v2106
        %v2197 = vpack.c.b16 %v2110, %v2107
        %v2198 = vpack.c.b16 %v2114, %v2111
        %v2199 = vpack.c.b16 %v2115, %v2112
        %v2200 = vpack.c.b16 %v2116, %v2113
        %v2201 = vpack.c.b16 %v2120, %v2117
        %v2202 = vpack.c.b16 %v2121, %v2118
        %v2203 = vpack.c.b16 %v2122, %v2119
        %v2204 = vpack.c.b16 %v2126, %v2123
        %v2205 = vpack.c.b16 %v2127, %v2124
        %v2206 = vpack.c.b16 %v2128, %v2125
        %v2207 = vpack.c.b16 %v2132, %v2129
        %v2208 = vpack.c.b16 %v2133, %v2130
        %v2209 = vpack.c.b16 %v2134, %v2131
        %v2210 = vpack.c.b16 %v2138, %v2135
        %v2211 = vpack.c.b16 %v2139, %v2136
        %v2212 = vpack.c.b16 %v2140, %v2137
        %v2213 = vpack.c.b16 %v2144, %v2141
        %v2214 = vpack.c.b16 %v2145, %v2142
        %v2215 = vpack.c.b16 %v2146, %v2143
        %v2216 = vpack.c.b16 %v2150, %v2147
        %v2217 = vpack.c.b16 %v2151, %v2148
        %v2218 = vpack.c.b16 %v2152, %v2149
        %v2219 = vpack.c.b16 %v2156, %v2153
        %v2220 = vpack.c.b16 %v2157, %v2154
        %v2221 = vpack.c.b16 %v2158, %v2155
        %v2222 = vpack.c.b16 %v2162, %v2159
        %v2223 = vpack.c.b16 %v2163, %v2160
        %v2224 = vpack.c.b16 %v2164, %v2161
        %v2225 = vpack.c.b16 %v2168, %v2165
        %v2226 = vpack.c.b16 %v2169, %v2166
        %v2227 = vpack.c.b16 %v2170, %v2167
        %v2228 = vpack.c.b16 %v2174, %v2171
        %v2229 = vpack.c.b16 %v2175, %v2172
        %v2230 = vpack.c.b16 %v2176, %v2173
        %v2231 = vpack.c.b16 %v2180, %v2177
        %v2232 = vpack.c.b16 %v2181, %v2178
        %v2233 = vpack.c.b16 %v2182, %v2179
        %v2234 = vpack.c.b16 %v2186, %v2183
        %v2235 = vpack.c.b16 %v2187, %v2184
        %v2236 = vpack.c.b16 %v2188, %v2185
        %2285 = vmatpush.bf16.msra.mxu0 %v2210
        %2286 = vmatpush.bf16.msra.mxu0 %v2207
        %2287 = vmatpush.bf16.msra.mxu0 %v2204
        %2288 = vmatpush.bf16.msra.mxu0 %v2201
        %2289 = vmatpush.bf16.msra.mxu0 %v2198
        %2290 = vmatpush.bf16.msra.mxu0 %v2195
        %2291 = vmatpush.bf16.msra.mxu0 %v2192
        %2292 = vmatpush.bf16.msra.mxu0 %v2189
        %2293 = vmatmul.bf16.gmra.mxu0 %v2019
        %v2294 = vpop.f32.mrf.mxu0
        %v2295 = vadd.f32 0.0, %v2294
        %v2296 = vpop.f32.mrf.mxu0
        %v2297 = vadd.f32 0.0, %v2296
        %2298 = vmatmul.bf16.gmra.mxu0 %v2023
        %v2299 = vpop.f32.mrf.mxu0
        %v2300 = vadd.f32 0.0, %v2299
        %v2301 = vpop.f32.mrf.mxu0
        %2302 = vdwg.mxu0
        %2303 = vmatpush.bf16.msra.mxu0 %v2234
        %2304 = vmatpush.bf16.msra.mxu0 %v2231
        %2305 = vmatpush.bf16.msra.mxu0 %v2228
        %2306 = vmatpush.bf16.msra.mxu0 %v2225
        %2307 = vmatpush.bf16.msra.mxu0 %v2222
        %2308 = vmatpush.bf16.msra.mxu0 %v2219
        %2309 = vmatpush.bf16.msra.mxu0 %v2216
        %2310 = vmatpush.bf16.msra.mxu0 %v2213
        %2311 = vmatmul.bf16.gmra.mxu0 %v2020
        %v2312 = vpop.f32.mrf.mxu0
        %v2313 = vadd.f32 %v2295, %v2312
        %v2314 = vpop.f32.mrf.mxu0
        %v2315 = vadd.f32 %v2297, %v2314
        %2316 = vmatmul.bf16.gmra.mxu0 %v2024
        %v2317 = vpop.f32.mrf.mxu0
        %v2318 = vadd.f32 %v2300, %v2317
        %v2319 = vpop.f32.mrf.mxu0
        %2320 = vdwg.mxu0
        %2321 = vmatpush.bf16.msra.mxu0 %v2211
        %2322 = vmatpush.bf16.msra.mxu0 %v2208
        %2323 = vmatpush.bf16.msra.mxu0 %v2205
        %2324 = vmatpush.bf16.msra.mxu0 %v2202
        %2325 = vmatpush.bf16.msra.mxu0 %v2199
        %2326 = vmatpush.bf16.msra.mxu0 %v2196
        %2327 = vmatpush.bf16.msra.mxu0 %v2193
        %2328 = vmatpush.bf16.msra.mxu0 %v2190
        %2329 = vmatmul.bf16.gmra.mxu0 %v2019
        %v2330 = vpop.f32.mrf.mxu0
        %v2331 = vadd.f32 0.0, %v2330
        %v2332 = vpop.f32.mrf.mxu0
        %v2333 = vadd.f32 0.0, %v2332
        %2334 = vmatmul.bf16.gmra.mxu0 %v2023
        %v2335 = vpop.f32.mrf.mxu0
        %v2336 = vadd.f32 0.0, %v2335
        %v2337 = vpop.f32.mrf.mxu0
        %2338 = vdwg.mxu0
        %2339 = vmatpush.bf16.msra.mxu0 %v2235
        %2340 = vmatpush.bf16.msra.mxu0 %v2232
        %2341 = vmatpush.bf16.msra.mxu0 %v2229
        %2342 = vmatpush.bf16.msra.mxu0 %v2226
        %2343 = vmatpush.bf16.msra.mxu0 %v2223
        %2344 = vmatpush.bf16.msra.mxu0 %v2220
        %2345 = vmatpush.bf16.msra.mxu0 %v2217
        %2346 = vmatpush.bf16.msra.mxu0 %v2214
        %2347 = vmatmul.bf16.gmra.mxu0 %v2020
        %v2348 = vpop.f32.mrf.mxu0
        %v2349 = vadd.f32 %v2331, %v2348
        %v2350 = vpop.f32.mrf.mxu0
        %v2351 = vadd.f32 %v2333, %v2350
        %2352 = vmatmul.bf16.gmra.mxu0 %v2024
        %v2353 = vpop.f32.mrf.mxu0
        %v2354 = vadd.f32 %v2336, %v2353
        %v2355 = vpop.f32.mrf.mxu0
        %2356 = vdwg.mxu0
        %2357 = vmatpush.bf16.msra.mxu0 %v2212
        %2358 = vmatpush.bf16.msra.mxu0 %v2209
        %2359 = vmatpush.bf16.msra.mxu0 %v2206
        %2360 = vmatpush.bf16.msra.mxu0 %v2203
        %2361 = vmatpush.bf16.msra.mxu0 %v2200
        %2362 = vmatpush.bf16.msra.mxu0 %v2197
        %2363 = vmatpush.bf16.msra.mxu0 %v2194
        %2364 = vmatpush.bf16.msra.mxu0 %v2191
        %2365 = vmatmul.bf16.gmra.mxu0 %v2019
        %v2366 = vpop.f32.mrf.mxu0
        %v2367 = vadd.f32 0.0, %v2366
        %v2368 = vpop.f32.mrf.mxu0
        %v2369 = vadd.f32 0.0, %v2368
        %2370 = vmatmul.bf16.gmra.mxu0 %v2023
        %v2371 = vpop.f32.mrf.mxu0
        %v2372 = vadd.f32 0.0, %v2371
        %v2373 = vpop.f32.mrf.mxu0
        %2374 = vdwg.mxu0
        %2375 = vmatpush.bf16.msra.mxu0 %v2236
        %2376 = vmatpush.bf16.msra.mxu0 %v2233
        %2377 = vmatpush.bf16.msra.mxu0 %v2230
        %2378 = vmatpush.bf16.msra.mxu0 %v2227
        %2379 = vmatpush.bf16.msra.mxu0 %v2224
        %2380 = vmatpush.bf16.msra.mxu0 %v2221
        %2381 = vmatpush.bf16.msra.mxu0 %v2218
        %2382 = vmatpush.bf16.msra.mxu0 %v2215
        %2383 = vmatmul.bf16.gmra.mxu0 %v2020
        %v2384 = vpop.f32.mrf.mxu0
        %v2385 = vadd.f32 %v2367, %v2384
        %v2386 = vpop.f32.mrf.mxu0
        %v2387 = vadd.f32 %v2369, %v2386
        %2388 = vmatmul.bf16.gmra.mxu0 %v2024
        %v2389 = vpop.f32.mrf.mxu0
        %v2390 = vadd.f32 %v2372, %v2389
        %v2391 = vpop.f32.mrf.mxu0
        %2392 = vdwg.mxu0
        %v2393 = vadd.f32 %v1885, %v2313
        %v2394 = vadd.f32 %v1886, %v2349
        %v2395 = vadd.f32 %v1887, %v2385
        %v2396 = vadd.f32 %v1888, %v2315
        %v2397 = vadd.f32 %v1889, %v2351
        %v2398 = vadd.f32 %v1890, %v2387
        %v2399 = vadd.f32 %v1891, %v2318
        %v2400 = vadd.f32 %v1892, %v2354
        %v2401 = vadd.f32 %v1893, %v2390
        %v2402 = vld [vmem:[%s1897] sm:$0xff]
        %v2403 = vld [vmem:[%s1897 + $0x8] sm:$0xff]
        %v2404 = vld [vmem:[%s1897 + $0x10] sm:$0xff]
        %v2408 = vrot.slane %v2402, 3
        %v2409 = vrot.slane %v2403, 3
        %v2410 = vrot.slane %v2404, 3
        %v2413 = vsel %vm325, %v2402, %v2408
        %v2414 = vsel %vm329, %v2402, %v2408
        %v2416 = vrot.slane %v2414, 1
        %v2417 = vsel %vm333, %v2402, %v2408
        %v2419 = vrot.slane %v2417, 2
        %v2420 = vsel %vm437, %v2402, %v2408
        %v2422 = vrot.slane %v2420, 3
        %v2425 = vsel %vm325, %v2403, %v2409
        %v2426 = vsel %vm329, %v2403, %v2409
        %v2428 = vrot.slane %v2426, 1
        %v2429 = vsel %vm333, %v2403, %v2409
        %v2431 = vrot.slane %v2429, 2
        %v2432 = vsel %vm437, %v2403, %v2409
        %v2434 = vrot.slane %v2432, 3
        %v2437 = vsel %vm325, %v2404, %v2410
        %v2438 = vsel %vm329, %v2404, %v2410
        %v2440 = vrot.slane %v2438, 1
        %v2441 = vsel %vm333, %v2404, %v2410
        %v2443 = vrot.slane %v2441, 2
        %v2444 = vsel %vm437, %v2404, %v2410
        %v2446 = vrot.slane %v2444, 3
        %v2447 = vshrl.u32 %v2413, 16
        %v2449 = vrot.slane %v2447, 7
        %v2450 = vrot.slane %v2449, 1
        %v2452 = vshll.u32 %v2416, 16
        %v2454 = vsel %vm479, %v2450, %v2452
        %v2455 = vshrl.u32 %v2416, 16
        %v2457 = vrot.slane %v2455, 7
        %v2458 = vrot.slane %v2457, 1
        %v2460 = vshll.u32 %v2419, 16
        %v2462 = vsel %vm479, %v2458, %v2460
        %v2463 = vshrl.u32 %v2419, 16
        %v2465 = vrot.slane %v2463, 7
        %v2466 = vrot.slane %v2465, 1
        %v2468 = vshll.u32 %v2422, 16
        %v2470 = vsel %vm479, %v2466, %v2468
        %v2471 = vshrl.u32 %v2425, 16
        %v2473 = vrot.slane %v2471, 7
        %v2474 = vrot.slane %v2473, 1
        %v2476 = vshll.u32 %v2428, 16
        %v2478 = vsel %vm479, %v2474, %v2476
        %v2479 = vshrl.u32 %v2428, 16
        %v2481 = vrot.slane %v2479, 7
        %v2482 = vrot.slane %v2481, 1
        %v2484 = vshll.u32 %v2431, 16
        %v2486 = vsel %vm479, %v2482, %v2484
        %v2487 = vshrl.u32 %v2431, 16
        %v2489 = vrot.slane %v2487, 7
        %v2490 = vrot.slane %v2489, 1
        %v2492 = vshll.u32 %v2434, 16
        %v2494 = vsel %vm479, %v2490, %v2492
        %v2495 = vshrl.u32 %v2437, 16
        %v2497 = vrot.slane %v2495, 7
        %v2498 = vrot.slane %v2497, 1
        %v2500 = vshll.u32 %v2440, 16
        %v2502 = vsel %vm479, %v2498, %v2500
        %v2503 = vshrl.u32 %v2440, 16
        %v2505 = vrot.slane %v2503, 7
        %v2506 = vrot.slane %v2505, 1
        %v2508 = vshll.u32 %v2443, 16
        %v2510 = vsel %vm479, %v2506, %v2508
        %v2511 = vshrl.u32 %v2443, 16
        %v2513 = vrot.slane %v2511, 7
        %v2514 = vrot.slane %v2513, 1
        %v2516 = vshll.u32 %v2446, 16
        %v2518 = vsel %vm479, %v2514, %v2516
        %s2519 = scalar_lea.vmem [#allocation4], 1536
        %v2520 = vld [vmem:[%s2519] sm:$0xff]
        %v2521 = vld [vmem:[%s2519 + $0x8] sm:$0xf]
        %v2522 = vld [vmem:[%s2519 + $0xc] sm:$0xff]
        %v2523 = vld [vmem:[%s2519 + $0x14] sm:$0xf]
        %v2524 = vld [vmem:[%s2519 + $0x18] sm:$0xff]
        %v2525 = vld [vmem:[%s2519 + $0x20] sm:$0xf]
        %v2526 = vld [vmem:[%s2519 + $0x24] sm:$0xff]
        %v2527 = vld [vmem:[%s2519 + $0x2c] sm:$0xf]
        %v2528 = vld [vmem:[%s2519 + $0x30] sm:$0xff]
        %v2529 = vld [vmem:[%s2519 + $0x38] sm:$0xf]
        %v2530 = vld [vmem:[%s2519 + $0x3c] sm:$0xff]
        %v2531 = vld [vmem:[%s2519 + $0x44] sm:$0xf]
        %v2532 = vld [vmem:[%s2519 + $0x48] sm:$0xff]
        %v2533 = vld [vmem:[%s2519 + $0x50] sm:$0xf]
        %v2534 = vld [vmem:[%s2519 + $0x54] sm:$0xff]
        %v2535 = vld [vmem:[%s2519 + $0x5c] sm:$0xf]
        %v2536 = vld [vmem:[%s2519 + $0x60] sm:$0xff]
        %v2537 = vld [vmem:[%s2519 + $0x68] sm:$0xf]
        %v2538 = vld [vmem:[%s2519 + $0x6c] sm:$0xff]
        %v2539 = vld [vmem:[%s2519 + $0x74] sm:$0xf]
        %v2540 = vld [vmem:[%s2519 + $0x78] sm:$0xff]
        %v2541 = vld [vmem:[%s2519 + $0x80] sm:$0xf]
        %v2542 = vld [vmem:[%s2519 + $0x84] sm:$0xff]
        %v2543 = vld [vmem:[%s2519 + $0x8c] sm:$0xf]
        %v2544 = vld [vmem:[%s2519 + $0x90] sm:$0xff]
        %v2545 = vld [vmem:[%s2519 + $0x98] sm:$0xf]
        %v2546 = vld [vmem:[%s2519 + $0x9c] sm:$0xff]
        %v2547 = vld [vmem:[%s2519 + $0xa4] sm:$0xf]
        %v2548 = vld [vmem:[%s2519 + $0xa8] sm:$0xff]
        %v2549 = vld [vmem:[%s2519 + $0xb0] sm:$0xf]
        %v2550 = vld [vmem:[%s2519 + $0xb4] sm:$0xff]
        %v2551 = vld [vmem:[%s2519 + $0xbc] sm:$0xf]
        %v2552 = vld [vmem:[%s2519 + $0xc0] sm:$0xff]
        %v2553 = vld [vmem:[%s2519 + $0xc8] sm:$0xf]
        %v2554 = vld [vmem:[%s2519 + $0xcc] sm:$0xff]
        %v2555 = vld [vmem:[%s2519 + $0xd4] sm:$0xf]
        %v2556 = vld [vmem:[%s2519 + $0xd8] sm:$0xff]
        %v2557 = vld [vmem:[%s2519 + $0xe0] sm:$0xf]
        %v2558 = vld [vmem:[%s2519 + $0xe4] sm:$0xff]
        %v2559 = vld [vmem:[%s2519 + $0xec] sm:$0xf]
        %v2560 = vld [vmem:[%s2519 + $0xf0] sm:$0xff]
        %v2561 = vld [vmem:[%s2519 + $0xf8] sm:$0xf]
        %v2562 = vld [vmem:[%s2519 + $0xfc] sm:$0xff]
        %v2563 = vld [vmem:[%s2519 + $0x104] sm:$0xf]
        %v2564 = vld [vmem:[%s2519 + $0x108] sm:$0xff]
        %v2565 = vld [vmem:[%s2519 + $0x110] sm:$0xf]
        %v2566 = vld [vmem:[%s2519 + $0x114] sm:$0xff]
        %v2567 = vld [vmem:[%s2519 + $0x11c] sm:$0xf]
        %v2568 = vld [vmem:[%s2519 + $0x120] sm:$0xff]
        %v2569 = vld [vmem:[%s2519 + $0x128] sm:$0xf]
        %v2570 = vld [vmem:[%s2519 + $0x12c] sm:$0xff]
        %v2571 = vld [vmem:[%s2519 + $0x134] sm:$0xf]
        %v2572 = vld [vmem:[%s2519 + $0x138] sm:$0xff]
        %v2573 = vld [vmem:[%s2519 + $0x140] sm:$0xf]
        %v2574 = vld [vmem:[%s2519 + $0x144] sm:$0xff]
        %v2575 = vld [vmem:[%s2519 + $0x14c] sm:$0xf]
        %v2576 = vld [vmem:[%s2519 + $0x150] sm:$0xff]
        %v2577 = vld [vmem:[%s2519 + $0x158] sm:$0xf]
        %v2578 = vld [vmem:[%s2519 + $0x15c] sm:$0xff]
        %v2579 = vld [vmem:[%s2519 + $0x164] sm:$0xf]
        %v2580 = vld [vmem:[%s2519 + $0x168] sm:$0xff]
        %v2581 = vld [vmem:[%s2519 + $0x170] sm:$0xf]
        %v2582 = vld [vmem:[%s2519 + $0x174] sm:$0xff]
        %v2583 = vld [vmem:[%s2519 + $0x17c] sm:$0xf]
        %2585 = vst [vmem:[#allocation1] ss:$9 sm:$0xff] %v2454
        %s2587 = scalar_lea.vmem [#allocation1], 1
        %2588 = vst [vmem:[%s2587] ss:$9 sm:$0xff] %v2462
        %s2590 = scalar_lea.vmem [#allocation1], 2
        %2591 = vst [vmem:[%s2590] ss:$9 sm:$0xff] %v2470
        %s2593 = scalar_lea.vmem [#allocation1], 3
        %2594 = vst [vmem:[%s2593] ss:$9 sm:$0xff] %v2478
        %s2596 = scalar_lea.vmem [#allocation1], 4
        %2597 = vst [vmem:[%s2596] ss:$9 sm:$0xff] %v2486
        %s2599 = scalar_lea.vmem [#allocation1], 5
        %2600 = vst [vmem:[%s2599] ss:$9 sm:$0xff] %v2494
        %s2602 = scalar_lea.vmem [#allocation1], 6
        %2603 = vst [vmem:[%s2602] ss:$9 sm:$0xff] %v2502
        %s2605 = scalar_lea.vmem [#allocation1], 7
        %2606 = vst [vmem:[%s2605] ss:$9 sm:$0xff] %v2510
        %v2607 = vld [vmem:[#allocation1] sm:$0xff]
        %v2608 = vld [vmem:[#allocation1 + $0x9] sm:$0xff]
        %2610 = vst [vmem:[#allocation1] ss:$9 sm:$0xff] %v2518
        %v2611 = vld [vmem:[#allocation1] sm:$0xff]
        %v2612 = vld [vmem:[#allocation1 + $0x9] sm:$0xff]
        %v2681 = vunpack.c.l.b16 %v2520
        %v2682 = vunpack.c.h.b16 %v2520
        %v2683 = vunpack.c.l.b16 %v2521
        %v2684 = vunpack.c.l.b16 %v2522
        %v2685 = vunpack.c.h.b16 %v2522
        %v2686 = vunpack.c.l.b16 %v2523
        %v2687 = vunpack.c.l.b16 %v2524
        %v2688 = vunpack.c.h.b16 %v2524
        %v2689 = vunpack.c.l.b16 %v2525
        %v2690 = vunpack.c.l.b16 %v2526
        %v2691 = vunpack.c.h.b16 %v2526
        %v2692 = vunpack.c.l.b16 %v2527
        %v2693 = vunpack.c.l.b16 %v2528
        %v2694 = vunpack.c.h.b16 %v2528
        %v2695 = vunpack.c.l.b16 %v2529
        %v2696 = vunpack.c.l.b16 %v2530
        %v2697 = vunpack.c.h.b16 %v2530
        %v2698 = vunpack.c.l.b16 %v2531
        %v2699 = vunpack.c.l.b16 %v2532
        %v2700 = vunpack.c.h.b16 %v2532
        %v2701 = vunpack.c.l.b16 %v2533
        %v2702 = vunpack.c.l.b16 %v2534
        %v2703 = vunpack.c.h.b16 %v2534
        %v2704 = vunpack.c.l.b16 %v2535
        %v2705 = vunpack.c.l.b16 %v2536
        %v2706 = vunpack.c.h.b16 %v2536
        %v2707 = vunpack.c.l.b16 %v2537
        %v2708 = vunpack.c.l.b16 %v2538
        %v2709 = vunpack.c.h.b16 %v2538
        %v2710 = vunpack.c.l.b16 %v2539
        %v2711 = vunpack.c.l.b16 %v2540
        %v2712 = vunpack.c.h.b16 %v2540
        %v2713 = vunpack.c.l.b16 %v2541
        %v2714 = vunpack.c.l.b16 %v2542
        %v2715 = vunpack.c.h.b16 %v2542
        %v2716 = vunpack.c.l.b16 %v2543
        %v2717 = vunpack.c.l.b16 %v2544
        %v2718 = vunpack.c.h.b16 %v2544
        %v2719 = vunpack.c.l.b16 %v2545
        %v2720 = vunpack.c.l.b16 %v2546
        %v2721 = vunpack.c.h.b16 %v2546
        %v2722 = vunpack.c.l.b16 %v2547
        %v2723 = vunpack.c.l.b16 %v2548
        %v2724 = vunpack.c.h.b16 %v2548
        %v2725 = vunpack.c.l.b16 %v2549
        %v2726 = vunpack.c.l.b16 %v2550
        %v2727 = vunpack.c.h.b16 %v2550
        %v2728 = vunpack.c.l.b16 %v2551
        %v2729 = vunpack.c.l.b16 %v2552
        %v2730 = vunpack.c.h.b16 %v2552
        %v2731 = vunpack.c.l.b16 %v2553
        %v2732 = vunpack.c.l.b16 %v2554
        %v2733 = vunpack.c.h.b16 %v2554
        %v2734 = vunpack.c.l.b16 %v2555
        %v2735 = vunpack.c.l.b16 %v2556
        %v2736 = vunpack.c.h.b16 %v2556
        %v2737 = vunpack.c.l.b16 %v2557
        %v2738 = vunpack.c.l.b16 %v2558
        %v2739 = vunpack.c.h.b16 %v2558
        %v2740 = vunpack.c.l.b16 %v2559
        %v2741 = vunpack.c.l.b16 %v2560
        %v2742 = vunpack.c.h.b16 %v2560
        %v2743 = vunpack.c.l.b16 %v2561
        %v2744 = vunpack.c.l.b16 %v2562
        %v2745 = vunpack.c.h.b16 %v2562
        %v2746 = vunpack.c.l.b16 %v2563
        %v2747 = vunpack.c.l.b16 %v2564
        %v2748 = vunpack.c.h.b16 %v2564
        %v2749 = vunpack.c.l.b16 %v2565
        %v2750 = vunpack.c.l.b16 %v2566
        %v2751 = vunpack.c.h.b16 %v2566
        %v2752 = vunpack.c.l.b16 %v2567
        %v2753 = vunpack.c.l.b16 %v2568
        %v2754 = vunpack.c.h.b16 %v2568
        %v2755 = vunpack.c.l.b16 %v2569
        %v2756 = vunpack.c.l.b16 %v2570
        %v2757 = vunpack.c.h.b16 %v2570
        %v2758 = vunpack.c.l.b16 %v2571
        %v2759 = vunpack.c.l.b16 %v2572
        %v2760 = vunpack.c.h.b16 %v2572
        %v2761 = vunpack.c.l.b16 %v2573
        %v2762 = vunpack.c.l.b16 %v2574
        %v2763 = vunpack.c.h.b16 %v2574
        %v2764 = vunpack.c.l.b16 %v2575
        %v2765 = vunpack.c.l.b16 %v2576
        %v2766 = vunpack.c.h.b16 %v2576
        %v2767 = vunpack.c.l.b16 %v2577
        %v2768 = vunpack.c.l.b16 %v2578
        %v2769 = vunpack.c.h.b16 %v2578
        %v2770 = vunpack.c.l.b16 %v2579
        %v2771 = vunpack.c.l.b16 %v2580
        %v2772 = vunpack.c.h.b16 %v2580
        %v2773 = vunpack.c.l.b16 %v2581
        %v2774 = vunpack.c.l.b16 %v2582
        %v2775 = vunpack.c.h.b16 %v2582
        %v2776 = vunpack.c.l.b16 %v2583
        %v2777 = vpack.c.b16 %v2684, %v2681
        %v2778 = vpack.c.b16 %v2685, %v2682
        %v2779 = vpack.c.b16 %v2686, %v2683
        %v2780 = vpack.c.b16 %v2690, %v2687
        %v2781 = vpack.c.b16 %v2691, %v2688
        %v2782 = vpack.c.b16 %v2692, %v2689
        %v2783 = vpack.c.b16 %v2696, %v2693
        %v2784 = vpack.c.b16 %v2697, %v2694
        %v2785 = vpack.c.b16 %v2698, %v2695
        %v2786 = vpack.c.b16 %v2702, %v2699
        %v2787 = vpack.c.b16 %v2703, %v2700
        %v2788 = vpack.c.b16 %v2704, %v2701
        %v2789 = vpack.c.b16 %v2708, %v2705
        %v2790 = vpack.c.b16 %v2709, %v2706
        %v2791 = vpack.c.b16 %v2710, %v2707
        %v2792 = vpack.c.b16 %v2714, %v2711
        %v2793 = vpack.c.b16 %v2715, %v2712
        %v2794 = vpack.c.b16 %v2716, %v2713
        %v2795 = vpack.c.b16 %v2720, %v2717
        %v2796 = vpack.c.b16 %v2721, %v2718
        %v2797 = vpack.c.b16 %v2722, %v2719
        %v2798 = vpack.c.b16 %v2726, %v2723
        %v2799 = vpack.c.b16 %v2727, %v2724
        %v2800 = vpack.c.b16 %v2728, %v2725
        %v2801 = vpack.c.b16 %v2732, %v2729
        %v2802 = vpack.c.b16 %v2733, %v2730
        %v2803 = vpack.c.b16 %v2734, %v2731
        %v2804 = vpack.c.b16 %v2738, %v2735
        %v2805 = vpack.c.b16 %v2739, %v2736
        %v2806 = vpack.c.b16 %v2740, %v2737
        %v2807 = vpack.c.b16 %v2744, %v2741
        %v2808 = vpack.c.b16 %v2745, %v2742
        %v2809 = vpack.c.b16 %v2746, %v2743
        %v2810 = vpack.c.b16 %v2750, %v2747
        %v2811 = vpack.c.b16 %v2751, %v2748
        %v2812 = vpack.c.b16 %v2752, %v2749
        %v2813 = vpack.c.b16 %v2756, %v2753
        %v2814 = vpack.c.b16 %v2757, %v2754
        %v2815 = vpack.c.b16 %v2758, %v2755
        %v2816 = vpack.c.b16 %v2762, %v2759
        %v2817 = vpack.c.b16 %v2763, %v2760
        %v2818 = vpack.c.b16 %v2764, %v2761
        %v2819 = vpack.c.b16 %v2768, %v2765
        %v2820 = vpack.c.b16 %v2769, %v2766
        %v2821 = vpack.c.b16 %v2770, %v2767
        %v2822 = vpack.c.b16 %v2774, %v2771
        %v2823 = vpack.c.b16 %v2775, %v2772
        %v2824 = vpack.c.b16 %v2776, %v2773
        %2873 = vmatpush.bf16.msra.mxu0 %v2798
        %2874 = vmatpush.bf16.msra.mxu0 %v2795
        %2875 = vmatpush.bf16.msra.mxu0 %v2792
        %2876 = vmatpush.bf16.msra.mxu0 %v2789
        %2877 = vmatpush.bf16.msra.mxu0 %v2786
        %2878 = vmatpush.bf16.msra.mxu0 %v2783
        %2879 = vmatpush.bf16.msra.mxu0 %v2780
        %2880 = vmatpush.bf16.msra.mxu0 %v2777
        %2881 = vmatmul.bf16.gmra.mxu0 %v2607
        %v2882 = vpop.f32.mrf.mxu0
        %v2883 = vadd.f32 0.0, %v2882
        %v2884 = vpop.f32.mrf.mxu0
        %v2885 = vadd.f32 0.0, %v2884
        %2886 = vmatmul.bf16.gmra.mxu0 %v2611
        %v2887 = vpop.f32.mrf.mxu0
        %v2888 = vadd.f32 0.0, %v2887
        %v2889 = vpop.f32.mrf.mxu0
        %2890 = vdwg.mxu0
        %2891 = vmatpush.bf16.msra.mxu0 %v2822
        %2892 = vmatpush.bf16.msra.mxu0 %v2819
        %2893 = vmatpush.bf16.msra.mxu0 %v2816
        %2894 = vmatpush.bf16.msra.mxu0 %v2813
        %2895 = vmatpush.bf16.msra.mxu0 %v2810
        %2896 = vmatpush.bf16.msra.mxu0 %v2807
        %2897 = vmatpush.bf16.msra.mxu0 %v2804
        %2898 = vmatpush.bf16.msra.mxu0 %v2801
        %2899 = vmatmul.bf16.gmra.mxu0 %v2608
        %v2900 = vpop.f32.mrf.mxu0
        %v2901 = vadd.f32 %v2883, %v2900
        %v2902 = vpop.f32.mrf.mxu0
        %v2903 = vadd.f32 %v2885, %v2902
        %2904 = vmatmul.bf16.gmra.mxu0 %v2612
        %v2905 = vpop.f32.mrf.mxu0
        %v2906 = vadd.f32 %v2888, %v2905
        %v2907 = vpop.f32.mrf.mxu0
        %2908 = vdwg.mxu0
        %2909 = vmatpush.bf16.msra.mxu0 %v2799
        %2910 = vmatpush.bf16.msra.mxu0 %v2796
        %2911 = vmatpush.bf16.msra.mxu0 %v2793
        %2912 = vmatpush.bf16.msra.mxu0 %v2790
        %2913 = vmatpush.bf16.msra.mxu0 %v2787
        %2914 = vmatpush.bf16.msra.mxu0 %v2784
        %2915 = vmatpush.bf16.msra.mxu0 %v2781
        %2916 = vmatpush.bf16.msra.mxu0 %v2778
        %2917 = vmatmul.bf16.gmra.mxu0 %v2607
        %v2918 = vpop.f32.mrf.mxu0
        %v2919 = vadd.f32 0.0, %v2918
        %v2920 = vpop.f32.mrf.mxu0
        %v2921 = vadd.f32 0.0, %v2920
        %2922 = vmatmul.bf16.gmra.mxu0 %v2611
        %v2923 = vpop.f32.mrf.mxu0
        %v2924 = vadd.f32 0.0, %v2923
        %v2925 = vpop.f32.mrf.mxu0
        %2926 = vdwg.mxu0
        %2927 = vmatpush.bf16.msra.mxu0 %v2823
        %2928 = vmatpush.bf16.msra.mxu0 %v2820
        %2929 = vmatpush.bf16.msra.mxu0 %v2817
        %2930 = vmatpush.bf16.msra.mxu0 %v2814
        %2931 = vmatpush.bf16.msra.mxu0 %v2811
        %2932 = vmatpush.bf16.msra.mxu0 %v2808
        %2933 = vmatpush.bf16.msra.mxu0 %v2805
        %2934 = vmatpush.bf16.msra.mxu0 %v2802
        %2935 = vmatmul.bf16.gmra.mxu0 %v2608
        %v2936 = vpop.f32.mrf.mxu0
        %v2937 = vadd.f32 %v2919, %v2936
        %v2938 = vpop.f32.mrf.mxu0
        %v2939 = vadd.f32 %v2921, %v2938
        %2940 = vmatmul.bf16.gmra.mxu0 %v2612
        %v2941 = vpop.f32.mrf.mxu0
        %v2942 = vadd.f32 %v2924, %v2941
        %v2943 = vpop.f32.mrf.mxu0
        %2944 = vdwg.mxu0
        %2945 = vmatpush.bf16.msra.mxu0 %v2800
        %2946 = vmatpush.bf16.msra.mxu0 %v2797
        %2947 = vmatpush.bf16.msra.mxu0 %v2794
        %2948 = vmatpush.bf16.msra.mxu0 %v2791
        %2949 = vmatpush.bf16.msra.mxu0 %v2788
        %2950 = vmatpush.bf16.msra.mxu0 %v2785
        %2951 = vmatpush.bf16.msra.mxu0 %v2782
        %2952 = vmatpush.bf16.msra.mxu0 %v2779
        %2953 = vmatmul.bf16.gmra.mxu0 %v2607
        %v2954 = vpop.f32.mrf.mxu0
        %v2955 = vadd.f32 0.0, %v2954
        %v2956 = vpop.f32.mrf.mxu0
        %v2957 = vadd.f32 0.0, %v2956
        %2958 = vmatmul.bf16.gmra.mxu0 %v2611
        %v2959 = vpop.f32.mrf.mxu0
        %v2960 = vadd.f32 0.0, %v2959
        %v2961 = vpop.f32.mrf.mxu0
        %2962 = vdwg.mxu0
        %2963 = vmatpush.bf16.msra.mxu0 %v2824
        %2964 = vmatpush.bf16.msra.mxu0 %v2821
        %2965 = vmatpush.bf16.msra.mxu0 %v2818
        %2966 = vmatpush.bf16.msra.mxu0 %v2815
        %2967 = vmatpush.bf16.msra.mxu0 %v2812
        %2968 = vmatpush.bf16.msra.mxu0 %v2809
        %2969 = vmatpush.bf16.msra.mxu0 %v2806
        %2970 = vmatpush.bf16.msra.mxu0 %v2803
        %2971 = vmatmul.bf16.gmra.mxu0 %v2608
        %v2972 = vpop.f32.mrf.mxu0
        %v2973 = vadd.f32 %v2955, %v2972
        %v2974 = vpop.f32.mrf.mxu0
        %v2975 = vadd.f32 %v2957, %v2974
        %2976 = vmatmul.bf16.gmra.mxu0 %v2612
        %v2977 = vpop.f32.mrf.mxu0
        %v2978 = vadd.f32 %v2960, %v2977
        %v2979 = vpop.f32.mrf.mxu0
        %2980 = vdwg.mxu0
        %v2981 = vadd.f32 %v2393, %v2901
        %v2982 = vadd.f32 %v2394, %v2937
        %v2983 = vadd.f32 %v2395, %v2973
        %v2984 = vadd.f32 %v2396, %v2903
        %v2985 = vadd.f32 %v2397, %v2939
        %v2986 = vadd.f32 %v2398, %v2975
        %v2987 = vadd.f32 %v2399, %v2906
        %v2988 = vadd.f32 %v2400, %v2942
        %v2989 = vadd.f32 %v2401, %v2978
        %v2990 = vld [vmem:[%s1897] sm:$0xee]
        %v2991 = vld [vmem:[%s1897 + $0x8] sm:$0xee]
        %v2992 = vld [vmem:[%s1897 + $0x10] sm:$0xee]
        %2994 = vst [vmem:[#allocation1] sm:$0xff] %v2990
        %s2995 = scalar_lea.vmem [#allocation1], 1
        %v2996 = vld [vmem:[%s2995] ss:$4 sm:$0xff]
        %s2997 = scalar_lea.vmem [#allocation1], 2
        %v2998 = vld [vmem:[%s2997] ss:$4 sm:$0xff]
        %s2999 = scalar_lea.vmem [#allocation1], 3
        %v3000 = vld [vmem:[%s2999] ss:$4 sm:$0xff]
        %3002 = vst [vmem:[#allocation1 + $0x20] sm:$0xff] %v2991
        %s3003 = scalar_lea.vmem [#allocation1], 33
        %v3004 = vld [vmem:[%s3003] ss:$4 sm:$0xff]
        %s3005 = scalar_lea.vmem [#allocation1], 34
        %v3006 = vld [vmem:[%s3005] ss:$4 sm:$0xff]
        %s3007 = scalar_lea.vmem [#allocation1], 35
        %v3008 = vld [vmem:[%s3007] ss:$4 sm:$0xff]
        %3010 = vst [vmem:[#allocation1] sm:$0xff] %v2992
        %v3011 = vld [vmem:[%s2995] ss:$4 sm:$0xff]
        %v3012 = vld [vmem:[%s2997] ss:$4 sm:$0xff]
        %v3013 = vld [vmem:[%s2999] ss:$4 sm:$0xff]
        %s3014 = scalar_lea.vmem [#allocation4], 1920
        %v3015 = vld [vmem:[%s3014] sm:$0xff]
        %v3016 = vld [vmem:[%s3014 + $0x8] sm:$0xf]
        %v3017 = vld [vmem:[%s3014 + $0xc] sm:$0xff]
        %v3018 = vld [vmem:[%s3014 + $0x14] sm:$0xf]
        %v3019 = vld [vmem:[%s3014 + $0x18] sm:$0xff]
        %v3020 = vld [vmem:[%s3014 + $0x20] sm:$0xf]
        %v3021 = vld [vmem:[%s3014 + $0x24] sm:$0xff]
        %v3022 = vld [vmem:[%s3014 + $0x2c] sm:$0xf]
        %v3023 = vld [vmem:[%s3014 + $0x30] sm:$0xff]
        %v3024 = vld [vmem:[%s3014 + $0x38] sm:$0xf]
        %v3025 = vld [vmem:[%s3014 + $0x3c] sm:$0xff]
        %v3026 = vld [vmem:[%s3014 + $0x44] sm:$0xf]
        %v3027 = vld [vmem:[%s3014 + $0x48] sm:$0xff]
        %v3028 = vld [vmem:[%s3014 + $0x50] sm:$0xf]
        %v3029 = vld [vmem:[%s3014 + $0x54] sm:$0xff]
        %v3030 = vld [vmem:[%s3014 + $0x5c] sm:$0xf]
        %v3031 = vld [vmem:[%s3014 + $0x60] sm:$0xff]
        %v3032 = vld [vmem:[%s3014 + $0x68] sm:$0xf]
        %v3033 = vld [vmem:[%s3014 + $0x6c] sm:$0xff]
        %v3034 = vld [vmem:[%s3014 + $0x74] sm:$0xf]
        %v3035 = vld [vmem:[%s3014 + $0x78] sm:$0xff]
        %v3036 = vld [vmem:[%s3014 + $0x80] sm:$0xf]
        %v3037 = vld [vmem:[%s3014 + $0x84] sm:$0xff]
        %v3038 = vld [vmem:[%s3014 + $0x8c] sm:$0xf]
        %v3039 = vld [vmem:[%s3014 + $0x90] sm:$0xff]
        %v3040 = vld [vmem:[%s3014 + $0x98] sm:$0xf]
        %v3041 = vld [vmem:[%s3014 + $0x9c] sm:$0xff]
        %v3042 = vld [vmem:[%s3014 + $0xa4] sm:$0xf]
        %v3043 = vld [vmem:[%s3014 + $0xa8] sm:$0xff]
        %v3044 = vld [vmem:[%s3014 + $0xb0] sm:$0xf]
        %v3045 = vld [vmem:[%s3014 + $0xb4] sm:$0xff]
        %v3046 = vld [vmem:[%s3014 + $0xbc] sm:$0xf]
        %v3047 = vld [vmem:[%s3014 + $0xc0] sm:$0xff]
        %v3048 = vld [vmem:[%s3014 + $0xc8] sm:$0xf]
        %v3049 = vld [vmem:[%s3014 + $0xcc] sm:$0xff]
        %v3050 = vld [vmem:[%s3014 + $0xd4] sm:$0xf]
        %v3051 = vld [vmem:[%s3014 + $0xd8] sm:$0xff]
        %v3052 = vld [vmem:[%s3014 + $0xe0] sm:$0xf]
        %v3053 = vld [vmem:[%s3014 + $0xe4] sm:$0xff]
        %v3054 = vld [vmem:[%s3014 + $0xec] sm:$0xf]
        %v3055 = vld [vmem:[%s3014 + $0xf0] sm:$0xff]
        %v3056 = vld [vmem:[%s3014 + $0xf8] sm:$0xf]
        %v3057 = vld [vmem:[%s3014 + $0xfc] sm:$0xff]
        %v3058 = vld [vmem:[%s3014 + $0x104] sm:$0xf]
        %v3059 = vld [vmem:[%s3014 + $0x108] sm:$0xff]
        %v3060 = vld [vmem:[%s3014 + $0x110] sm:$0xf]
        %v3061 = vld [vmem:[%s3014 + $0x114] sm:$0xff]
        %v3062 = vld [vmem:[%s3014 + $0x11c] sm:$0xf]
        %v3063 = vld [vmem:[%s3014 + $0x120] sm:$0xff]
        %v3064 = vld [vmem:[%s3014 + $0x128] sm:$0xf]
        %v3065 = vld [vmem:[%s3014 + $0x12c] sm:$0xff]
        %v3066 = vld [vmem:[%s3014 + $0x134] sm:$0xf]
        %v3067 = vld [vmem:[%s3014 + $0x138] sm:$0xff]
        %v3068 = vld [vmem:[%s3014 + $0x140] sm:$0xf]
        %v3069 = vld [vmem:[%s3014 + $0x144] sm:$0xff]
        %v3070 = vld [vmem:[%s3014 + $0x14c] sm:$0xf]
        %v3071 = vld [vmem:[%s3014 + $0x150] sm:$0xff]
        %v3072 = vld [vmem:[%s3014 + $0x158] sm:$0xf]
        %v3073 = vld [vmem:[%s3014 + $0x15c] sm:$0xff]
        %v3074 = vld [vmem:[%s3014 + $0x164] sm:$0xf]
        %v3075 = vld [vmem:[%s3014 + $0x168] sm:$0xff]
        %v3076 = vld [vmem:[%s3014 + $0x170] sm:$0xf]
        %v3077 = vld [vmem:[%s3014 + $0x174] sm:$0xff]
        %v3078 = vld [vmem:[%s3014 + $0x17c] sm:$0xf]
        %3079 = vst [vmem:[#allocation1] ss:$9 sm:$0xff] %v2996
        %s3080 = scalar_lea.vmem [#allocation1], 1
        %3081 = vst [vmem:[%s3080] ss:$9 sm:$0xff] %v2998
        %s3082 = scalar_lea.vmem [#allocation1], 2
        %3083 = vst [vmem:[%s3082] ss:$9 sm:$0xff] %v3000
        %s3084 = scalar_lea.vmem [#allocation1], 3
        %3085 = vst [vmem:[%s3084] ss:$9 sm:$0xff] %v3004
        %s3086 = scalar_lea.vmem [#allocation1], 4
        %3087 = vst [vmem:[%s3086] ss:$9 sm:$0xff] %v3006
        %s3088 = scalar_lea.vmem [#allocation1], 5
        %3089 = vst [vmem:[%s3088] ss:$9 sm:$0xff] %v3008
        %s3090 = scalar_lea.vmem [#allocation1], 6
        %3091 = vst [vmem:[%s3090] ss:$9 sm:$0xff] %v3011
        %s3092 = scalar_lea.vmem [#allocation1], 7
        %3093 = vst [vmem:[%s3092] ss:$9 sm:$0xff] %v3012
        %v3094 = vld [vmem:[#allocation1] sm:$0xff]
        %v3095 = vld [vmem:[#allocation1 + $0x9] sm:$0xff]
        %3096 = vst [vmem:[#allocation1] ss:$9 sm:$0xff] %v3013
        %v3097 = vld [vmem:[#allocation1] sm:$0xff]
        %v3098 = vld [vmem:[#allocation1 + $0x9] sm:$0xff]
        %v3167 = vunpack.c.l.b16 %v3015
        %v3168 = vunpack.c.h.b16 %v3015
        %v3169 = vunpack.c.l.b16 %v3016
        %v3170 = vunpack.c.l.b16 %v3017
        %v3171 = vunpack.c.h.b16 %v3017
        %v3172 = vunpack.c.l.b16 %v3018
        %v3173 = vunpack.c.l.b16 %v3019
        %v3174 = vunpack.c.h.b16 %v3019
        %v3175 = vunpack.c.l.b16 %v3020
        %v3176 = vunpack.c.l.b16 %v3021
        %v3177 = vunpack.c.h.b16 %v3021
        %v3178 = vunpack.c.l.b16 %v3022
        %v3179 = vunpack.c.l.b16 %v3023
        %v3180 = vunpack.c.h.b16 %v3023
        %v3181 = vunpack.c.l.b16 %v3024
        %v3182 = vunpack.c.l.b16 %v3025
        %v3183 = vunpack.c.h.b16 %v3025
        %v3184 = vunpack.c.l.b16 %v3026
        %v3185 = vunpack.c.l.b16 %v3027
        %v3186 = vunpack.c.h.b16 %v3027
        %v3187 = vunpack.c.l.b16 %v3028
        %v3188 = vunpack.c.l.b16 %v3029
        %v3189 = vunpack.c.h.b16 %v3029
        %v3190 = vunpack.c.l.b16 %v3030
        %v3191 = vunpack.c.l.b16 %v3031
        %v3192 = vunpack.c.h.b16 %v3031
        %v3193 = vunpack.c.l.b16 %v3032
        %v3194 = vunpack.c.l.b16 %v3033
        %v3195 = vunpack.c.h.b16 %v3033
        %v3196 = vunpack.c.l.b16 %v3034
        %v3197 = vunpack.c.l.b16 %v3035
        %v3198 = vunpack.c.h.b16 %v3035
        %v3199 = vunpack.c.l.b16 %v3036
        %v3200 = vunpack.c.l.b16 %v3037
        %v3201 = vunpack.c.h.b16 %v3037
        %v3202 = vunpack.c.l.b16 %v3038
        %v3203 = vunpack.c.l.b16 %v3039
        %v3204 = vunpack.c.h.b16 %v3039
        %v3205 = vunpack.c.l.b16 %v3040
        %v3206 = vunpack.c.l.b16 %v3041
        %v3207 = vunpack.c.h.b16 %v3041
        %v3208 = vunpack.c.l.b16 %v3042
        %v3209 = vunpack.c.l.b16 %v3043
        %v3210 = vunpack.c.h.b16 %v3043
        %v3211 = vunpack.c.l.b16 %v3044
        %v3212 = vunpack.c.l.b16 %v3045
        %v3213 = vunpack.c.h.b16 %v3045
        %v3214 = vunpack.c.l.b16 %v3046
        %v3215 = vunpack.c.l.b16 %v3047
        %v3216 = vunpack.c.h.b16 %v3047
        %v3217 = vunpack.c.l.b16 %v3048
        %v3218 = vunpack.c.l.b16 %v3049
        %v3219 = vunpack.c.h.b16 %v3049
        %v3220 = vunpack.c.l.b16 %v3050
        %v3221 = vunpack.c.l.b16 %v3051
        %v3222 = vunpack.c.h.b16 %v3051
        %v3223 = vunpack.c.l.b16 %v3052
        %v3224 = vunpack.c.l.b16 %v3053
        %v3225 = vunpack.c.h.b16 %v3053
        %v3226 = vunpack.c.l.b16 %v3054
        %v3227 = vunpack.c.l.b16 %v3055
        %v3228 = vunpack.c.h.b16 %v3055
        %v3229 = vunpack.c.l.b16 %v3056
        %v3230 = vunpack.c.l.b16 %v3057
        %v3231 = vunpack.c.h.b16 %v3057
        %v3232 = vunpack.c.l.b16 %v3058
        %v3233 = vunpack.c.l.b16 %v3059
        %v3234 = vunpack.c.h.b16 %v3059
        %v3235 = vunpack.c.l.b16 %v3060
        %v3236 = vunpack.c.l.b16 %v3061
        %v3237 = vunpack.c.h.b16 %v3061
        %v3238 = vunpack.c.l.b16 %v3062
        %v3239 = vunpack.c.l.b16 %v3063
        %v3240 = vunpack.c.h.b16 %v3063
        %v3241 = vunpack.c.l.b16 %v3064
        %v3242 = vunpack.c.l.b16 %v3065
        %v3243 = vunpack.c.h.b16 %v3065
        %v3244 = vunpack.c.l.b16 %v3066
        %v3245 = vunpack.c.l.b16 %v3067
        %v3246 = vunpack.c.h.b16 %v3067
        %v3247 = vunpack.c.l.b16 %v3068
        %v3248 = vunpack.c.l.b16 %v3069
        %v3249 = vunpack.c.h.b16 %v3069
        %v3250 = vunpack.c.l.b16 %v3070
        %v3251 = vunpack.c.l.b16 %v3071
        %v3252 = vunpack.c.h.b16 %v3071
        %v3253 = vunpack.c.l.b16 %v3072
        %v3254 = vunpack.c.l.b16 %v3073
        %v3255 = vunpack.c.h.b16 %v3073
        %v3256 = vunpack.c.l.b16 %v3074
        %v3257 = vunpack.c.l.b16 %v3075
        %v3258 = vunpack.c.h.b16 %v3075
        %v3259 = vunpack.c.l.b16 %v3076
        %v3260 = vunpack.c.l.b16 %v3077
        %v3261 = vunpack.c.h.b16 %v3077
        %v3262 = vunpack.c.l.b16 %v3078
        %v3263 = vpack.c.b16 %v3170, %v3167
        %v3264 = vpack.c.b16 %v3171, %v3168
        %v3265 = vpack.c.b16 %v3172, %v3169
        %v3266 = vpack.c.b16 %v3176, %v3173
        %v3267 = vpack.c.b16 %v3177, %v3174
        %v3268 = vpack.c.b16 %v3178, %v3175
        %v3269 = vpack.c.b16 %v3182, %v3179
        %v3270 = vpack.c.b16 %v3183, %v3180
        %v3271 = vpack.c.b16 %v3184, %v3181
        %v3272 = vpack.c.b16 %v3188, %v3185
        %v3273 = vpack.c.b16 %v3189, %v3186
        %v3274 = vpack.c.b16 %v3190, %v3187
        %v3275 = vpack.c.b16 %v3194, %v3191
        %v3276 = vpack.c.b16 %v3195, %v3192
        %v3277 = vpack.c.b16 %v3196, %v3193
        %v3278 = vpack.c.b16 %v3200, %v3197
        %v3279 = vpack.c.b16 %v3201, %v3198
        %v3280 = vpack.c.b16 %v3202, %v3199
        %v3281 = vpack.c.b16 %v3206, %v3203
        %v3282 = vpack.c.b16 %v3207, %v3204
        %v3283 = vpack.c.b16 %v3208, %v3205
        %v3284 = vpack.c.b16 %v3212, %v3209
        %v3285 = vpack.c.b16 %v3213, %v3210
        %v3286 = vpack.c.b16 %v3214, %v3211
        %v3287 = vpack.c.b16 %v3218, %v3215
        %v3288 = vpack.c.b16 %v3219, %v3216
        %v3289 = vpack.c.b16 %v3220, %v3217
        %v3290 = vpack.c.b16 %v3224, %v3221
        %v3291 = vpack.c.b16 %v3225, %v3222
        %v3292 = vpack.c.b16 %v3226, %v3223
        %v3293 = vpack.c.b16 %v3230, %v3227
        %v3294 = vpack.c.b16 %v3231, %v3228
        %v3295 = vpack.c.b16 %v3232, %v3229
        %v3296 = vpack.c.b16 %v3236, %v3233
        %v3297 = vpack.c.b16 %v3237, %v3234
        %v3298 = vpack.c.b16 %v3238, %v3235
        %v3299 = vpack.c.b16 %v3242, %v3239
        %v3300 = vpack.c.b16 %v3243, %v3240
        %v3301 = vpack.c.b16 %v3244, %v3241
        %v3302 = vpack.c.b16 %v3248, %v3245
        %v3303 = vpack.c.b16 %v3249, %v3246
        %v3304 = vpack.c.b16 %v3250, %v3247
        %v3305 = vpack.c.b16 %v3254, %v3251
        %v3306 = vpack.c.b16 %v3255, %v3252
        %v3307 = vpack.c.b16 %v3256, %v3253
        %v3308 = vpack.c.b16 %v3260, %v3257
        %v3309 = vpack.c.b16 %v3261, %v3258
        %v3310 = vpack.c.b16 %v3262, %v3259
        %3359 = vmatpush.bf16.msra.mxu0 %v3284
        %3360 = vmatpush.bf16.msra.mxu0 %v3281
        %3361 = vmatpush.bf16.msra.mxu0 %v3278
        %3362 = vmatpush.bf16.msra.mxu0 %v3275
        %3363 = vmatpush.bf16.msra.mxu0 %v3272
        %3364 = vmatpush.bf16.msra.mxu0 %v3269
        %3365 = vmatpush.bf16.msra.mxu0 %v3266
        %3366 = vmatpush.bf16.msra.mxu0 %v3263
        %3367 = vmatmul.bf16.gmra.mxu0 %v3094
        %v3368 = vpop.f32.mrf.mxu0
        %v3369 = vadd.f32 0.0, %v3368
        %v3370 = vpop.f32.mrf.mxu0
        %v3371 = vadd.f32 0.0, %v3370
        %3372 = vmatmul.bf16.gmra.mxu0 %v3097
        %v3373 = vpop.f32.mrf.mxu0
        %v3374 = vadd.f32 0.0, %v3373
        %v3375 = vpop.f32.mrf.mxu0
        %3376 = vdwg.mxu0
        %3377 = vmatpush.bf16.msra.mxu0 %v3308
        %3378 = vmatpush.bf16.msra.mxu0 %v3305
        %3379 = vmatpush.bf16.msra.mxu0 %v3302
        %3380 = vmatpush.bf16.msra.mxu0 %v3299
        %3381 = vmatpush.bf16.msra.mxu0 %v3296
        %3382 = vmatpush.bf16.msra.mxu0 %v3293
        %3383 = vmatpush.bf16.msra.mxu0 %v3290
        %3384 = vmatpush.bf16.msra.mxu0 %v3287
        %3385 = vmatmul.bf16.gmra.mxu0 %v3095
        %v3386 = vpop.f32.mrf.mxu0
        %v3387 = vadd.f32 %v3369, %v3386
        %v3388 = vpop.f32.mrf.mxu0
        %v3389 = vadd.f32 %v3371, %v3388
        %3390 = vmatmul.bf16.gmra.mxu0 %v3098
        %v3391 = vpop.f32.mrf.mxu0
        %v3392 = vadd.f32 %v3374, %v3391
        %v3393 = vpop.f32.mrf.mxu0
        %3394 = vdwg.mxu0
        %3395 = vmatpush.bf16.msra.mxu0 %v3285
        %3396 = vmatpush.bf16.msra.mxu0 %v3282
        %3397 = vmatpush.bf16.msra.mxu0 %v3279
        %3398 = vmatpush.bf16.msra.mxu0 %v3276
        %3399 = vmatpush.bf16.msra.mxu0 %v3273
        %3400 = vmatpush.bf16.msra.mxu0 %v3270
        %3401 = vmatpush.bf16.msra.mxu0 %v3267
        %3402 = vmatpush.bf16.msra.mxu0 %v3264
        %3403 = vmatmul.bf16.gmra.mxu0 %v3094
        %v3404 = vpop.f32.mrf.mxu0
        %v3405 = vadd.f32 0.0, %v3404
        %v3406 = vpop.f32.mrf.mxu0
        %v3407 = vadd.f32 0.0, %v3406
        %3408 = vmatmul.bf16.gmra.mxu0 %v3097
        %v3409 = vpop.f32.mrf.mxu0
        %v3410 = vadd.f32 0.0, %v3409
        %v3411 = vpop.f32.mrf.mxu0
        %3412 = vdwg.mxu0
        %3413 = vmatpush.bf16.msra.mxu0 %v3309
        %3414 = vmatpush.bf16.msra.mxu0 %v3306
        %3415 = vmatpush.bf16.msra.mxu0 %v3303
        %3416 = vmatpush.bf16.msra.mxu0 %v3300
        %3417 = vmatpush.bf16.msra.mxu0 %v3297
        %3418 = vmatpush.bf16.msra.mxu0 %v3294
        %3419 = vmatpush.bf16.msra.mxu0 %v3291
        %3420 = vmatpush.bf16.msra.mxu0 %v3288
        %3421 = vmatmul.bf16.gmra.mxu0 %v3095
        %v3422 = vpop.f32.mrf.mxu0
        %v3423 = vadd.f32 %v3405, %v3422
        %v3424 = vpop.f32.mrf.mxu0
        %v3425 = vadd.f32 %v3407, %v3424
        %3426 = vmatmul.bf16.gmra.mxu0 %v3098
        %v3427 = vpop.f32.mrf.mxu0
        %v3428 = vadd.f32 %v3410, %v3427
        %v3429 = vpop.f32.mrf.mxu0
        %3430 = vdwg.mxu0
        %3431 = vmatpush.bf16.msra.mxu0 %v3286
        %3432 = vmatpush.bf16.msra.mxu0 %v3283
        %3433 = vmatpush.bf16.msra.mxu0 %v3280
        %3434 = vmatpush.bf16.msra.mxu0 %v3277
        %3435 = vmatpush.bf16.msra.mxu0 %v3274
        %3436 = vmatpush.bf16.msra.mxu0 %v3271
        %3437 = vmatpush.bf16.msra.mxu0 %v3268
        %3438 = vmatpush.bf16.msra.mxu0 %v3265
        %3439 = vmatmul.bf16.gmra.mxu0 %v3094
        %v3440 = vpop.f32.mrf.mxu0
        %v3441 = vadd.f32 0.0, %v3440
        %v3442 = vpop.f32.mrf.mxu0
        %v3443 = vadd.f32 0.0, %v3442
        %3444 = vmatmul.bf16.gmra.mxu0 %v3097
        %v3445 = vpop.f32.mrf.mxu0
        %v3446 = vadd.f32 0.0, %v3445
        %v3447 = vpop.f32.mrf.mxu0
        %3448 = vdwg.mxu0
        %3449 = vmatpush.bf16.msra.mxu0 %v3310
        %3450 = vmatpush.bf16.msra.mxu0 %v3307
        %3451 = vmatpush.bf16.msra.mxu0 %v3304
        %3452 = vmatpush.bf16.msra.mxu0 %v3301
        %3453 = vmatpush.bf16.msra.mxu0 %v3298
        %3454 = vmatpush.bf16.msra.mxu0 %v3295
        %3455 = vmatpush.bf16.msra.mxu0 %v3292
        %3456 = vmatpush.bf16.msra.mxu0 %v3289
        %3457 = vmatmul.bf16.gmra.mxu0 %v3095
        %v3458 = vpop.f32.mrf.mxu0
        %v3459 = vadd.f32 %v3441, %v3458
        %v3460 = vpop.f32.mrf.mxu0
        %v3461 = vadd.f32 %v3443, %v3460
        %3462 = vmatmul.bf16.gmra.mxu0 %v3098
        %v3463 = vpop.f32.mrf.mxu0
        %v3464 = vadd.f32 %v3446, %v3463
        %v3465 = vpop.f32.mrf.mxu0
        %3466 = vdwg.mxu0
        %v3467 = vadd.f32 %v2981, %v3387
        %v3468 = vadd.f32 %v2982, %v3423
        %v3469 = vadd.f32 %v2983, %v3459
        %v3470 = vadd.f32 %v2984, %v3389
        %v3471 = vadd.f32 %v2985, %v3425
        %v3472 = vadd.f32 %v2986, %v3461
        %v3473 = vadd.f32 %v2987, %v3392
        %v3474 = vadd.f32 %v2988, %v3428
        %v3475 = vadd.f32 %v2989, %v3464
        %s3476 = sadd.s32 %s312, 2
        %s3477 = smul.u32 %s3476, 2
        %s3478 = smul.addr %s3477, 4
        %s3479 = scalar_lea.vmem %s241, %s3478 [#allocation2]
        %v3480 = vld [vmem:[%s3479] sm:$0x77]
        %v3481 = vld [vmem:[%s3479 + $0x8] sm:$0x77]
        %v3482 = vld [vmem:[%s3479 + $0x10] sm:$0x77]
        %v3486 = vrot.slane %v3480, 3
        %v3487 = vrot.slane %v3481, 3
        %v3488 = vrot.slane %v3482, 3
        %v3491 = vsel %vm325, %v3480, %v3486
        %v3492 = vsel %vm329, %v3480, %v3486
        %v3494 = vrot.slane %v3492, 1
        %v3495 = vsel %vm333, %v3480, %v3486
        %v3497 = vrot.slane %v3495, 2
        %v3500 = vsel %vm325, %v3481, %v3487
        %v3501 = vsel %vm329, %v3481, %v3487
        %v3503 = vrot.slane %v3501, 1
        %v3504 = vsel %vm333, %v3481, %v3487
        %v3506 = vrot.slane %v3504, 2
        %v3509 = vsel %vm325, %v3482, %v3488
        %v3510 = vsel %vm329, %v3482, %v3488
        %v3512 = vrot.slane %v3510, 1
        %v3513 = vsel %vm333, %v3482, %v3488
        %v3515 = vrot.slane %v3513, 2
        %s3516 = scalar_lea.vmem [#allocation4], 2304
        %v3517 = vld [vmem:[%s3516] sm:$0xff]
        %v3518 = vld [vmem:[%s3516 + $0x8] sm:$0xf]
        %v3519 = vld [vmem:[%s3516 + $0xc] sm:$0xff]
        %v3520 = vld [vmem:[%s3516 + $0x14] sm:$0xf]
        %v3521 = vld [vmem:[%s3516 + $0x18] sm:$0xff]
        %v3522 = vld [vmem:[%s3516 + $0x20] sm:$0xf]
        %v3523 = vld [vmem:[%s3516 + $0x24] sm:$0xff]
        %v3524 = vld [vmem:[%s3516 + $0x2c] sm:$0xf]
        %v3525 = vld [vmem:[%s3516 + $0x30] sm:$0xff]
        %v3526 = vld [vmem:[%s3516 + $0x38] sm:$0xf]
        %v3527 = vld [vmem:[%s3516 + $0x3c] sm:$0xff]
        %v3528 = vld [vmem:[%s3516 + $0x44] sm:$0xf]
        %v3529 = vld [vmem:[%s3516 + $0x48] sm:$0xff]
        %v3530 = vld [vmem:[%s3516 + $0x50] sm:$0xf]
        %v3531 = vld [vmem:[%s3516 + $0x54] sm:$0xff]
        %v3532 = vld [vmem:[%s3516 + $0x5c] sm:$0xf]
        %v3533 = vld [vmem:[%s3516 + $0x60] sm:$0xff]
        %v3534 = vld [vmem:[%s3516 + $0x68] sm:$0xf]
        %v3535 = vld [vmem:[%s3516 + $0x6c] sm:$0xff]
        %v3536 = vld [vmem:[%s3516 + $0x74] sm:$0xf]
        %v3537 = vld [vmem:[%s3516 + $0x78] sm:$0xff]
        %v3538 = vld [vmem:[%s3516 + $0x80] sm:$0xf]
        %v3539 = vld [vmem:[%s3516 + $0x84] sm:$0xff]
        %v3540 = vld [vmem:[%s3516 + $0x8c] sm:$0xf]
        %v3541 = vld [vmem:[%s3516 + $0x90] sm:$0xff]
        %v3542 = vld [vmem:[%s3516 + $0x98] sm:$0xf]
        %v3543 = vld [vmem:[%s3516 + $0x9c] sm:$0xff]
        %v3544 = vld [vmem:[%s3516 + $0xa4] sm:$0xf]
        %v3545 = vld [vmem:[%s3516 + $0xa8] sm:$0xff]
        %v3546 = vld [vmem:[%s3516 + $0xb0] sm:$0xf]
        %v3547 = vld [vmem:[%s3516 + $0xb4] sm:$0xff]
        %v3548 = vld [vmem:[%s3516 + $0xbc] sm:$0xf]
        %v3549 = vld [vmem:[%s3516 + $0xc0] sm:$0xff]
        %v3550 = vld [vmem:[%s3516 + $0xc8] sm:$0xf]
        %v3551 = vld [vmem:[%s3516 + $0xcc] sm:$0xff]
        %v3552 = vld [vmem:[%s3516 + $0xd4] sm:$0xf]
        %v3553 = vld [vmem:[%s3516 + $0xd8] sm:$0xff]
        %v3554 = vld [vmem:[%s3516 + $0xe0] sm:$0xf]
        %v3555 = vld [vmem:[%s3516 + $0xe4] sm:$0xff]
        %v3556 = vld [vmem:[%s3516 + $0xec] sm:$0xf]
        %v3557 = vld [vmem:[%s3516 + $0xf0] sm:$0xff]
        %v3558 = vld [vmem:[%s3516 + $0xf8] sm:$0xf]
        %v3559 = vld [vmem:[%s3516 + $0xfc] sm:$0xff]
        %v3560 = vld [vmem:[%s3516 + $0x104] sm:$0xf]
        %v3561 = vld [vmem:[%s3516 + $0x108] sm:$0xff]
        %v3562 = vld [vmem:[%s3516 + $0x110] sm:$0xf]
        %v3563 = vld [vmem:[%s3516 + $0x114] sm:$0xff]
        %v3564 = vld [vmem:[%s3516 + $0x11c] sm:$0xf]
        %v3565 = vld [vmem:[%s3516 + $0x120] sm:$0xff]
        %v3566 = vld [vmem:[%s3516 + $0x128] sm:$0xf]
        %v3567 = vld [vmem:[%s3516 + $0x12c] sm:$0xff]
        %v3568 = vld [vmem:[%s3516 + $0x134] sm:$0xf]
        %v3569 = vld [vmem:[%s3516 + $0x138] sm:$0xff]
        %v3570 = vld [vmem:[%s3516 + $0x140] sm:$0xf]
        %v3571 = vld [vmem:[%s3516 + $0x144] sm:$0xff]
        %v3572 = vld [vmem:[%s3516 + $0x14c] sm:$0xf]
        %v3573 = vld [vmem:[%s3516 + $0x150] sm:$0xff]
        %v3574 = vld [vmem:[%s3516 + $0x158] sm:$0xf]
        %v3575 = vld [vmem:[%s3516 + $0x15c] sm:$0xff]
        %v3576 = vld [vmem:[%s3516 + $0x164] sm:$0xf]
        %v3577 = vld [vmem:[%s3516 + $0x168] sm:$0xff]
        %v3578 = vld [vmem:[%s3516 + $0x170] sm:$0xf]
        %v3579 = vld [vmem:[%s3516 + $0x174] sm:$0xff]
        %v3580 = vld [vmem:[%s3516 + $0x17c] sm:$0xf]
        %3581 = vst [vmem:[#allocation1] ss:$9 sm:$0xff] %v3491
        %s3583 = scalar_lea.vmem [#allocation1], 1
        %3584 = vst [vmem:[%s3583] ss:$9 sm:$0xff] %v3494
        %s3586 = scalar_lea.vmem [#allocation1], 2
        %3587 = vst [vmem:[%s3586] ss:$9 sm:$0xff] %v3497
        %s3588 = scalar_lea.vmem [#allocation1], 3
        %3589 = vst [vmem:[%s3588] ss:$9 sm:$0xff] %v3500
        %s3591 = scalar_lea.vmem [#allocation1], 4
        %3592 = vst [vmem:[%s3591] ss:$9 sm:$0xff] %v3503
        %s3594 = scalar_lea.vmem [#allocation1], 5
        %3595 = vst [vmem:[%s3594] ss:$9 sm:$0xff] %v3506
        %s3596 = scalar_lea.vmem [#allocation1], 6
        %3597 = vst [vmem:[%s3596] ss:$9 sm:$0xff] %v3509
        %s3599 = scalar_lea.vmem [#allocation1], 7
        %3600 = vst [vmem:[%s3599] ss:$9 sm:$0xff] %v3512
        %v3601 = vld [vmem:[#allocation1] sm:$0xff]
        %v3602 = vld [vmem:[#allocation1 + $0x9] sm:$0xff]
        %3604 = vst [vmem:[#allocation1] ss:$9 sm:$0xff] %v3515
        %v3605 = vld [vmem:[#allocation1] sm:$0xff]
        %v3606 = vld [vmem:[#allocation1 + $0x9] sm:$0xff]
        %v3675 = vunpack.c.l.b16 %v3517
        %v3676 = vunpack.c.h.b16 %v3517
        %v3677 = vunpack.c.l.b16 %v3518
        %v3678 = vunpack.c.l.b16 %v3519
        %v3679 = vunpack.c.h.b16 %v3519
        %v3680 = vunpack.c.l.b16 %v3520
        %v3681 = vunpack.c.l.b16 %v3521
        %v3682 = vunpack.c.h.b16 %v3521
        %v3683 = vunpack.c.l.b16 %v3522
        %v3684 = vunpack.c.l.b16 %v3523
        %v3685 = vunpack.c.h.b16 %v3523
        %v3686 = vunpack.c.l.b16 %v3524
        %v3687 = vunpack.c.l.b16 %v3525
        %v3688 = vunpack.c.h.b16 %v3525
        %v3689 = vunpack.c.l.b16 %v3526
        %v3690 = vunpack.c.l.b16 %v3527
        %v3691 = vunpack.c.h.b16 %v3527
        %v3692 = vunpack.c.l.b16 %v3528
        %v3693 = vunpack.c.l.b16 %v3529
        %v3694 = vunpack.c.h.b16 %v3529
        %v3695 = vunpack.c.l.b16 %v3530
        %v3696 = vunpack.c.l.b16 %v3531
        %v3697 = vunpack.c.h.b16 %v3531
        %v3698 = vunpack.c.l.b16 %v3532
        %v3699 = vunpack.c.l.b16 %v3533
        %v3700 = vunpack.c.h.b16 %v3533
        %v3701 = vunpack.c.l.b16 %v3534
        %v3702 = vunpack.c.l.b16 %v3535
        %v3703 = vunpack.c.h.b16 %v3535
        %v3704 = vunpack.c.l.b16 %v3536
        %v3705 = vunpack.c.l.b16 %v3537
        %v3706 = vunpack.c.h.b16 %v3537
        %v3707 = vunpack.c.l.b16 %v3538
        %v3708 = vunpack.c.l.b16 %v3539
        %v3709 = vunpack.c.h.b16 %v3539
        %v3710 = vunpack.c.l.b16 %v3540
        %v3711 = vunpack.c.l.b16 %v3541
        %v3712 = vunpack.c.h.b16 %v3541
        %v3713 = vunpack.c.l.b16 %v3542
        %v3714 = vunpack.c.l.b16 %v3543
        %v3715 = vunpack.c.h.b16 %v3543
        %v3716 = vunpack.c.l.b16 %v3544
        %v3717 = vunpack.c.l.b16 %v3545
        %v3718 = vunpack.c.h.b16 %v3545
        %v3719 = vunpack.c.l.b16 %v3546
        %v3720 = vunpack.c.l.b16 %v3547
        %v3721 = vunpack.c.h.b16 %v3547
        %v3722 = vunpack.c.l.b16 %v3548
        %v3723 = vunpack.c.l.b16 %v3549
        %v3724 = vunpack.c.h.b16 %v3549
        %v3725 = vunpack.c.l.b16 %v3550
        %v3726 = vunpack.c.l.b16 %v3551
        %v3727 = vunpack.c.h.b16 %v3551
        %v3728 = vunpack.c.l.b16 %v3552
        %v3729 = vunpack.c.l.b16 %v3553
        %v3730 = vunpack.c.h.b16 %v3553
        %v3731 = vunpack.c.l.b16 %v3554
        %v3732 = vunpack.c.l.b16 %v3555
        %v3733 = vunpack.c.h.b16 %v3555
        %v3734 = vunpack.c.l.b16 %v3556
        %v3735 = vunpack.c.l.b16 %v3557
        %v3736 = vunpack.c.h.b16 %v3557
        %v3737 = vunpack.c.l.b16 %v3558
        %v3738 = vunpack.c.l.b16 %v3559
        %v3739 = vunpack.c.h.b16 %v3559
        %v3740 = vunpack.c.l.b16 %v3560
        %v3741 = vunpack.c.l.b16 %v3561
        %v3742 = vunpack.c.h.b16 %v3561
        %v3743 = vunpack.c.l.b16 %v3562
        %v3744 = vunpack.c.l.b16 %v3563
        %v3745 = vunpack.c.h.b16 %v3563
        %v3746 = vunpack.c.l.b16 %v3564
        %v3747 = vunpack.c.l.b16 %v3565
        %v3748 = vunpack.c.h.b16 %v3565
        %v3749 = vunpack.c.l.b16 %v3566
        %v3750 = vunpack.c.l.b16 %v3567
        %v3751 = vunpack.c.h.b16 %v3567
        %v3752 = vunpack.c.l.b16 %v3568
        %v3753 = vunpack.c.l.b16 %v3569
        %v3754 = vunpack.c.h.b16 %v3569
        %v3755 = vunpack.c.l.b16 %v3570
        %v3756 = vunpack.c.l.b16 %v3571
        %v3757 = vunpack.c.h.b16 %v3571
        %v3758 = vunpack.c.l.b16 %v3572
        %v3759 = vunpack.c.l.b16 %v3573
        %v3760 = vunpack.c.h.b16 %v3573
        %v3761 = vunpack.c.l.b16 %v3574
        %v3762 = vunpack.c.l.b16 %v3575
        %v3763 = vunpack.c.h.b16 %v3575
        %v3764 = vunpack.c.l.b16 %v3576
        %v3765 = vunpack.c.l.b16 %v3577
        %v3766 = vunpack.c.h.b16 %v3577
        %v3767 = vunpack.c.l.b16 %v3578
        %v3768 = vunpack.c.l.b16 %v3579
        %v3769 = vunpack.c.h.b16 %v3579
        %v3770 = vunpack.c.l.b16 %v3580
        %v3771 = vpack.c.b16 %v3678, %v3675
        %v3772 = vpack.c.b16 %v3679, %v3676
        %v3773 = vpack.c.b16 %v3680, %v3677
        %v3774 = vpack.c.b16 %v3684, %v3681
        %v3775 = vpack.c.b16 %v3685, %v3682
        %v3776 = vpack.c.b16 %v3686, %v3683
        %v3777 = vpack.c.b16 %v3690, %v3687
        %v3778 = vpack.c.b16 %v3691, %v3688
        %v3779 = vpack.c.b16 %v3692, %v3689
        %v3780 = vpack.c.b16 %v3696, %v3693
        %v3781 = vpack.c.b16 %v3697, %v3694
        %v3782 = vpack.c.b16 %v3698, %v3695
        %v3783 = vpack.c.b16 %v3702, %v3699
        %v3784 = vpack.c.b16 %v3703, %v3700
        %v3785 = vpack.c.b16 %v3704, %v3701
        %v3786 = vpack.c.b16 %v3708, %v3705
        %v3787 = vpack.c.b16 %v3709, %v3706
        %v3788 = vpack.c.b16 %v3710, %v3707
        %v3789 = vpack.c.b16 %v3714, %v3711
        %v3790 = vpack.c.b16 %v3715, %v3712
        %v3791 = vpack.c.b16 %v3716, %v3713
        %v3792 = vpack.c.b16 %v3720, %v3717
        %v3793 = vpack.c.b16 %v3721, %v3718
        %v3794 = vpack.c.b16 %v3722, %v3719
        %v3795 = vpack.c.b16 %v3726, %v3723
        %v3796 = vpack.c.b16 %v3727, %v3724
        %v3797 = vpack.c.b16 %v3728, %v3725
        %v3798 = vpack.c.b16 %v3732, %v3729
        %v3799 = vpack.c.b16 %v3733, %v3730
        %v3800 = vpack.c.b16 %v3734, %v3731
        %v3801 = vpack.c.b16 %v3738, %v3735
        %v3802 = vpack.c.b16 %v3739, %v3736
        %v3803 = vpack.c.b16 %v3740, %v3737
        %v3804 = vpack.c.b16 %v3744, %v3741
        %v3805 = vpack.c.b16 %v3745, %v3742
        %v3806 = vpack.c.b16 %v3746, %v3743
        %v3807 = vpack.c.b16 %v3750, %v3747
        %v3808 = vpack.c.b16 %v3751, %v3748
        %v3809 = vpack.c.b16 %v3752, %v3749
        %v3810 = vpack.c.b16 %v3756, %v3753
        %v3811 = vpack.c.b16 %v3757, %v3754
        %v3812 = vpack.c.b16 %v3758, %v3755
        %v3813 = vpack.c.b16 %v3762, %v3759
        %v3814 = vpack.c.b16 %v3763, %v3760
        %v3815 = vpack.c.b16 %v3764, %v3761
        %v3816 = vpack.c.b16 %v3768, %v3765
        %v3817 = vpack.c.b16 %v3769, %v3766
        %v3818 = vpack.c.b16 %v3770, %v3767
        %3867 = vmatpush.bf16.msra.mxu0 %v3792
        %3868 = vmatpush.bf16.msra.mxu0 %v3789
        %3869 = vmatpush.bf16.msra.mxu0 %v3786
        %3870 = vmatpush.bf16.msra.mxu0 %v3783
        %3871 = vmatpush.bf16.msra.mxu0 %v3780
        %3872 = vmatpush.bf16.msra.mxu0 %v3777
        %3873 = vmatpush.bf16.msra.mxu0 %v3774
        %3874 = vmatpush.bf16.msra.mxu0 %v3771
        %3875 = vmatmul.bf16.gmra.mxu0 %v3601
        %v3876 = vpop.f32.mrf.mxu0
        %v3877 = vadd.f32 0.0, %v3876
        %v3878 = vpop.f32.mrf.mxu0
        %v3879 = vadd.f32 0.0, %v3878
        %3880 = vmatmul.bf16.gmra.mxu0 %v3605
        %v3881 = vpop.f32.mrf.mxu0
        %v3882 = vadd.f32 0.0, %v3881
        %v3883 = vpop.f32.mrf.mxu0
        %3884 = vdwg.mxu0
        %3885 = vmatpush.bf16.msra.mxu0 %v3816
        %3886 = vmatpush.bf16.msra.mxu0 %v3813
        %3887 = vmatpush.bf16.msra.mxu0 %v3810
        %3888 = vmatpush.bf16.msra.mxu0 %v3807
        %3889 = vmatpush.bf16.msra.mxu0 %v3804
        %3890 = vmatpush.bf16.msra.mxu0 %v3801
        %3891 = vmatpush.bf16.msra.mxu0 %v3798
        %3892 = vmatpush.bf16.msra.mxu0 %v3795
        %3893 = vmatmul.bf16.gmra.mxu0 %v3602
        %v3894 = vpop.f32.mrf.mxu0
        %v3895 = vadd.f32 %v3877, %v3894
        %v3896 = vpop.f32.mrf.mxu0
        %v3897 = vadd.f32 %v3879, %v3896
        %3898 = vmatmul.bf16.gmra.mxu0 %v3606
        %v3899 = vpop.f32.mrf.mxu0
        %v3900 = vadd.f32 %v3882, %v3899
        %v3901 = vpop.f32.mrf.mxu0
        %3902 = vdwg.mxu0
        %3903 = vmatpush.bf16.msra.mxu0 %v3793
        %3904 = vmatpush.bf16.msra.mxu0 %v3790
        %3905 = vmatpush.bf16.msra.mxu0 %v3787
        %3906 = vmatpush.bf16.msra.mxu0 %v3784
        %3907 = vmatpush.bf16.msra.mxu0 %v3781
        %3908 = vmatpush.bf16.msra.mxu0 %v3778
        %3909 = vmatpush.bf16.msra.mxu0 %v3775
        %3910 = vmatpush.bf16.msra.mxu0 %v3772
        %3911 = vmatmul.bf16.gmra.mxu0 %v3601
        %v3912 = vpop.f32.mrf.mxu0
        %v3913 = vadd.f32 0.0, %v3912
        %v3914 = vpop.f32.mrf.mxu0
        %v3915 = vadd.f32 0.0, %v3914
        %3916 = vmatmul.bf16.gmra.mxu0 %v3605
        %v3917 = vpop.f32.mrf.mxu0
        %v3918 = vadd.f32 0.0, %v3917
        %v3919 = vpop.f32.mrf.mxu0
        %3920 = vdwg.mxu0
        %3921 = vmatpush.bf16.msra.mxu0 %v3817
        %3922 = vmatpush.bf16.msra.mxu0 %v3814
        %3923 = vmatpush.bf16.msra.mxu0 %v3811
        %3924 = vmatpush.bf16.msra.mxu0 %v3808
        %3925 = vmatpush.bf16.msra.mxu0 %v3805
        %3926 = vmatpush.bf16.msra.mxu0 %v3802
        %3927 = vmatpush.bf16.msra.mxu0 %v3799
        %3928 = vmatpush.bf16.msra.mxu0 %v3796
        %3929 = vmatmul.bf16.gmra.mxu0 %v3602
        %v3930 = vpop.f32.mrf.mxu0
        %v3931 = vadd.f32 %v3913, %v3930
        %v3932 = vpop.f32.mrf.mxu0
        %v3933 = vadd.f32 %v3915, %v3932
        %3934 = vmatmul.bf16.gmra.mxu0 %v3606
        %v3935 = vpop.f32.mrf.mxu0
        %v3936 = vadd.f32 %v3918, %v3935
        %v3937 = vpop.f32.mrf.mxu0
        %3938 = vdwg.mxu0
        %3939 = vmatpush.bf16.msra.mxu0 %v3794
        %3940 = vmatpush.bf16.msra.mxu0 %v3791
        %3941 = vmatpush.bf16.msra.mxu0 %v3788
        %3942 = vmatpush.bf16.msra.mxu0 %v3785
        %3943 = vmatpush.bf16.msra.mxu0 %v3782
        %3944 = vmatpush.bf16.msra.mxu0 %v3779
        %3945 = vmatpush.bf16.msra.mxu0 %v3776
        %3946 = vmatpush.bf16.msra.mxu0 %v3773
        %3947 = vmatmul.bf16.gmra.mxu0 %v3601
        %v3948 = vpop.f32.mrf.mxu0
        %v3949 = vadd.f32 0.0, %v3948
        %v3950 = vpop.f32.mrf.mxu0
        %v3951 = vadd.f32 0.0, %v3950
        %3952 = vmatmul.bf16.gmra.mxu0 %v3605
        %v3953 = vpop.f32.mrf.mxu0
        %v3954 = vadd.f32 0.0, %v3953
        %v3955 = vpop.f32.mrf.mxu0
        %3956 = vdwg.mxu0
        %3957 = vmatpush.bf16.msra.mxu0 %v3818
        %3958 = vmatpush.bf16.msra.mxu0 %v3815
        %3959 = vmatpush.bf16.msra.mxu0 %v3812
        %3960 = vmatpush.bf16.msra.mxu0 %v3809
        %3961 = vmatpush.bf16.msra.mxu0 %v3806
        %3962 = vmatpush.bf16.msra.mxu0 %v3803
        %3963 = vmatpush.bf16.msra.mxu0 %v3800
        %3964 = vmatpush.bf16.msra.mxu0 %v3797
        %3965 = vmatmul.bf16.gmra.mxu0 %v3602
        %v3966 = vpop.f32.mrf.mxu0
        %v3967 = vadd.f32 %v3949, %v3966
        %v3968 = vpop.f32.mrf.mxu0
        %v3969 = vadd.f32 %v3951, %v3968
        %3970 = vmatmul.bf16.gmra.mxu0 %v3606
        %v3971 = vpop.f32.mrf.mxu0
        %v3972 = vadd.f32 %v3954, %v3971
        %v3973 = vpop.f32.mrf.mxu0
        %3974 = vdwg.mxu0
        %v3975 = vadd.f32 %v3467, %v3895
        %v3976 = vadd.f32 %v3468, %v3931
        %v3977 = vadd.f32 %v3469, %v3967
        %v3978 = vadd.f32 %v3470, %v3897
        %v3979 = vadd.f32 %v3471, %v3933
        %v3980 = vadd.f32 %v3472, %v3969
        %v3981 = vadd.f32 %v3473, %v3900
        %v3982 = vadd.f32 %v3474, %v3936
        %v3983 = vadd.f32 %v3475, %v3972
        %v3984 = vld [vmem:[%s3479] sm:$0xff]
        %v3985 = vld [vmem:[%s3479 + $0x8] sm:$0xff]
        %v3986 = vld [vmem:[%s3479 + $0x10] sm:$0xff]
        %v3990 = vrot.slane %v3984, 3
        %v3991 = vrot.slane %v3985, 3
        %v3992 = vrot.slane %v3986, 3
        %v3995 = vsel %vm325, %v3984, %v3990
        %v3996 = vsel %vm329, %v3984, %v3990
        %v3998 = vrot.slane %v3996, 1
        %v3999 = vsel %vm333, %v3984, %v3990
        %v4001 = vrot.slane %v3999, 2
        %v4002 = vsel %vm437, %v3984, %v3990
        %v4004 = vrot.slane %v4002, 3
        %v4007 = vsel %vm325, %v3985, %v3991
        %v4008 = vsel %vm329, %v3985, %v3991
        %v4010 = vrot.slane %v4008, 1
        %v4011 = vsel %vm333, %v3985, %v3991
        %v4013 = vrot.slane %v4011, 2
        %v4014 = vsel %vm437, %v3985, %v3991
        %v4016 = vrot.slane %v4014, 3
        %v4019 = vsel %vm325, %v3986, %v3992
        %v4020 = vsel %vm329, %v3986, %v3992
        %v4022 = vrot.slane %v4020, 1
        %v4023 = vsel %vm333, %v3986, %v3992
        %v4025 = vrot.slane %v4023, 2
        %v4026 = vsel %vm437, %v3986, %v3992
        %v4028 = vrot.slane %v4026, 3
        %v4029 = vshrl.u32 %v3995, 16
        %v4031 = vrot.slane %v4029, 7
        %v4032 = vrot.slane %v4031, 1
        %v4034 = vshll.u32 %v3998, 16
        %v4036 = vsel %vm479, %v4032, %v4034
        %v4037 = vshrl.u32 %v3998, 16
        %v4039 = vrot.slane %v4037, 7
        %v4040 = vrot.slane %v4039, 1
        %v4042 = vshll.u32 %v4001, 16
        %v4044 = vsel %vm479, %v4040, %v4042
        %v4045 = vshrl.u32 %v4001, 16
        %v4047 = vrot.slane %v4045, 7
        %v4048 = vrot.slane %v4047, 1
        %v4050 = vshll.u32 %v4004, 16
        %v4052 = vsel %vm479, %v4048, %v4050
        %v4053 = vshrl.u32 %v4007, 16
        %v4055 = vrot.slane %v4053, 7
        %v4056 = vrot.slane %v4055, 1
        %v4058 = vshll.u32 %v4010, 16
        %v4060 = vsel %vm479, %v4056, %v4058
        %v4061 = vshrl.u32 %v4010, 16
        %v4063 = vrot.slane %v4061, 7
        %v4064 = vrot.slane %v4063, 1
        %v4066 = vshll.u32 %v4013, 16
        %v4068 = vsel %vm479, %v4064, %v4066
        %v4069 = vshrl.u32 %v4013, 16
        %v4071 = vrot.slane %v4069, 7
        %v4072 = vrot.slane %v4071, 1
        %v4074 = vshll.u32 %v4016, 16
        %v4076 = vsel %vm479, %v4072, %v4074
        %v4077 = vshrl.u32 %v4019, 16
        %v4079 = vrot.slane %v4077, 7
        %v4080 = vrot.slane %v4079, 1
        %v4082 = vshll.u32 %v4022, 16
        %v4084 = vsel %vm479, %v4080, %v4082
        %v4085 = vshrl.u32 %v4022, 16
        %v4087 = vrot.slane %v4085, 7
        %v4088 = vrot.slane %v4087, 1
        %v4090 = vshll.u32 %v4025, 16
        %v4092 = vsel %vm479, %v4088, %v4090
        %v4093 = vshrl.u32 %v4025, 16
        %v4095 = vrot.slane %v4093, 7
        %v4096 = vrot.slane %v4095, 1
        %v4098 = vshll.u32 %v4028, 16
        %v4100 = vsel %vm479, %v4096, %v4098
        %s4101 = scalar_lea.vmem [#allocation4], 2688
        %v4102 = vld [vmem:[%s4101] sm:$0xff]
        %v4103 = vld [vmem:[%s4101 + $0x8] sm:$0xf]
        %v4104 = vld [vmem:[%s4101 + $0xc] sm:$0xff]
        %v4105 = vld [vmem:[%s4101 + $0x14] sm:$0xf]
        %v4106 = vld [vmem:[%s4101 + $0x18] sm:$0xff]
        %v4107 = vld [vmem:[%s4101 + $0x20] sm:$0xf]
        %v4108 = vld [vmem:[%s4101 + $0x24] sm:$0xff]
        %v4109 = vld [vmem:[%s4101 + $0x2c] sm:$0xf]
        %v4110 = vld [vmem:[%s4101 + $0x30] sm:$0xff]
        %v4111 = vld [vmem:[%s4101 + $0x38] sm:$0xf]
        %v4112 = vld [vmem:[%s4101 + $0x3c] sm:$0xff]
        %v4113 = vld [vmem:[%s4101 + $0x44] sm:$0xf]
        %v4114 = vld [vmem:[%s4101 + $0x48] sm:$0xff]
        %v4115 = vld [vmem:[%s4101 + $0x50] sm:$0xf]
        %v4116 = vld [vmem:[%s4101 + $0x54] sm:$0xff]
        %v4117 = vld [vmem:[%s4101 + $0x5c] sm:$0xf]
        %v4118 = vld [vmem:[%s4101 + $0x60] sm:$0xff]
        %v4119 = vld [vmem:[%s4101 + $0x68] sm:$0xf]
        %v4120 = vld [vmem:[%s4101 + $0x6c] sm:$0xff]
        %v4121 = vld [vmem:[%s4101 + $0x74] sm:$0xf]
        %v4122 = vld [vmem:[%s4101 + $0x78] sm:$0xff]
        %v4123 = vld [vmem:[%s4101 + $0x80] sm:$0xf]
        %v4124 = vld [vmem:[%s4101 + $0x84] sm:$0xff]
        %v4125 = vld [vmem:[%s4101 + $0x8c] sm:$0xf]
        %v4126 = vld [vmem:[%s4101 + $0x90] sm:$0xff]
        %v4127 = vld [vmem:[%s4101 + $0x98] sm:$0xf]
        %v4128 = vld [vmem:[%s4101 + $0x9c] sm:$0xff]
        %v4129 = vld [vmem:[%s4101 + $0xa4] sm:$0xf]
        %v4130 = vld [vmem:[%s4101 + $0xa8] sm:$0xff]
        %v4131 = vld [vmem:[%s4101 + $0xb0] sm:$0xf]
        %v4132 = vld [vmem:[%s4101 + $0xb4] sm:$0xff]
        %v4133 = vld [vmem:[%s4101 + $0xbc] sm:$0xf]
        %v4134 = vld [vmem:[%s4101 + $0xc0] sm:$0xff]
        %v4135 = vld [vmem:[%s4101 + $0xc8] sm:$0xf]
        %v4136 = vld [vmem:[%s4101 + $0xcc] sm:$0xff]
        %v4137 = vld [vmem:[%s4101 + $0xd4] sm:$0xf]
        %v4138 = vld [vmem:[%s4101 + $0xd8] sm:$0xff]
        %v4139 = vld [vmem:[%s4101 + $0xe0] sm:$0xf]
        %v4140 = vld [vmem:[%s4101 + $0xe4] sm:$0xff]
        %v4141 = vld [vmem:[%s4101 + $0xec] sm:$0xf]
        %v4142 = vld [vmem:[%s4101 + $0xf0] sm:$0xff]
        %v4143 = vld [vmem:[%s4101 + $0xf8] sm:$0xf]
        %v4144 = vld [vmem:[%s4101 + $0xfc] sm:$0xff]
        %v4145 = vld [vmem:[%s4101 + $0x104] sm:$0xf]
        %v4146 = vld [vmem:[%s4101 + $0x108] sm:$0xff]
        %v4147 = vld [vmem:[%s4101 + $0x110] sm:$0xf]
        %v4148 = vld [vmem:[%s4101 + $0x114] sm:$0xff]
        %v4149 = vld [vmem:[%s4101 + $0x11c] sm:$0xf]
        %v4150 = vld [vmem:[%s4101 + $0x120] sm:$0xff]
        %v4151 = vld [vmem:[%s4101 + $0x128] sm:$0xf]
        %v4152 = vld [vmem:[%s4101 + $0x12c] sm:$0xff]
        %v4153 = vld [vmem:[%s4101 + $0x134] sm:$0xf]
        %v4154 = vld [vmem:[%s4101 + $0x138] sm:$0xff]
        %v4155 = vld [vmem:[%s4101 + $0x140] sm:$0xf]
        %v4156 = vld [vmem:[%s4101 + $0x144] sm:$0xff]
        %v4157 = vld [vmem:[%s4101 + $0x14c] sm:$0xf]
        %v4158 = vld [vmem:[%s4101 + $0x150] sm:$0xff]
        %v4159 = vld [vmem:[%s4101 + $0x158] sm:$0xf]
        %v4160 = vld [vmem:[%s4101 + $0x15c] sm:$0xff]
        %v4161 = vld [vmem:[%s4101 + $0x164] sm:$0xf]
        %v4162 = vld [vmem:[%s4101 + $0x168] sm:$0xff]
        %v4163 = vld [vmem:[%s4101 + $0x170] sm:$0xf]
        %v4164 = vld [vmem:[%s4101 + $0x174] sm:$0xff]
        %v4165 = vld [vmem:[%s4101 + $0x17c] sm:$0xf]
        %4167 = vst [vmem:[#allocation1] ss:$9 sm:$0xff] %v4036
        %s4169 = scalar_lea.vmem [#allocation1], 1
        %4170 = vst [vmem:[%s4169] ss:$9 sm:$0xff] %v4044
        %s4172 = scalar_lea.vmem [#allocation1], 2
        %4173 = vst [vmem:[%s4172] ss:$9 sm:$0xff] %v4052
        %s4175 = scalar_lea.vmem [#allocation1], 3
        %4176 = vst [vmem:[%s4175] ss:$9 sm:$0xff] %v4060
        %s4178 = scalar_lea.vmem [#allocation1], 4
        %4179 = vst [vmem:[%s4178] ss:$9 sm:$0xff] %v4068
        %s4181 = scalar_lea.vmem [#allocation1], 5
        %4182 = vst [vmem:[%s4181] ss:$9 sm:$0xff] %v4076
        %s4184 = scalar_lea.vmem [#allocation1], 6
        %4185 = vst [vmem:[%s4184] ss:$9 sm:$0xff] %v4084
        %s4187 = scalar_lea.vmem [#allocation1], 7
        %4188 = vst [vmem:[%s4187] ss:$9 sm:$0xff] %v4092
        %v4189 = vld [vmem:[#allocation1] sm:$0xff]
        %v4190 = vld [vmem:[#allocation1 + $0x9] sm:$0xff]
        %4192 = vst [vmem:[#allocation1] ss:$9 sm:$0xff] %v4100
        %v4193 = vld [vmem:[#allocation1] sm:$0xff]
        %v4194 = vld [vmem:[#allocation1 + $0x9] sm:$0xff]
        %v4263 = vunpack.c.l.b16 %v4102
        %v4264 = vunpack.c.h.b16 %v4102
        %v4265 = vunpack.c.l.b16 %v4103
        %v4266 = vunpack.c.l.b16 %v4104
        %v4267 = vunpack.c.h.b16 %v4104
        %v4268 = vunpack.c.l.b16 %v4105
        %v4269 = vunpack.c.l.b16 %v4106
        %v4270 = vunpack.c.h.b16 %v4106
        %v4271 = vunpack.c.l.b16 %v4107
        %v4272 = vunpack.c.l.b16 %v4108
        %v4273 = vunpack.c.h.b16 %v4108
        %v4274 = vunpack.c.l.b16 %v4109
        %v4275 = vunpack.c.l.b16 %v4110
        %v4276 = vunpack.c.h.b16 %v4110
        %v4277 = vunpack.c.l.b16 %v4111
        %v4278 = vunpack.c.l.b16 %v4112
        %v4279 = vunpack.c.h.b16 %v4112
        %v4280 = vunpack.c.l.b16 %v4113
        %v4281 = vunpack.c.l.b16 %v4114
        %v4282 = vunpack.c.h.b16 %v4114
        %v4283 = vunpack.c.l.b16 %v4115
        %v4284 = vunpack.c.l.b16 %v4116
        %v4285 = vunpack.c.h.b16 %v4116
        %v4286 = vunpack.c.l.b16 %v4117
        %v4287 = vunpack.c.l.b16 %v4118
        %v4288 = vunpack.c.h.b16 %v4118
        %v4289 = vunpack.c.l.b16 %v4119
        %v4290 = vunpack.c.l.b16 %v4120
        %v4291 = vunpack.c.h.b16 %v4120
        %v4292 = vunpack.c.l.b16 %v4121
        %v4293 = vunpack.c.l.b16 %v4122
        %v4294 = vunpack.c.h.b16 %v4122
        %v4295 = vunpack.c.l.b16 %v4123
        %v4296 = vunpack.c.l.b16 %v4124
        %v4297 = vunpack.c.h.b16 %v4124
        %v4298 = vunpack.c.l.b16 %v4125
        %v4299 = vunpack.c.l.b16 %v4126
        %v4300 = vunpack.c.h.b16 %v4126
        %v4301 = vunpack.c.l.b16 %v4127
        %v4302 = vunpack.c.l.b16 %v4128
        %v4303 = vunpack.c.h.b16 %v4128
        %v4304 = vunpack.c.l.b16 %v4129
        %v4305 = vunpack.c.l.b16 %v4130
        %v4306 = vunpack.c.h.b16 %v4130
        %v4307 = vunpack.c.l.b16 %v4131
        %v4308 = vunpack.c.l.b16 %v4132
        %v4309 = vunpack.c.h.b16 %v4132
        %v4310 = vunpack.c.l.b16 %v4133
        %v4311 = vunpack.c.l.b16 %v4134
        %v4312 = vunpack.c.h.b16 %v4134
        %v4313 = vunpack.c.l.b16 %v4135
        %v4314 = vunpack.c.l.b16 %v4136
        %v4315 = vunpack.c.h.b16 %v4136
        %v4316 = vunpack.c.l.b16 %v4137
        %v4317 = vunpack.c.l.b16 %v4138
        %v4318 = vunpack.c.h.b16 %v4138
        %v4319 = vunpack.c.l.b16 %v4139
        %v4320 = vunpack.c.l.b16 %v4140
        %v4321 = vunpack.c.h.b16 %v4140
        %v4322 = vunpack.c.l.b16 %v4141
        %v4323 = vunpack.c.l.b16 %v4142
        %v4324 = vunpack.c.h.b16 %v4142
        %v4325 = vunpack.c.l.b16 %v4143
        %v4326 = vunpack.c.l.b16 %v4144
        %v4327 = vunpack.c.h.b16 %v4144
        %v4328 = vunpack.c.l.b16 %v4145
        %v4329 = vunpack.c.l.b16 %v4146
        %v4330 = vunpack.c.h.b16 %v4146
        %v4331 = vunpack.c.l.b16 %v4147
        %v4332 = vunpack.c.l.b16 %v4148
        %v4333 = vunpack.c.h.b16 %v4148
        %v4334 = vunpack.c.l.b16 %v4149
        %v4335 = vunpack.c.l.b16 %v4150
        %v4336 = vunpack.c.h.b16 %v4150
        %v4337 = vunpack.c.l.b16 %v4151
        %v4338 = vunpack.c.l.b16 %v4152
        %v4339 = vunpack.c.h.b16 %v4152
        %v4340 = vunpack.c.l.b16 %v4153
        %v4341 = vunpack.c.l.b16 %v4154
        %v4342 = vunpack.c.h.b16 %v4154
        %v4343 = vunpack.c.l.b16 %v4155
        %v4344 = vunpack.c.l.b16 %v4156
        %v4345 = vunpack.c.h.b16 %v4156
        %v4346 = vunpack.c.l.b16 %v4157
        %v4347 = vunpack.c.l.b16 %v4158
        %v4348 = vunpack.c.h.b16 %v4158
        %v4349 = vunpack.c.l.b16 %v4159
        %v4350 = vunpack.c.l.b16 %v4160
        %v4351 = vunpack.c.h.b16 %v4160
        %v4352 = vunpack.c.l.b16 %v4161
        %v4353 = vunpack.c.l.b16 %v4162
        %v4354 = vunpack.c.h.b16 %v4162
        %v4355 = vunpack.c.l.b16 %v4163
        %v4356 = vunpack.c.l.b16 %v4164
        %v4357 = vunpack.c.h.b16 %v4164
        %v4358 = vunpack.c.l.b16 %v4165
        %v4359 = vpack.c.b16 %v4266, %v4263
        %v4360 = vpack.c.b16 %v4267, %v4264
        %v4361 = vpack.c.b16 %v4268, %v4265
        %v4362 = vpack.c.b16 %v4272, %v4269
        %v4363 = vpack.c.b16 %v4273, %v4270
        %v4364 = vpack.c.b16 %v4274, %v4271
        %v4365 = vpack.c.b16 %v4278, %v4275
        %v4366 = vpack.c.b16 %v4279, %v4276
        %v4367 = vpack.c.b16 %v4280, %v4277
        %v4368 = vpack.c.b16 %v4284, %v4281
        %v4369 = vpack.c.b16 %v4285, %v4282
        %v4370 = vpack.c.b16 %v4286, %v4283
        %v4371 = vpack.c.b16 %v4290, %v4287
        %v4372 = vpack.c.b16 %v4291, %v4288
        %v4373 = vpack.c.b16 %v4292, %v4289
        %v4374 = vpack.c.b16 %v4296, %v4293
        %v4375 = vpack.c.b16 %v4297, %v4294
        %v4376 = vpack.c.b16 %v4298, %v4295
        %v4377 = vpack.c.b16 %v4302, %v4299
        %v4378 = vpack.c.b16 %v4303, %v4300
        %v4379 = vpack.c.b16 %v4304, %v4301
        %v4380 = vpack.c.b16 %v4308, %v4305
        %v4381 = vpack.c.b16 %v4309, %v4306
        %v4382 = vpack.c.b16 %v4310, %v4307
        %v4383 = vpack.c.b16 %v4314, %v4311
        %v4384 = vpack.c.b16 %v4315, %v4312
        %v4385 = vpack.c.b16 %v4316, %v4313
        %v4386 = vpack.c.b16 %v4320, %v4317
        %v4387 = vpack.c.b16 %v4321, %v4318
        %v4388 = vpack.c.b16 %v4322, %v4319
        %v4389 = vpack.c.b16 %v4326, %v4323
        %v4390 = vpack.c.b16 %v4327, %v4324
        %v4391 = vpack.c.b16 %v4328, %v4325
        %v4392 = vpack.c.b16 %v4332, %v4329
        %v4393 = vpack.c.b16 %v4333, %v4330
        %v4394 = vpack.c.b16 %v4334, %v4331
        %v4395 = vpack.c.b16 %v4338, %v4335
        %v4396 = vpack.c.b16 %v4339, %v4336
        %v4397 = vpack.c.b16 %v4340, %v4337
        %v4398 = vpack.c.b16 %v4344, %v4341
        %v4399 = vpack.c.b16 %v4345, %v4342
        %v4400 = vpack.c.b16 %v4346, %v4343
        %v4401 = vpack.c.b16 %v4350, %v4347
        %v4402 = vpack.c.b16 %v4351, %v4348
        %v4403 = vpack.c.b16 %v4352, %v4349
        %v4404 = vpack.c.b16 %v4356, %v4353
        %v4405 = vpack.c.b16 %v4357, %v4354
        %v4406 = vpack.c.b16 %v4358, %v4355
        %4455 = vmatpush.bf16.msra.mxu0 %v4380
        %4456 = vmatpush.bf16.msra.mxu0 %v4377
        %4457 = vmatpush.bf16.msra.mxu0 %v4374
        %4458 = vmatpush.bf16.msra.mxu0 %v4371
        %4459 = vmatpush.bf16.msra.mxu0 %v4368
        %4460 = vmatpush.bf16.msra.mxu0 %v4365
        %4461 = vmatpush.bf16.msra.mxu0 %v4362
        %4462 = vmatpush.bf16.msra.mxu0 %v4359
        %4463 = vmatmul.bf16.gmra.mxu0 %v4189
        %v4464 = vpop.f32.mrf.mxu0
        %v4465 = vadd.f32 0.0, %v4464
        %v4466 = vpop.f32.mrf.mxu0
        %v4467 = vadd.f32 0.0, %v4466
        %4468 = vmatmul.bf16.gmra.mxu0 %v4193
        %v4469 = vpop.f32.mrf.mxu0
        %v4470 = vadd.f32 0.0, %v4469
        %v4471 = vpop.f32.mrf.mxu0
        %4472 = vdwg.mxu0
        %4473 = vmatpush.bf16.msra.mxu0 %v4404
        %4474 = vmatpush.bf16.msra.mxu0 %v4401
        %4475 = vmatpush.bf16.msra.mxu0 %v4398
        %4476 = vmatpush.bf16.msra.mxu0 %v4395
        %4477 = vmatpush.bf16.msra.mxu0 %v4392
        %4478 = vmatpush.bf16.msra.mxu0 %v4389
        %4479 = vmatpush.bf16.msra.mxu0 %v4386
        %4480 = vmatpush.bf16.msra.mxu0 %v4383
        %4481 = vmatmul.bf16.gmra.mxu0 %v4190
        %v4482 = vpop.f32.mrf.mxu0
        %v4483 = vadd.f32 %v4465, %v4482
        %v4484 = vpop.f32.mrf.mxu0
        %v4485 = vadd.f32 %v4467, %v4484
        %4486 = vmatmul.bf16.gmra.mxu0 %v4194
        %v4487 = vpop.f32.mrf.mxu0
        %v4488 = vadd.f32 %v4470, %v4487
        %v4489 = vpop.f32.mrf.mxu0
        %4490 = vdwg.mxu0
        %4491 = vmatpush.bf16.msra.mxu0 %v4381
        %4492 = vmatpush.bf16.msra.mxu0 %v4378
        %4493 = vmatpush.bf16.msra.mxu0 %v4375
        %4494 = vmatpush.bf16.msra.mxu0 %v4372
        %4495 = vmatpush.bf16.msra.mxu0 %v4369
        %4496 = vmatpush.bf16.msra.mxu0 %v4366
        %4497 = vmatpush.bf16.msra.mxu0 %v4363
        %4498 = vmatpush.bf16.msra.mxu0 %v4360
        %4499 = vmatmul.bf16.gmra.mxu0 %v4189
        %v4500 = vpop.f32.mrf.mxu0
        %v4501 = vadd.f32 0.0, %v4500
        %v4502 = vpop.f32.mrf.mxu0
        %v4503 = vadd.f32 0.0, %v4502
        %4504 = vmatmul.bf16.gmra.mxu0 %v4193
        %v4505 = vpop.f32.mrf.mxu0
        %v4506 = vadd.f32 0.0, %v4505
        %v4507 = vpop.f32.mrf.mxu0
        %4508 = vdwg.mxu0
        %4509 = vmatpush.bf16.msra.mxu0 %v4405
        %4510 = vmatpush.bf16.msra.mxu0 %v4402
        %4511 = vmatpush.bf16.msra.mxu0 %v4399
        %4512 = vmatpush.bf16.msra.mxu0 %v4396
        %4513 = vmatpush.bf16.msra.mxu0 %v4393
        %4514 = vmatpush.bf16.msra.mxu0 %v4390
        %4515 = vmatpush.bf16.msra.mxu0 %v4387
        %4516 = vmatpush.bf16.msra.mxu0 %v4384
        %4517 = vmatmul.bf16.gmra.mxu0 %v4190
        %v4518 = vpop.f32.mrf.mxu0
        %v4519 = vadd.f32 %v4501, %v4518
        %v4520 = vpop.f32.mrf.mxu0
        %v4521 = vadd.f32 %v4503, %v4520
        %4522 = vmatmul.bf16.gmra.mxu0 %v4194
        %v4523 = vpop.f32.mrf.mxu0
        %v4524 = vadd.f32 %v4506, %v4523
        %v4525 = vpop.f32.mrf.mxu0
        %4526 = vdwg.mxu0
        %4527 = vmatpush.bf16.msra.mxu0 %v4382
        %4528 = vmatpush.bf16.msra.mxu0 %v4379
        %4529 = vmatpush.bf16.msra.mxu0 %v4376
        %4530 = vmatpush.bf16.msra.mxu0 %v4373
        %4531 = vmatpush.bf16.msra.mxu0 %v4370
        %4532 = vmatpush.bf16.msra.mxu0 %v4367
        %4533 = vmatpush.bf16.msra.mxu0 %v4364
        %4534 = vmatpush.bf16.msra.mxu0 %v4361
        %4535 = vmatmul.bf16.gmra.mxu0 %v4189
        %v4536 = vpop.f32.mrf.mxu0
        %v4537 = vadd.f32 0.0, %v4536
        %v4538 = vpop.f32.mrf.mxu0
        %v4539 = vadd.f32 0.0, %v4538
        %4540 = vmatmul.bf16.gmra.mxu0 %v4193
        %v4541 = vpop.f32.mrf.mxu0
        %v4542 = vadd.f32 0.0, %v4541
        %v4543 = vpop.f32.mrf.mxu0
        %4544 = vdwg.mxu0
        %4545 = vmatpush.bf16.msra.mxu0 %v4406
        %4546 = vmatpush.bf16.msra.mxu0 %v4403
        %4547 = vmatpush.bf16.msra.mxu0 %v4400
        %4548 = vmatpush.bf16.msra.mxu0 %v4397
        %4549 = vmatpush.bf16.msra.mxu0 %v4394
        %4550 = vmatpush.bf16.msra.mxu0 %v4391
        %4551 = vmatpush.bf16.msra.mxu0 %v4388
        %4552 = vmatpush.bf16.msra.mxu0 %v4385
        %4553 = vmatmul.bf16.gmra.mxu0 %v4190
        %v4554 = vpop.f32.mrf.mxu0
        %v4555 = vadd.f32 %v4537, %v4554
        %v4556 = vpop.f32.mrf.mxu0
        %v4557 = vadd.f32 %v4539, %v4556
        %4558 = vmatmul.bf16.gmra.mxu0 %v4194
        %v4559 = vpop.f32.mrf.mxu0
        %v4560 = vadd.f32 %v4542, %v4559
        %v4561 = vpop.f32.mrf.mxu0
        %4562 = vdwg.mxu0
        %v4563 = vadd.f32 %v3975, %v4483
        %v4564 = vadd.f32 %v3976, %v4519
        %v4565 = vadd.f32 %v3977, %v4555
        %v4566 = vadd.f32 %v3978, %v4485
        %v4567 = vadd.f32 %v3979, %v4521
        %v4568 = vadd.f32 %v3980, %v4557
        %v4569 = vadd.f32 %v3981, %v4488
        %v4570 = vadd.f32 %v3982, %v4524
        %v4571 = vadd.f32 %v3983, %v4560
        %v4572 = vld [vmem:[%s3479] sm:$0xee]
        %v4573 = vld [vmem:[%s3479 + $0x8] sm:$0xee]
        %v4574 = vld [vmem:[%s3479 + $0x10] sm:$0xee]
        %4576 = vst [vmem:[#allocation1] sm:$0xff] %v4572
        %s4577 = scalar_lea.vmem [#allocation1], 1
        %v4578 = vld [vmem:[%s4577] ss:$4 sm:$0xff]
        %s4579 = scalar_lea.vmem [#allocation1], 2
        %v4580 = vld [vmem:[%s4579] ss:$4 sm:$0xff]
        %s4581 = scalar_lea.vmem [#allocation1], 3
        %v4582 = vld [vmem:[%s4581] ss:$4 sm:$0xff]
        %4584 = vst [vmem:[#allocation1 + $0x20] sm:$0xff] %v4573
        %s4585 = scalar_lea.vmem [#allocation1], 33
        %v4586 = vld [vmem:[%s4585] ss:$4 sm:$0xff]
        %s4587 = scalar_lea.vmem [#allocation1], 34
        %v4588 = vld [vmem:[%s4587] ss:$4 sm:$0xff]
        %s4589 = scalar_lea.vmem [#allocation1], 35
        %v4590 = vld [vmem:[%s4589] ss:$4 sm:$0xff]
        %4592 = vst [vmem:[#allocation1] sm:$0xff] %v4574
        %v4593 = vld [vmem:[%s4577] ss:$4 sm:$0xff]
        %v4594 = vld [vmem:[%s4579] ss:$4 sm:$0xff]
        %v4595 = vld [vmem:[%s4581] ss:$4 sm:$0xff]
        %s4596 = scalar_lea.vmem [#allocation4], 3072
        %v4597 = vld [vmem:[%s4596] sm:$0xff]
        %v4598 = vld [vmem:[%s4596 + $0x8] sm:$0xf]
        %v4599 = vld [vmem:[%s4596 + $0xc] sm:$0xff]
        %v4600 = vld [vmem:[%s4596 + $0x14] sm:$0xf]
        %v4601 = vld [vmem:[%s4596 + $0x18] sm:$0xff]
        %v4602 = vld [vmem:[%s4596 + $0x20] sm:$0xf]
        %v4603 = vld [vmem:[%s4596 + $0x24] sm:$0xff]
        %v4604 = vld [vmem:[%s4596 + $0x2c] sm:$0xf]
        %v4605 = vld [vmem:[%s4596 + $0x30] sm:$0xff]
        %v4606 = vld [vmem:[%s4596 + $0x38] sm:$0xf]
        %v4607 = vld [vmem:[%s4596 + $0x3c] sm:$0xff]
        %v4608 = vld [vmem:[%s4596 + $0x44] sm:$0xf]
        %v4609 = vld [vmem:[%s4596 + $0x48] sm:$0xff]
        %v4610 = vld [vmem:[%s4596 + $0x50] sm:$0xf]
        %v4611 = vld [vmem:[%s4596 + $0x54] sm:$0xff]
        %v4612 = vld [vmem:[%s4596 + $0x5c] sm:$0xf]
        %v4613 = vld [vmem:[%s4596 + $0x60] sm:$0xff]
        %v4614 = vld [vmem:[%s4596 + $0x68] sm:$0xf]
        %v4615 = vld [vmem:[%s4596 + $0x6c] sm:$0xff]
        %v4616 = vld [vmem:[%s4596 + $0x74] sm:$0xf]
        %v4617 = vld [vmem:[%s4596 + $0x78] sm:$0xff]
        %v4618 = vld [vmem:[%s4596 + $0x80] sm:$0xf]
        %v4619 = vld [vmem:[%s4596 + $0x84] sm:$0xff]
        %v4620 = vld [vmem:[%s4596 + $0x8c] sm:$0xf]
        %v4621 = vld [vmem:[%s4596 + $0x90] sm:$0xff]
        %v4622 = vld [vmem:[%s4596 + $0x98] sm:$0xf]
        %v4623 = vld [vmem:[%s4596 + $0x9c] sm:$0xff]
        %v4624 = vld [vmem:[%s4596 + $0xa4] sm:$0xf]
        %v4625 = vld [vmem:[%s4596 + $0xa8] sm:$0xff]
        %v4626 = vld [vmem:[%s4596 + $0xb0] sm:$0xf]
        %v4627 = vld [vmem:[%s4596 + $0xb4] sm:$0xff]
        %v4628 = vld [vmem:[%s4596 + $0xbc] sm:$0xf]
        %v4629 = vld [vmem:[%s4596 + $0xc0] sm:$0xff]
        %v4630 = vld [vmem:[%s4596 + $0xc8] sm:$0xf]
        %v4631 = vld [vmem:[%s4596 + $0xcc] sm:$0xff]
        %v4632 = vld [vmem:[%s4596 + $0xd4] sm:$0xf]
        %v4633 = vld [vmem:[%s4596 + $0xd8] sm:$0xff]
        %v4634 = vld [vmem:[%s4596 + $0xe0] sm:$0xf]
        %v4635 = vld [vmem:[%s4596 + $0xe4] sm:$0xff]
        %v4636 = vld [vmem:[%s4596 + $0xec] sm:$0xf]
        %v4637 = vld [vmem:[%s4596 + $0xf0] sm:$0xff]
        %v4638 = vld [vmem:[%s4596 + $0xf8] sm:$0xf]
        %v4639 = vld [vmem:[%s4596 + $0xfc] sm:$0xff]
        %v4640 = vld [vmem:[%s4596 + $0x104] sm:$0xf]
        %v4641 = vld [vmem:[%s4596 + $0x108] sm:$0xff]
        %v4642 = vld [vmem:[%s4596 + $0x110] sm:$0xf]
        %v4643 = vld [vmem:[%s4596 + $0x114] sm:$0xff]
        %v4644 = vld [vmem:[%s4596 + $0x11c] sm:$0xf]
        %v4645 = vld [vmem:[%s4596 + $0x120] sm:$0xff]
        %v4646 = vld [vmem:[%s4596 + $0x128] sm:$0xf]
        %v4647 = vld [vmem:[%s4596 + $0x12c] sm:$0xff]
        %v4648 = vld [vmem:[%s4596 + $0x134] sm:$0xf]
        %v4649 = vld [vmem:[%s4596 + $0x138] sm:$0xff]
        %v4650 = vld [vmem:[%s4596 + $0x140] sm:$0xf]
        %v4651 = vld [vmem:[%s4596 + $0x144] sm:$0xff]
        %v4652 = vld [vmem:[%s4596 + $0x14c] sm:$0xf]
        %v4653 = vld [vmem:[%s4596 + $0x150] sm:$0xff]
        %v4654 = vld [vmem:[%s4596 + $0x158] sm:$0xf]
        %v4655 = vld [vmem:[%s4596 + $0x15c] sm:$0xff]
        %v4656 = vld [vmem:[%s4596 + $0x164] sm:$0xf]
        %v4657 = vld [vmem:[%s4596 + $0x168] sm:$0xff]
        %v4658 = vld [vmem:[%s4596 + $0x170] sm:$0xf]
        %v4659 = vld [vmem:[%s4596 + $0x174] sm:$0xff]
        %v4660 = vld [vmem:[%s4596 + $0x17c] sm:$0xf]
        %4661 = vst [vmem:[#allocation1] ss:$9 sm:$0xff] %v4578
        %s4662 = scalar_lea.vmem [#allocation1], 1
        %4663 = vst [vmem:[%s4662] ss:$9 sm:$0xff] %v4580
        %s4664 = scalar_lea.vmem [#allocation1], 2
        %4665 = vst [vmem:[%s4664] ss:$9 sm:$0xff] %v4582
        %s4666 = scalar_lea.vmem [#allocation1], 3
        %4667 = vst [vmem:[%s4666] ss:$9 sm:$0xff] %v4586
        %s4668 = scalar_lea.vmem [#allocation1], 4
        %4669 = vst [vmem:[%s4668] ss:$9 sm:$0xff] %v4588
        %s4670 = scalar_lea.vmem [#allocation1], 5
        %4671 = vst [vmem:[%s4670] ss:$9 sm:$0xff] %v4590
        %s4672 = scalar_lea.vmem [#allocation1], 6
        %4673 = vst [vmem:[%s4672] ss:$9 sm:$0xff] %v4593
        %s4674 = scalar_lea.vmem [#allocation1], 7
        %4675 = vst [vmem:[%s4674] ss:$9 sm:$0xff] %v4594
        %v4676 = vld [vmem:[#allocation1] sm:$0xff]
        %v4677 = vld [vmem:[#allocation1 + $0x9] sm:$0xff]
        %4678 = vst [vmem:[#allocation1] ss:$9 sm:$0xff] %v4595
        %v4679 = vld [vmem:[#allocation1] sm:$0xff]
        %v4680 = vld [vmem:[#allocation1 + $0x9] sm:$0xff]
        %v4749 = vunpack.c.l.b16 %v4597
        %v4750 = vunpack.c.h.b16 %v4597
        %v4751 = vunpack.c.l.b16 %v4598
        %v4752 = vunpack.c.l.b16 %v4599
        %v4753 = vunpack.c.h.b16 %v4599
        %v4754 = vunpack.c.l.b16 %v4600
        %v4755 = vunpack.c.l.b16 %v4601
        %v4756 = vunpack.c.h.b16 %v4601
        %v4757 = vunpack.c.l.b16 %v4602
        %v4758 = vunpack.c.l.b16 %v4603
        %v4759 = vunpack.c.h.b16 %v4603
        %v4760 = vunpack.c.l.b16 %v4604
        %v4761 = vunpack.c.l.b16 %v4605
        %v4762 = vunpack.c.h.b16 %v4605
        %v4763 = vunpack.c.l.b16 %v4606
        %v4764 = vunpack.c.l.b16 %v4607
        %v4765 = vunpack.c.h.b16 %v4607
        %v4766 = vunpack.c.l.b16 %v4608
        %v4767 = vunpack.c.l.b16 %v4609
        %v4768 = vunpack.c.h.b16 %v4609
        %v4769 = vunpack.c.l.b16 %v4610
        %v4770 = vunpack.c.l.b16 %v4611
        %v4771 = vunpack.c.h.b16 %v4611
        %v4772 = vunpack.c.l.b16 %v4612
        %v4773 = vunpack.c.l.b16 %v4613
        %v4774 = vunpack.c.h.b16 %v4613
        %v4775 = vunpack.c.l.b16 %v4614
        %v4776 = vunpack.c.l.b16 %v4615
        %v4777 = vunpack.c.h.b16 %v4615
        %v4778 = vunpack.c.l.b16 %v4616
        %v4779 = vunpack.c.l.b16 %v4617
        %v4780 = vunpack.c.h.b16 %v4617
        %v4781 = vunpack.c.l.b16 %v4618
        %v4782 = vunpack.c.l.b16 %v4619
        %v4783 = vunpack.c.h.b16 %v4619
        %v4784 = vunpack.c.l.b16 %v4620
        %v4785 = vunpack.c.l.b16 %v4621
        %v4786 = vunpack.c.h.b16 %v4621
        %v4787 = vunpack.c.l.b16 %v4622
        %v4788 = vunpack.c.l.b16 %v4623
        %v4789 = vunpack.c.h.b16 %v4623
        %v4790 = vunpack.c.l.b16 %v4624
        %v4791 = vunpack.c.l.b16 %v4625
        %v4792 = vunpack.c.h.b16 %v4625
        %v4793 = vunpack.c.l.b16 %v4626
        %v4794 = vunpack.c.l.b16 %v4627
        %v4795 = vunpack.c.h.b16 %v4627
        %v4796 = vunpack.c.l.b16 %v4628
        %v4797 = vunpack.c.l.b16 %v4629
        %v4798 = vunpack.c.h.b16 %v4629
        %v4799 = vunpack.c.l.b16 %v4630
        %v4800 = vunpack.c.l.b16 %v4631
        %v4801 = vunpack.c.h.b16 %v4631
        %v4802 = vunpack.c.l.b16 %v4632
        %v4803 = vunpack.c.l.b16 %v4633
        %v4804 = vunpack.c.h.b16 %v4633
        %v4805 = vunpack.c.l.b16 %v4634
        %v4806 = vunpack.c.l.b16 %v4635
        %v4807 = vunpack.c.h.b16 %v4635
        %v4808 = vunpack.c.l.b16 %v4636
        %v4809 = vunpack.c.l.b16 %v4637
        %v4810 = vunpack.c.h.b16 %v4637
        %v4811 = vunpack.c.l.b16 %v4638
        %v4812 = vunpack.c.l.b16 %v4639
        %v4813 = vunpack.c.h.b16 %v4639
        %v4814 = vunpack.c.l.b16 %v4640
        %v4815 = vunpack.c.l.b16 %v4641
        %v4816 = vunpack.c.h.b16 %v4641
        %v4817 = vunpack.c.l.b16 %v4642
        %v4818 = vunpack.c.l.b16 %v4643
        %v4819 = vunpack.c.h.b16 %v4643
        %v4820 = vunpack.c.l.b16 %v4644
        %v4821 = vunpack.c.l.b16 %v4645
        %v4822 = vunpack.c.h.b16 %v4645
        %v4823 = vunpack.c.l.b16 %v4646
        %v4824 = vunpack.c.l.b16 %v4647
        %v4825 = vunpack.c.h.b16 %v4647
        %v4826 = vunpack.c.l.b16 %v4648
        %v4827 = vunpack.c.l.b16 %v4649
        %v4828 = vunpack.c.h.b16 %v4649
        %v4829 = vunpack.c.l.b16 %v4650
        %v4830 = vunpack.c.l.b16 %v4651
        %v4831 = vunpack.c.h.b16 %v4651
        %v4832 = vunpack.c.l.b16 %v4652
        %v4833 = vunpack.c.l.b16 %v4653
        %v4834 = vunpack.c.h.b16 %v4653
        %v4835 = vunpack.c.l.b16 %v4654
        %v4836 = vunpack.c.l.b16 %v4655
        %v4837 = vunpack.c.h.b16 %v4655
        %v4838 = vunpack.c.l.b16 %v4656
        %v4839 = vunpack.c.l.b16 %v4657
        %v4840 = vunpack.c.h.b16 %v4657
        %v4841 = vunpack.c.l.b16 %v4658
        %v4842 = vunpack.c.l.b16 %v4659
        %v4843 = vunpack.c.h.b16 %v4659
        %v4844 = vunpack.c.l.b16 %v4660
        %v4845 = vpack.c.b16 %v4752, %v4749
        %v4846 = vpack.c.b16 %v4753, %v4750
        %v4847 = vpack.c.b16 %v4754, %v4751
        %v4848 = vpack.c.b16 %v4758, %v4755
        %v4849 = vpack.c.b16 %v4759, %v4756
        %v4850 = vpack.c.b16 %v4760, %v4757
        %v4851 = vpack.c.b16 %v4764, %v4761
        %v4852 = vpack.c.b16 %v4765, %v4762
        %v4853 = vpack.c.b16 %v4766, %v4763
        %v4854 = vpack.c.b16 %v4770, %v4767
        %v4855 = vpack.c.b16 %v4771, %v4768
        %v4856 = vpack.c.b16 %v4772, %v4769
        %v4857 = vpack.c.b16 %v4776, %v4773
        %v4858 = vpack.c.b16 %v4777, %v4774
        %v4859 = vpack.c.b16 %v4778, %v4775
        %v4860 = vpack.c.b16 %v4782, %v4779
        %v4861 = vpack.c.b16 %v4783, %v4780
        %v4862 = vpack.c.b16 %v4784, %v4781
        %v4863 = vpack.c.b16 %v4788, %v4785
        %v4864 = vpack.c.b16 %v4789, %v4786
        %v4865 = vpack.c.b16 %v4790, %v4787
        %v4866 = vpack.c.b16 %v4794, %v4791
        %v4867 = vpack.c.b16 %v4795, %v4792
        %v4868 = vpack.c.b16 %v4796, %v4793
        %v4869 = vpack.c.b16 %v4800, %v4797
        %v4870 = vpack.c.b16 %v4801, %v4798
        %v4871 = vpack.c.b16 %v4802, %v4799
        %v4872 = vpack.c.b16 %v4806, %v4803
        %v4873 = vpack.c.b16 %v4807, %v4804
        %v4874 = vpack.c.b16 %v4808, %v4805
        %v4875 = vpack.c.b16 %v4812, %v4809
        %v4876 = vpack.c.b16 %v4813, %v4810
        %v4877 = vpack.c.b16 %v4814, %v4811
        %v4878 = vpack.c.b16 %v4818, %v4815
        %v4879 = vpack.c.b16 %v4819, %v4816
        %v4880 = vpack.c.b16 %v4820, %v4817
        %v4881 = vpack.c.b16 %v4824, %v4821
        %v4882 = vpack.c.b16 %v4825, %v4822
        %v4883 = vpack.c.b16 %v4826, %v4823
        %v4884 = vpack.c.b16 %v4830, %v4827
        %v4885 = vpack.c.b16 %v4831, %v4828
        %v4886 = vpack.c.b16 %v4832, %v4829
        %v4887 = vpack.c.b16 %v4836, %v4833
        %v4888 = vpack.c.b16 %v4837, %v4834
        %v4889 = vpack.c.b16 %v4838, %v4835
        %v4890 = vpack.c.b16 %v4842, %v4839
        %v4891 = vpack.c.b16 %v4843, %v4840
        %v4892 = vpack.c.b16 %v4844, %v4841
        %4941 = vmatpush.bf16.msra.mxu0 %v4866
        %4942 = vmatpush.bf16.msra.mxu0 %v4863
        %4943 = vmatpush.bf16.msra.mxu0 %v4860
        %4944 = vmatpush.bf16.msra.mxu0 %v4857
        %4945 = vmatpush.bf16.msra.mxu0 %v4854
        %4946 = vmatpush.bf16.msra.mxu0 %v4851
        %4947 = vmatpush.bf16.msra.mxu0 %v4848
        %4948 = vmatpush.bf16.msra.mxu0 %v4845
        %4949 = vmatmul.bf16.gmra.mxu0 %v4676
        %v4950 = vpop.f32.mrf.mxu0
        %v4951 = vadd.f32 0.0, %v4950
        %v4952 = vpop.f32.mrf.mxu0
        %v4953 = vadd.f32 0.0, %v4952
        %4954 = vmatmul.bf16.gmra.mxu0 %v4679
        %v4955 = vpop.f32.mrf.mxu0
        %v4956 = vadd.f32 0.0, %v4955
        %v4957 = vpop.f32.mrf.mxu0
        %4958 = vdwg.mxu0
        %4959 = vmatpush.bf16.msra.mxu0 %v4890
        %4960 = vmatpush.bf16.msra.mxu0 %v4887
        %4961 = vmatpush.bf16.msra.mxu0 %v4884
        %4962 = vmatpush.bf16.msra.mxu0 %v4881
        %4963 = vmatpush.bf16.msra.mxu0 %v4878
        %4964 = vmatpush.bf16.msra.mxu0 %v4875
        %4965 = vmatpush.bf16.msra.mxu0 %v4872
        %4966 = vmatpush.bf16.msra.mxu0 %v4869
        %4967 = vmatmul.bf16.gmra.mxu0 %v4677
        %v4968 = vpop.f32.mrf.mxu0
        %v4969 = vadd.f32 %v4951, %v4968
        %v4970 = vpop.f32.mrf.mxu0
        %v4971 = vadd.f32 %v4953, %v4970
        %4972 = vmatmul.bf16.gmra.mxu0 %v4680
        %v4973 = vpop.f32.mrf.mxu0
        %v4974 = vadd.f32 %v4956, %v4973
        %v4975 = vpop.f32.mrf.mxu0
        %4976 = vdwg.mxu0
        %4977 = vmatpush.bf16.msra.mxu0 %v4867
        %4978 = vmatpush.bf16.msra.mxu0 %v4864
        %4979 = vmatpush.bf16.msra.mxu0 %v4861
        %4980 = vmatpush.bf16.msra.mxu0 %v4858
        %4981 = vmatpush.bf16.msra.mxu0 %v4855
        %4982 = vmatpush.bf16.msra.mxu0 %v4852
        %4983 = vmatpush.bf16.msra.mxu0 %v4849
        %4984 = vmatpush.bf16.msra.mxu0 %v4846
        %4985 = vmatmul.bf16.gmra.mxu0 %v4676
        %v4986 = vpop.f32.mrf.mxu0
        %v4987 = vadd.f32 0.0, %v4986
        %v4988 = vpop.f32.mrf.mxu0
        %v4989 = vadd.f32 0.0, %v4988
        %4990 = vmatmul.bf16.gmra.mxu0 %v4679
        %v4991 = vpop.f32.mrf.mxu0
        %v4992 = vadd.f32 0.0, %v4991
        %v4993 = vpop.f32.mrf.mxu0
        %4994 = vdwg.mxu0
        %4995 = vmatpush.bf16.msra.mxu0 %v4891
        %4996 = vmatpush.bf16.msra.mxu0 %v4888
        %4997 = vmatpush.bf16.msra.mxu0 %v4885
        %4998 = vmatpush.bf16.msra.mxu0 %v4882
        %4999 = vmatpush.bf16.msra.mxu0 %v4879
        %5000 = vmatpush.bf16.msra.mxu0 %v4876
        %5001 = vmatpush.bf16.msra.mxu0 %v4873
        %5002 = vmatpush.bf16.msra.mxu0 %v4870
        %5003 = vmatmul.bf16.gmra.mxu0 %v4677
        %v5004 = vpop.f32.mrf.mxu0
        %v5005 = vadd.f32 %v4987, %v5004
        %v5006 = vpop.f32.mrf.mxu0
        %v5007 = vadd.f32 %v4989, %v5006
        %5008 = vmatmul.bf16.gmra.mxu0 %v4680
        %v5009 = vpop.f32.mrf.mxu0
        %v5010 = vadd.f32 %v4992, %v5009
        %v5011 = vpop.f32.mrf.mxu0
        %5012 = vdwg.mxu0
        %5013 = vmatpush.bf16.msra.mxu0 %v4868
        %5014 = vmatpush.bf16.msra.mxu0 %v4865
        %5015 = vmatpush.bf16.msra.mxu0 %v4862
        %5016 = vmatpush.bf16.msra.mxu0 %v4859
        %5017 = vmatpush.bf16.msra.mxu0 %v4856
        %5018 = vmatpush.bf16.msra.mxu0 %v4853
        %5019 = vmatpush.bf16.msra.mxu0 %v4850
        %5020 = vmatpush.bf16.msra.mxu0 %v4847
        %5021 = vmatmul.bf16.gmra.mxu0 %v4676
        %v5022 = vpop.f32.mrf.mxu0
        %v5023 = vadd.f32 0.0, %v5022
        %v5024 = vpop.f32.mrf.mxu0
        %v5025 = vadd.f32 0.0, %v5024
        %5026 = vmatmul.bf16.gmra.mxu0 %v4679
        %v5027 = vpop.f32.mrf.mxu0
        %v5028 = vadd.f32 0.0, %v5027
        %v5029 = vpop.f32.mrf.mxu0
        %5030 = vdwg.mxu0
        %5031 = vmatpush.bf16.msra.mxu0 %v4892
        %5032 = vmatpush.bf16.msra.mxu0 %v4889
        %5033 = vmatpush.bf16.msra.mxu0 %v4886
        %5034 = vmatpush.bf16.msra.mxu0 %v4883
        %5035 = vmatpush.bf16.msra.mxu0 %v4880
        %5036 = vmatpush.bf16.msra.mxu0 %v4877
        %5037 = vmatpush.bf16.msra.mxu0 %v4874
        %5038 = vmatpush.bf16.msra.mxu0 %v4871
        %5039 = vmatmul.bf16.gmra.mxu0 %v4677
        %v5040 = vpop.f32.mrf.mxu0
        %v5041 = vadd.f32 %v5023, %v5040
        %v5042 = vpop.f32.mrf.mxu0
        %v5043 = vadd.f32 %v5025, %v5042
        %5044 = vmatmul.bf16.gmra.mxu0 %v4680
        %v5045 = vpop.f32.mrf.mxu0
        %v5046 = vadd.f32 %v5028, %v5045
        %v5047 = vpop.f32.mrf.mxu0
        %5048 = vdwg.mxu0
        %v5049 = vadd.f32 %v4563, %v4969
        %v5050 = vadd.f32 %v4564, %v5005
        %v5051 = vadd.f32 %v4565, %v5041
        %v5052 = vadd.f32 %v4566, %v4971
        %v5053 = vadd.f32 %v4567, %v5007
        %v5054 = vadd.f32 %v4568, %v5043
        %v5055 = vadd.f32 %v4569, %v4974
        %v5056 = vadd.f32 %v4570, %v5010
        %v5057 = vadd.f32 %v4571, %v5046
        %v5058 = vld [vmem:[%s299] sm:$0x7]
        %v5059 = vld [vmem:[%s299 + $0x4] sm:$0x7]
        %v5060 = vld [vmem:[%s299 + $0x8] sm:$0x7]
        %v5061 = vunpack.c.l.bf16 %v5058
        %v5062 = vunpack.c.l.bf16 %v5059
        %v5063 = vunpack.c.l.bf16 %v5060
        %v5064 = vperm.slane %v5061, 0
        %v5065 = vlaneseq
        %v5066 = vshrl.u32 %v5065, 7
        %5068 = vset.pattern.permute.xlu0 %v5066
        %5069 = vperm.xlu0 %5068, %v5064
        %v5070 = vpop.permute.xlu0 %5069
        %v5071 = vperm.slane %v5061, 1
        %v5072 = vlaneseq
        %v5073 = vshrl.u32 %v5072, 7
        %5075 = vset.pattern.permute.xlu0 %v5073
        %5076 = vperm.xlu0 %5075, %v5071
        %v5077 = vpop.permute.xlu0 %5076
        %v5078 = vperm.slane %v5061, 2
        %v5079 = vlaneseq
        %v5080 = vshrl.u32 %v5079, 7
        %5082 = vset.pattern.permute.xlu0 %v5080
        %5083 = vperm.xlu0 %5082, %v5078
        %v5084 = vpop.permute.xlu0 %5083
        %v5085 = vperm.slane %v5061, 3
        %v5086 = vlaneseq
        %v5087 = vshrl.u32 %v5086, 7
        %5089 = vset.pattern.permute.xlu0 %v5087
        %5090 = vperm.xlu0 %5089, %v5085
        %v5091 = vpop.permute.xlu0 %5090
        %v5092 = vperm.slane %v5061, 4
        %v5093 = vlaneseq
        %v5094 = vshrl.u32 %v5093, 7
        %5096 = vset.pattern.permute.xlu0 %v5094
        %5097 = vperm.xlu0 %5096, %v5092
        %v5098 = vpop.permute.xlu0 %5097
        %v5099 = vperm.slane %v5061, 5
        %v5100 = vlaneseq
        %v5101 = vshrl.u32 %v5100, 7
        %5103 = vset.pattern.permute.xlu0 %v5101
        %5104 = vperm.xlu0 %5103, %v5099
        %v5105 = vpop.permute.xlu0 %5104
        %v5106 = vperm.slane %v5062, 0
        %v5107 = vlaneseq
        %v5108 = vshrl.u32 %v5107, 7
        %5110 = vset.pattern.permute.xlu0 %v5108
        %5111 = vperm.xlu0 %5110, %v5106
        %v5112 = vpop.permute.xlu0 %5111
        %v5113 = vperm.slane %v5062, 1
        %v5114 = vlaneseq
        %v5115 = vshrl.u32 %v5114, 7
        %5117 = vset.pattern.permute.xlu0 %v5115
        %5118 = vperm.xlu0 %5117, %v5113
        %v5119 = vpop.permute.xlu0 %5118
        %v5120 = vperm.slane %v5062, 2
        %v5121 = vlaneseq
        %v5122 = vshrl.u32 %v5121, 7
        %5124 = vset.pattern.permute.xlu0 %v5122
        %5125 = vperm.xlu0 %5124, %v5120
        %v5126 = vpop.permute.xlu0 %5125
        %v5127 = vperm.slane %v5062, 3
        %v5128 = vlaneseq
        %v5129 = vshrl.u32 %v5128, 7
        %5131 = vset.pattern.permute.xlu0 %v5129
        %5132 = vperm.xlu0 %5131, %v5127
        %v5133 = vpop.permute.xlu0 %5132
        %v5134 = vperm.slane %v5062, 4
        %v5135 = vlaneseq
        %v5136 = vshrl.u32 %v5135, 7
        %5138 = vset.pattern.permute.xlu0 %v5136
        %5139 = vperm.xlu0 %5138, %v5134
        %v5140 = vpop.permute.xlu0 %5139
        %v5141 = vperm.slane %v5062, 5
        %v5142 = vlaneseq
        %v5143 = vshrl.u32 %v5142, 7
        %5145 = vset.pattern.permute.xlu0 %v5143
        %5146 = vperm.xlu0 %5145, %v5141
        %v5147 = vpop.permute.xlu0 %5146
        %v5148 = vperm.slane %v5063, 0
        %v5149 = vlaneseq
        %v5150 = vshrl.u32 %v5149, 7
        %5152 = vset.pattern.permute.xlu0 %v5150
        %5153 = vperm.xlu0 %5152, %v5148
        %v5154 = vpop.permute.xlu0 %5153
        %v5155 = vperm.slane %v5063, 1
        %v5156 = vlaneseq
        %v5157 = vshrl.u32 %v5156, 7
        %5159 = vset.pattern.permute.xlu0 %v5157
        %5160 = vperm.xlu0 %5159, %v5155
        %v5161 = vpop.permute.xlu0 %5160
        %v5162 = vperm.slane %v5063, 2
        %v5163 = vlaneseq
        %v5164 = vshrl.u32 %v5163, 7
        %5166 = vset.pattern.permute.xlu0 %v5164
        %5167 = vperm.xlu0 %5166, %v5162
        %v5168 = vpop.permute.xlu0 %5167
        %v5169 = vperm.slane %v5063, 3
        %v5170 = vlaneseq
        %v5171 = vshrl.u32 %v5170, 7
        %5173 = vset.pattern.permute.xlu0 %v5171
        %5174 = vperm.xlu0 %5173, %v5169
        %v5175 = vpop.permute.xlu0 %5174
        %v5176 = vperm.slane %v5063, 4
        %v5177 = vlaneseq
        %v5178 = vshrl.u32 %v5177, 7
        %5180 = vset.pattern.permute.xlu0 %v5178
        %5181 = vperm.xlu0 %5180, %v5176
        %v5182 = vpop.permute.xlu0 %5181
        %v5183 = vperm.slane %v5063, 5
        %v5184 = vlaneseq
        %v5185 = vshrl.u32 %v5184, 7
        %5187 = vset.pattern.permute.xlu0 %v5185
        %5188 = vperm.xlu0 %5187, %v5183
        %v5189 = vpop.permute.xlu0 %5188
        %v5190 = vld [vmem:[#allocation6] sm:$0x1]
        %v5192 = vperm.slane %v5190, 0
        %v5194 = vmul.f32 %v5070, %v5192
        %v5195 = vmul.f32 %v5077, %v5192
        %v5196 = vmul.f32 %v5084, %v5192
        %v5197 = vmul.f32 %v5091, %v5192
        %v5198 = vmul.f32 %v5098, %v5192
        %v5199 = vmul.f32 %v5105, %v5192
        %v5200 = vmul.f32 %v5112, %v5192
        %v5201 = vmul.f32 %v5119, %v5192
        %v5202 = vmul.f32 %v5126, %v5192
        %v5203 = vmul.f32 %v5133, %v5192
        %v5204 = vmul.f32 %v5140, %v5192
        %v5205 = vmul.f32 %v5147, %v5192
        %v5206 = vmul.f32 %v5154, %v5192
        %v5207 = vmul.f32 %v5161, %v5192
        %v5208 = vmul.f32 %v5168, %v5192
        %v5209 = vmul.f32 %v5175, %v5192
        %v5210 = vmul.f32 %v5182, %v5192
        %v5211 = vmul.f32 %v5189, %v5192
        %v5212 = vrot.slane %v5196, 4
        %vm5213 = vcmask 1047556
        %v5214 = vsel %vm5213, %v5212, %v5194
        %v5215 = vrot.slane %v5194, 4
        %v5216 = vsel %vm5213, %v5196, %v5215
        %v5218 = vunpack.c.l.s4 1983009808
        %v5219 = vunpack.c.0.s8 %v5218
        %v5220 = vperm.slane %v5214, %v5219
        %v5222 = vunpack.c.l.s4 1983009808
        %v5223 = vunpack.c.0.s8 %v5222
        %v5224 = vperm.slane %v5216, %v5223
        %v5225 = vrot.slane %v5197, 4
        %v5226 = vsel %vm5213, %v5225, %v5195
        %v5227 = vrot.slane %v5195, 4
        %v5228 = vsel %vm5213, %v5197, %v5227
        %v5230 = vunpack.c.l.s4 1983009808
        %v5231 = vunpack.c.0.s8 %v5230
        %v5232 = vperm.slane %v5226, %v5231
        %v5234 = vunpack.c.l.s4 1983009808
        %v5235 = vunpack.c.0.s8 %v5234
        %v5236 = vperm.slane %v5228, %v5235
        %v5237 = vrot.slane %v5200, 4
        %v5238 = vsel %vm5213, %v5237, %v5198
        %v5239 = vrot.slane %v5198, 4
        %v5240 = vsel %vm5213, %v5200, %v5239
        %v5242 = vunpack.c.l.s4 1983009808
        %v5243 = vunpack.c.0.s8 %v5242
        %v5244 = vperm.slane %v5238, %v5243
        %v5246 = vunpack.c.l.s4 1983009808
        %v5247 = vunpack.c.0.s8 %v5246
        %v5248 = vperm.slane %v5240, %v5247
        %v5249 = vrot.slane %v5201, 4
        %v5250 = vsel %vm5213, %v5249, %v5199
        %v5251 = vrot.slane %v5199, 4
        %v5252 = vsel %vm5213, %v5201, %v5251
        %v5254 = vunpack.c.l.s4 1983009808
        %v5255 = vunpack.c.0.s8 %v5254
        %v5256 = vperm.slane %v5250, %v5255
        %v5258 = vunpack.c.l.s4 1983009808
        %v5259 = vunpack.c.0.s8 %v5258
        %v5260 = vperm.slane %v5252, %v5259
        %v5261 = vrot.slane %v5232, 4
        %v5262 = vsel %vm5213, %v5261, %v5220
        %v5263 = vrot.slane %v5220, 4
        %v5264 = vsel %vm5213, %v5232, %v5263
        %v5266 = vunpack.c.l.s4 1934713408
        %v5267 = vunpack.c.0.s8 %v5266
        %v5268 = vperm.slane %v5262, %v5267
        %v5270 = vunpack.c.l.s4 1934713408
        %v5271 = vunpack.c.0.s8 %v5270
        %v5272 = vperm.slane %v5264, %v5271
        %v5273 = vrot.slane %v5236, 4
        %v5274 = vsel %vm5213, %v5273, %v5224
        %v5276 = vunpack.c.l.s4 1934713408
        %v5277 = vunpack.c.0.s8 %v5276
        %v5278 = vperm.slane %v5274, %v5277
        %v5279 = vrot.slane %v5256, 4
        %v5280 = vsel %vm5213, %v5279, %v5244
        %v5281 = vrot.slane %v5244, 4
        %v5282 = vsel %vm5213, %v5256, %v5281
        %v5284 = vunpack.c.l.s4 1934713408
        %v5285 = vunpack.c.0.s8 %v5284
        %v5286 = vperm.slane %v5280, %v5285
        %v5288 = vunpack.c.l.s4 1934713408
        %v5289 = vunpack.c.0.s8 %v5288
        %v5290 = vperm.slane %v5282, %v5289
        %v5291 = vrot.slane %v5260, 4
        %v5292 = vsel %vm5213, %v5291, %v5248
        %v5294 = vunpack.c.l.s4 1934713408
        %v5295 = vunpack.c.0.s8 %v5294
        %v5296 = vperm.slane %v5292, %v5295
        %v5297 = vrot.slane %v5286, 4
        %v5298 = vsel %vm5213, %v5297, %v5268
        %v5299 = vrot.slane %v5268, 4
        %v5300 = vsel %vm5213, %v5286, %v5299
        %v5301 = vrot.slane %v5290, 4
        %v5302 = vsel %vm5213, %v5301, %v5272
        %v5303 = vrot.slane %v5272, 4
        %v5304 = vsel %vm5213, %v5290, %v5303
        %v5305 = vrot.slane %v5296, 4
        %v5306 = vsel %vm5213, %v5305, %v5278
        %v5307 = vrot.slane %v5278, 4
        %v5308 = vsel %vm5213, %v5296, %v5307
        %v5309 = vrot.slane %v5204, 4
        %v5310 = vsel %vm5213, %v5309, %v5202
        %v5311 = vrot.slane %v5202, 4
        %v5312 = vsel %vm5213, %v5204, %v5311
        %v5314 = vunpack.c.l.s4 1983009808
        %v5315 = vunpack.c.0.s8 %v5314
        %v5316 = vperm.slane %v5310, %v5315
        %v5318 = vunpack.c.l.s4 1983009808
        %v5319 = vunpack.c.0.s8 %v5318
        %v5320 = vperm.slane %v5312, %v5319
        %v5321 = vrot.slane %v5205, 4
        %v5322 = vsel %vm5213, %v5321, %v5203
        %v5323 = vrot.slane %v5203, 4
        %v5324 = vsel %vm5213, %v5205, %v5323
        %v5326 = vunpack.c.l.s4 1983009808
        %v5327 = vunpack.c.0.s8 %v5326
        %v5328 = vperm.slane %v5322, %v5327
        %v5330 = vunpack.c.l.s4 1983009808
        %v5331 = vunpack.c.0.s8 %v5330
        %v5332 = vperm.slane %v5324, %v5331
        %v5333 = vrot.slane %v5208, 4
        %v5334 = vsel %vm5213, %v5333, %v5206
        %v5335 = vrot.slane %v5206, 4
        %v5336 = vsel %vm5213, %v5208, %v5335
        %v5338 = vunpack.c.l.s4 1983009808
        %v5339 = vunpack.c.0.s8 %v5338
        %v5340 = vperm.slane %v5334, %v5339
        %v5342 = vunpack.c.l.s4 1983009808
        %v5343 = vunpack.c.0.s8 %v5342
        %v5344 = vperm.slane %v5336, %v5343
        %v5345 = vrot.slane %v5209, 4
        %v5346 = vsel %vm5213, %v5345, %v5207
        %v5347 = vrot.slane %v5207, 4
        %v5348 = vsel %vm5213, %v5209, %v5347
        %v5350 = vunpack.c.l.s4 1983009808
        %v5351 = vunpack.c.0.s8 %v5350
        %v5352 = vperm.slane %v5346, %v5351
        %v5354 = vunpack.c.l.s4 1983009808
        %v5355 = vunpack.c.0.s8 %v5354
        %v5356 = vperm.slane %v5348, %v5355
        %v5357 = vrot.slane %v5328, 4
        %v5358 = vsel %vm5213, %v5357, %v5316
        %v5359 = vrot.slane %v5316, 4
        %v5360 = vsel %vm5213, %v5328, %v5359
        %v5362 = vunpack.c.l.s4 1934713408
        %v5363 = vunpack.c.0.s8 %v5362
        %v5364 = vperm.slane %v5358, %v5363
        %v5366 = vunpack.c.l.s4 1934713408
        %v5367 = vunpack.c.0.s8 %v5366
        %v5368 = vperm.slane %v5360, %v5367
        %v5369 = vrot.slane %v5332, 4
        %v5370 = vsel %vm5213, %v5369, %v5320
        %v5372 = vunpack.c.l.s4 1934713408
        %v5373 = vunpack.c.0.s8 %v5372
        %v5374 = vperm.slane %v5370, %v5373
        %v5375 = vrot.slane %v5352, 4
        %v5376 = vsel %vm5213, %v5375, %v5340
        %v5377 = vrot.slane %v5340, 4
        %v5378 = vsel %vm5213, %v5352, %v5377
        %v5380 = vunpack.c.l.s4 1934713408
        %v5381 = vunpack.c.0.s8 %v5380
        %v5382 = vperm.slane %v5376, %v5381
        %v5384 = vunpack.c.l.s4 1934713408
        %v5385 = vunpack.c.0.s8 %v5384
        %v5386 = vperm.slane %v5378, %v5385
        %v5387 = vrot.slane %v5356, 4
        %v5388 = vsel %vm5213, %v5387, %v5344
        %v5390 = vunpack.c.l.s4 1934713408
        %v5391 = vunpack.c.0.s8 %v5390
        %v5392 = vperm.slane %v5388, %v5391
        %v5393 = vrot.slane %v5382, 4
        %v5394 = vsel %vm5213, %v5393, %v5364
        %v5395 = vrot.slane %v5364, 4
        %v5396 = vsel %vm5213, %v5382, %v5395
        %v5397 = vrot.slane %v5386, 4
        %v5398 = vsel %vm5213, %v5397, %v5368
        %v5399 = vrot.slane %v5368, 4
        %v5400 = vsel %vm5213, %v5386, %v5399
        %v5401 = vrot.slane %v5392, 4
        %v5402 = vsel %vm5213, %v5401, %v5374
        %v5403 = vrot.slane %v5374, 4
        %v5404 = vsel %vm5213, %v5392, %v5403
        %v5406 = vunpack.c.l.s4 1983009808
        %v5407 = vunpack.c.0.s8 %v5406
        %v5408 = vperm.slane %v5210, %v5407
        %v5409 = vrot.slane %v5210, 4
        %v5410 = vsel %vm5213, 0.0, %v5409
        %v5412 = vunpack.c.l.s4 1983009808
        %v5413 = vunpack.c.0.s8 %v5412
        %v5414 = vperm.slane %v5211, %v5413
        %v5415 = vrot.slane %v5211, 4
        %v5416 = vsel %vm5213, 0.0, %v5415
        %v5417 = vrot.slane %v5414, 4
        %v5418 = vsel %vm5213, %v5417, %v5408
        %v5419 = vrot.slane %v5408, 4
        %v5420 = vsel %vm5213, %v5414, %v5419
        %v5422 = vunpack.c.l.s4 1934713408
        %v5423 = vunpack.c.0.s8 %v5422
        %v5424 = vperm.slane %v5418, %v5423
        %v5426 = vunpack.c.l.s4 1934713408
        %v5427 = vunpack.c.0.s8 %v5426
        %v5428 = vperm.slane %v5420, %v5427
        %v5429 = vrot.slane %v5416, 4
        %v5430 = vsel %vm5213, %v5429, %v5410
        %v5432 = vunpack.c.l.s4 1934713408
        %v5433 = vunpack.c.0.s8 %v5432
        %v5434 = vperm.slane %v5430, %v5433
        %v5435 = vrot.slane %v5424, 4
        %v5436 = vsel %vm5213, 0.0, %v5435
        %v5437 = vrot.slane %v5428, 4
        %v5438 = vsel %vm5213, 0.0, %v5437
        %v5439 = vrot.slane %v5434, 4
        %v5440 = vsel %vm5213, 0.0, %v5439
        %5444 = vrot.lane.b32.xlu0 %v5300, 64
        %v5445 = vpop.permute.xlu0 %5444
        %5446 = vrot.lane.b32.xlu0 %v5396, 64
        %v5447 = vpop.permute.xlu0 %5446
        %5448 = vrot.lane.b32.xlu0 %v5436, 64
        %v5449 = vpop.permute.xlu0 %5448
        %5456 = vrot.lane.b32.xlu0 %v5304, 64
        %v5457 = vpop.permute.xlu0 %5456
        %5458 = vrot.lane.b32.xlu0 %v5400, 64
        %v5459 = vpop.permute.xlu0 %5458
        %5460 = vrot.lane.b32.xlu0 %v5438, 64
        %v5461 = vpop.permute.xlu0 %5460
        %5468 = vrot.lane.b32.xlu0 %v5308, 64
        %v5469 = vpop.permute.xlu0 %5468
        %5470 = vrot.lane.b32.xlu0 %v5404, 64
        %v5471 = vpop.permute.xlu0 %5470
        %5472 = vrot.lane.b32.xlu0 %v5440, 64
        %v5473 = vpop.permute.xlu0 %5472
        %vm5477 = vcmask 523264
        %v5478 = vsel %vm5477, %v5298, %v5445
        %v5479 = vsel %vm5477, %v5394, %v5447
        %v5480 = vsel %vm5477, %v5424, %v5449
        %v5481 = vsel %vm5477, %v5302, %v5457
        %v5482 = vsel %vm5477, %v5398, %v5459
        %v5483 = vsel %vm5477, %v5428, %v5461
        %v5484 = vsel %vm5477, %v5306, %v5469
        %v5485 = vsel %vm5477, %v5402, %v5471
        %v5486 = vsel %vm5477, %v5434, %v5473
        %v5487 = vadd.f32 %v5049, %v5478
        %v5488 = vadd.f32 %v5050, %v5481
        %v5489 = vadd.f32 %v5051, %v5484
        %v5490 = vadd.f32 %v5052, %v5479
        %v5491 = vadd.f32 %v5053, %v5482
        %v5492 = vadd.f32 %v5054, %v5485
        %v5493 = vadd.f32 %v5055, %v5480
        %v5494 = vadd.f32 %v5056, %v5483
        %v5495 = vadd.f32 %v5057, %v5486
        %v5505 = vrot.slane %v5488, 6
        %v5506 = vrot.slane %v5489, 4
        %v5507 = vrot.slane %v5491, 6
        %v5508 = vrot.slane %v5492, 4
        %v5509 = vrot.slane %v5494, 6
        %v5510 = vrot.slane %v5495, 4
        %vm5511 = vcmask 1041408
        %v5512 = vsel %vm5511, %v5487, %v5505
        %vm5513 = vcmask 1043456
        %v5514 = vsel %vm5513, %v5512, %v5506
        %vm5515 = vcmask 1043458
        %v5516 = vsel %vm5515, %v5487, %v5505
        %vm5517 = vcmask 1045506
        %v5518 = vsel %vm5517, %v5516, %v5506
        %v5519 = vrot.slane %v5518, 2
        %vm5520 = vcmask 1045508
        %v5521 = vsel %vm5520, %v5487, %v5505
        %v5522 = vsel %vm5513, %v5506, %v5521
        %v5523 = vrot.slane %v5522, 4
        %vm5524 = vcmask 1045504
        %v5525 = vsel %vm5524, %v5505, %v5487
        %v5526 = vsel %vm5517, %v5506, %v5525
        %v5527 = vrot.slane %v5526, 6
        %v5528 = vsel %vm5511, %v5490, %v5507
        %v5529 = vsel %vm5513, %v5528, %v5508
        %v5530 = vsel %vm5515, %v5490, %v5507
        %v5531 = vsel %vm5517, %v5530, %v5508
        %v5532 = vrot.slane %v5531, 2
        %v5533 = vsel %vm5520, %v5490, %v5507
        %v5534 = vsel %vm5513, %v5508, %v5533
        %v5535 = vrot.slane %v5534, 4
        %v5536 = vsel %vm5524, %v5507, %v5490
        %v5537 = vsel %vm5517, %v5508, %v5536
        %v5538 = vrot.slane %v5537, 6
        %v5539 = vsel %vm5511, %v5493, %v5509
        %v5540 = vsel %vm5513, %v5539, %v5510
        %5541 = vst [vmem:[#allocation1] ss:$4 sm:$0xff] %v5514
        %s5542 = scalar_lea.vmem [#allocation1], 1
        %5543 = vst [vmem:[%s5542] ss:$4 sm:$0xff] %v5519
        %s5544 = scalar_lea.vmem [#allocation1], 2
        %5545 = vst [vmem:[%s5544] ss:$4 sm:$0xff] %v5523
        %v5546 = vld.sshfl [vmem:[#allocation1] sm:$0xff pattern:$0x73625140]
        %v5547 = vld.sshfl [vmem:[#allocation1 + $0x8] sm:$0xff pattern:$0x73625140]
        %v5548 = vld.sshfl [vmem:[#allocation1 + $0x10] sm:$0xff pattern:$0x73625140]
        %s5549 = scalar_lea.vmem [#allocation1], 32
        %5550 = vst [vmem:[%s5549] ss:$4 sm:$0xff] %v5527
        %s5551 = scalar_lea.vmem [#allocation1], 33
        %5552 = vst [vmem:[%s5551] ss:$4 sm:$0xff] %v5529
        %s5553 = scalar_lea.vmem [#allocation1], 34
        %5554 = vst [vmem:[%s5553] ss:$4 sm:$0xff] %v5532
        %v5555 = vld.sshfl [vmem:[#allocation1 + $0x20] sm:$0xff pattern:$0x73625140]
        %v5556 = vld.sshfl [vmem:[#allocation1 + $0x28] sm:$0xff pattern:$0x73625140]
        %v5557 = vld.sshfl [vmem:[#allocation1 + $0x30] sm:$0xff pattern:$0x73625140]
        %5558 = vst [vmem:[#allocation1] ss:$4 sm:$0xff] %v5535
        %5559 = vst [vmem:[%s5542] ss:$4 sm:$0xff] %v5538
        %5560 = vst [vmem:[%s5544] ss:$4 sm:$0xff] %v5540
        %v5561 = vld.sshfl [vmem:[#allocation1] sm:$0xff pattern:$0x73625140]
        %v5562 = vld.sshfl [vmem:[#allocation1 + $0x8] sm:$0xff pattern:$0x73625140]
        %v5563 = vld.sshfl [vmem:[#allocation1 + $0x10] sm:$0xff pattern:$0x73625140]
        %5573 = vst [vmem:[%s310] sm:$0x3f] %v5546
        %5574 = vst [vmem:[%s310 + $0x8] sm:$0x3f] %v5547
        %5575 = vst [vmem:[%s310 + $0x10] sm:$0x3f] %v5548
        %5576 = vst [vmem:[%s310 + $0x18] sm:$0x3f] %v5555
        %5577 = vst [vmem:[%s310 + $0x20] sm:$0x3f] %v5556
        %5578 = vst [vmem:[%s310 + $0x28] sm:$0x3f] %v5557
        %5579 = vst [vmem:[%s310 + $0x30] sm:$0x3f] %v5561
        %5580 = vst [vmem:[%s310 + $0x38] sm:$0x3f] %v5562
        %5581 = vst [vmem:[%s310 + $0x40] sm:$0x3f] %v5563
        %s5582 = smul.u32 3, %s24
        %p5583 = scmp.lt.s32.totalorder %s23, 1
        %s5584 = scalar_select %p5583, %s23, 1
        %p5585 = scmp.lt.s32.totalorder %s5582, 5
        %s5586 = scalar_select %p5585, %s5582, 5
        %s5587 = smul.addr %s5586, 3
        %s5588 = smul.addr %s5584, 18
        %s5589 = sadd.s32 %s5587, %s5588
        %s5590 = smul.addr %s5589, 8
        %s5591 = scalar_lea.vmem %s4, %s5590
        // Predicated region
        $region49: #{tpu_custom_call.1} parent=35 // pred_check
          %p5592 = pneg %p147
        $region50: #{tpu_custom_call.1} parent=35 // pred_check_branch
          %5594 = sbr.rel (%p5592) target = $region52
        $region51: #{tpu_custom_call.1} parent=35 // pred_region
          %s5595 = smul.u32 3, %s24
        $region52: #{tpu_custom_call.1} parent=35 // pred_fallthru
          _
      $region36: #{tpu_custom_call.1} parent=5 // pred_fallthru
        _
      %p5596 = scmp.le.s32.totalorder 2, %s14
      // Predicated region
      $region53: #{tpu_custom_call.1} parent=5 // pred_check
        %p5597 = pneg %p5596
      $region54: #{tpu_custom_call.1} parent=5 // pred_check_branch
        %5599 = sbr.rel (%p5597) target = $region56
      $region55: #{tpu_custom_call.1} parent=5 // pred_region
        %s5600 = ssub.s32 %s14, 2
        // Predicated region
        $region57: #{tpu_custom_call.1} parent=55 // pred_check
          %p5601 = pneg %p153
        $region58: #{tpu_custom_call.1} parent=55 // pred_check_branch
          %5603 = sbr.rel (%p5601) target = $region60
        $region59: #{tpu_custom_call.1} parent=55 // pred_region
          %s5604 = smul.u32 3, %s26
          %p5605 = scmp.lt.s32.totalorder %s25, 1
          %s5606 = scalar_select %p5605, %s25, 1
          %p5607 = scmp.lt.s32.totalorder %s5604, 5
          %s5608 = scalar_select %p5607, %s5604, 5
          %s5609 = smul.addr %s5608, 3
          %s5610 = smul.addr %s5606, 18
          %s5611 = sadd.s32 %s5609, %s5610
          %s5612 = smul.addr %s5611, 8
          %s5613 = scalar_lea.vmem %s4, %s5612
        $region60: #{tpu_custom_call.1} parent=55 // pred_fallthru
          _
      $region56: #{tpu_custom_call.1} parent=5 // pred_fallthru
        _
    $region6: #{tpu_custom_call.1} parent=1 // loop_footer
      %s18 = sadd.s32 1, %s14
    $region7: #{tpu_custom_call.1} parent=1 // loop_footer_branch
      %13 = sbr.rel target = $region3
    $region8: #{tpu_custom_call.1} parent=1 // loop_exit
      _
    %5614 = vsyncpa [#allocation3], 1
    %s5615 = scalar_lea.sflag [#allocation3], 1
    %5616 = vsyncpa %s5615, 1
    %5617 = vsyncpa [#allocation5], 1

</llo_original>
